<compile_context>
chip_gen: v5e
topology: v5e:2x2
jax: 0.10.0
libtpu: 0.0.40
codegen_flags: <defaults>
</compile_context>

<pallas_src>
import functools

import jax
import jax.numpy as jnp
from jax import lax
from jax.experimental import pallas as pl
from jax.experimental.pallas import tpu as pltpu


# ------------------------------ model sizes --------------------------------
B = 64           # batch (raised per perf review; any multiple of 16 works)
T = 12           # text sequence length
V = 100          # vocab size (num_embeddings)
E = 32           # params.text_dim
H = 32           # params.text_gru_hidden_dim (1 layer, unidirectional)
G4 = 4 * H       # fused gate width (i | f | g | o) = 128 lanes
D_TEXT = 32      # params.text_output_dim (TextOnlyModel fc1 output)
T_A = 10         # acoustic frames
A = 16           # params.audio_dim
AC_H = 50        # AcousticPlusPredictionLayer acoustic_fc_1 output
AC_OUT = 32      # AcousticPlusPredictionLayer acoustic_fc_2 output
FH = 64          # params.fc_hidden_dim inside each prediction layer
OUT_DIMS = (3, 2, 5, 4, 7)    # params.output_{0..4}_dim
N_HEADS = len(OUT_DIMS)

HEAD_SLOT = 32                # per-head lane slot in the output slab
AC1_CAT = 256                 # 5*50  -> 256 (lane-concat, padded to 128-mult)
AC2_CAT = 256                 # 5*32  -> 256
FH_CAT = 384                  # 5*64  -> 384
OUT_CAT = 256                 # 5*32  -> 256
NUM_SHARDS = 2                # parallel batch shards (uses both v7x TCs)


# ------------------------------- fused kernel -------------------------------
def _fused_forward_kernel(ids_ref, len_ref, ac_ref,
                          embp_ref, whh_ref, b_ref,
                          fc1w_ref, fc1b_ref,
                          a1w_ref, a1b_ref, a2w_ref, a2b_ref,
                          f1wa_ref, f1wt_ref, f1b_ref,
                          f2w_ref, f2b_ref,
                          out_ref):
    """Full MultitaskTextShared forward for one batch shard.

    ids_ref : (T*Bs, 1) int32  time-major flattened ids (row = t*Bs + b)
    len_ref : (Bs, 1)   int32  valid text lengths
    ac_ref  : (T_A, Bs, A)     acoustic frames (time-major)
    embp_ref: (V, 4H)          emb_table @ W_ih  (embedding pre-folded)
    whh_ref : (4H, 4H)         Whh lifted into rows [3H,4H) (h lives in o-block)
    b_ref   : (1, 4H)          b_ih + b_hh
    fc1w_ref: (4H, D_TEXT)     TextOnlyModel.fc1 lifted into rows [3H,4H)
    head weights merged over the 5 heads (lane-concat / block-diagonal):
      a1w (A, 256)  a1b (1,256)  a2w (256,256)  a2b (1,256)
      f1wa (256,384) f1wt (D_TEXT,384) f1b (1,384)  f2w (384,256) f2b (1,256)
    out_ref : (Bs, 256)  head h logits at lanes [32h, 32h+out_dim_h)
    """
    n_b = len_ref.shape[0]
    n_t = ids_ref.shape[0] // n_b
    g4 = whh_ref.shape[1]
    h_dim = g4 // 4
    vocab = embp_ref.shape[0]
    f32 = jnp.float32

    # ---- one-hot ids -> fused-gate input projection (embedding pre-folded) --
    ids = ids_ref[...]                                              # (T*Bs, 1)
    vocab_iota = lax.broadcasted_iota(jnp.int32, (n_t * n_b, vocab), 1)
    onehot = (ids == vocab_iota).astype(f32)                        # (T*Bs, V)
    xp = jnp.dot(onehot, embp_ref[...],
                 preferred_element_type=f32) + b_ref[...]           # (T*Bs, 4H)

    whh = whh_ref[...]                                              # (4H, 4H)

    # ---- hoisted constants: length masks + low-half lane mask ---------------
    lens_wide = jnp.broadcast_to(len_ref[...], (n_b, g4))           # (Bs, 4H) i32
    valid = [lens_wide > t for t in range(n_t)]                     # T full masks
    lane = lax.broadcasted_iota(jnp.int32, (n_b, g4), 1)
    low_half = lane < 2 * h_dim                                     # lanes [0, 2H)

    # ---- length-masked LSTM, fully unrolled; gate lane blocks [i|f|g|o] -----
    # The cell state c lives in the f-block (lanes [H,2H)); the hidden state h
    # lives in the o-block (lanes [3H,4H)).  Garbage in the other lanes is
    # bounded and never read (whh/fc1 rows outside [3H,4H) are zero).
    h = jnp.zeros((n_b, g4), f32)
    c = jnp.zeros((n_b, g4), f32)
    for t in range(n_t):
        gates = xp[t * n_b:(t + 1) * n_b, :] + jnp.dot(
            h, whh, preferred_element_type=f32)                     # (Bs, 4H)
        sg = jax.nn.sigmoid(gates)                                  # full-vreg EUP
        tg = jnp.tanh(gates)                                        # full-vreg EUP
        sg_half = pltpu.roll(sg, shift=2 * h_dim, axis=1)           # half rotate
        tg_half = pltpu.roll(tg, shift=2 * h_dim, axis=1)
        p1 = sg * tg_half            # sig(i)*tanh(g) at the i-block [0,  H)
        p2 = sg_half * tg            # sig(i)*tanh(g) at the g-block [2H, 3H)
        # i*g is now in BOTH blocks that are 32 lanes away from the f-block, so
        # a single 32-lane roll lands the correct value in the f-block under
        # either rotate-direction convention.
        ig = pltpu.roll(jnp.where(low_half, p1, p2), shift=h_dim, axis=1)
        c_new = sg * c + ig          # f-block: sig(f)*c + sig(i)*tanh(g)
        h_new = sg * pltpu.roll(jnp.tanh(c_new), shift=2 * h_dim, axis=1)
        c = jnp.where(valid[t], c_new, c)                           # hold past len
        h = jnp.where(valid[t], h_new, h)

    # ---- TextOnlyModel.fc1 + tanh (weights live in rows [3H,4H)) ------------
    txt = jnp.tanh(jnp.dot(h, fc1w_ref[...], preferred_element_type=f32)
                   + fc1b_ref[...])                                 # (Bs, D_TEXT)

    # ---- all 5 AcousticPlusPredictionLayer heads, merged along lanes --------
    ac_mean = jnp.mean(ac_ref[...], axis=0)                         # (Bs, A)
    a1 = jnp.tanh(jnp.dot(ac_mean, a1w_ref[...], preferred_element_type=f32)
                  + a1b_ref[...])                                   # (Bs, 256)
    a2 = jnp.tanh(jnp.dot(a1, a2w_ref[...], preferred_element_type=f32)
                  + a2b_ref[...])                                   # (Bs, 256)
    hid = jnp.tanh(jnp.dot(a2, f1wa_ref[...], preferred_element_type=f32)
                   + jnp.dot(txt, f1wt_ref[...], preferred_element_type=f32)
                   + f1b_ref[...])                                  # (Bs, 384)
    out_ref[...] = (jnp.dot(hid, f2w_ref[...], preferred_element_type=f32)
                    + f2b_ref[...])                                 # (Bs, 256)
    # TODO(synk): get_prob_dist softmax branch not exercised (default False).


# ------------------------------- pallas wrapper ------------------------------
def _full_spec(shape):
    nd = len(shape)

    def _imap(i):
        return (0,) * nd

    return pl.BlockSpec(shape, _imap)


def _run_fused(packed, ids_sharded, lens2, ac_tba, n_shards):
    """One pallas_call, grid over batch shards (parallel). Returns (B, 256)."""
    b = lens2.shape[0]
    bs = b // n_shards
    n_t = ids_sharded.shape[0] // b

    weight_names = ("emb_proj", "lstm_whh_wide", "lstm_b",
                    "text_fc1_w_wide", "text_fc1_b",
                    "a1_w", "a1_b", "a2_w", "a2_b",
                    "f1_wa", "f1_wt", "f1_b", "f2_w", "f2_b")
    weights = [packed[k] for k in weight_names]

    in_specs = ([pl.BlockSpec((n_t * bs, 1), lambda i: (i, 0)),
                 pl.BlockSpec((bs, 1), lambda i: (i, 0)),
                 pl.BlockSpec((T_A, bs, A), lambda i: (0, i, 0))]
                + [_full_spec(w.shape) for w in weights])
    out_spec = pl.BlockSpec((bs, OUT_CAT), lambda i: (i, 0))

    return pl.pallas_call(
        _fused_forward_kernel,
        out_shape=jax.ShapeDtypeStruct((b, OUT_CAT), jnp.float32),
        grid=(n_shards,),
        in_specs=in_specs,
        out_specs=out_spec,
        compiler_params=pltpu.CompilerParams(
            dimension_semantics=("parallel",)),
    )(ids_sharded, lens2, ac_tba, *weights)


@functools.partial(jax.jit, static_argnames=("task_num", "multi_dataset"))
def multitask_text_shared_forward(packed, acoustic_input, text_input,
                                  length_input, task_num=0, multi_dataset=True):
    """Mirrors MultitaskTextShared.forward (save_encoded_data=False,
    get_prob_dist=False, return_penultimate_layer=False).  speaker_input,
    acoustic_len_input, gender_input are unused (as in the 'add_avging' path).
    Both multi_dataset modes run the same 5-head kernel; the task's logits are
    just selected from the (B, 256) output slab."""
    b, t = text_input.shape
    n_shards = NUM_SHARDS if b % (8 * NUM_SHARDS) == 0 else 1
    bs = b // n_shards

    # shard-major, time-major flattened ids: row = s*T*Bs + t*Bs + b_local
    ids_tm = jnp.transpose(text_input.astype(jnp.int32))            # (T, B)
    ids_sharded = (ids_tm.reshape(t, n_shards, bs)
                   .transpose(1, 0, 2).reshape(n_shards * t * bs, 1))
    lens2 = length_input.astype(jnp.int32).reshape(b, 1)
    ac_tba = jnp.transpose(acoustic_input.astype(jnp.float32), (1, 0, 2))

    slab = _run_fused(packed, ids_sharded, lens2, ac_tba, n_shards)  # (B, 256)

    outs = [None] * N_HEADS
    if not multi_dataset:
        tasks = range(N_HEADS)
    else:
        if not 0 <= task_num < N_HEADS:
            raise ValueError(f"Task {task_num} not defined")
        tasks = (task_num,)
    for ti in tasks:
        od = OUT_DIMS[ti]
        logit = slab[:, ti * HEAD_SLOT:ti * HEAD_SLOT + od]
        outs[ti] = jax.nn.sigmoid(logit) if od == 1 else logit
    return tuple(outs)


# ----------------------------- parameter handling ----------------------------
def init_params(key):
    """Raw (per-layer, per-head) parameters, PyTorch-equivalent layout."""
    def dense(k, shape, scale=0.1):
        return scale * jax.random.normal(k, shape, jnp.float32)

    keys = jax.random.split(key, 6 + N_HEADS)
    # nn.Embedding(padding_idx=0, max_norm=1.0): row 0 zeroed, rows renormed.
    emb = jax.random.normal(keys[0], (V, E), jnp.float32)
    emb = emb.at[0].set(0.0)
    norms = jnp.linalg.norm(emb, axis=1, keepdims=True)
    emb = jnp.where(norms > 1.0, emb / jnp.maximum(norms, 1e-12), emb)

    raw = {
        "emb_table": emb,
        # fused-gate LSTM, PyTorch (i, f, g, o) gate order along 4H; b = b_ih+b_hh
        "lstm_wih": dense(keys[1], (E, G4)),
        "lstm_whh": dense(keys[2], (H, G4)),
        "lstm_b": dense(keys[3], (1, G4)),
        "text_fc1_w": dense(keys[4], (H, D_TEXT)),
        "text_fc1_b": dense(keys[5], (1, D_TEXT)),
    }
    head_list = []
    for ti, out_dim in enumerate(OUT_DIMS):
        hk = jax.random.split(keys[6 + ti], 9)
        head_list.append({
            "a1_w": dense(hk[0], (A, AC_H)),
            "a1_b": dense(hk[1], (1, AC_H)),
            "a2_w": dense(hk[2], (AC_H, AC_OUT)),
            "a2_b": dense(hk[3], (1, AC_OUT)),
            "fc1_wa": dense(hk[4], (AC_OUT, FH)),
            "fc1_wt": dense(hk[5], (D_TEXT, FH)),
            "fc1_b": dense(hk[6], (1, FH)),
            "fc2_w": dense(hk[7], (FH, out_dim)),
            "fc2_b": dense(hk[8], (1, out_dim)),
        })
    raw["head_list"] = head_list
    return raw


def pack_params(raw):
    """Fold / merge raw params into the lane-dense kernel operands."""
    assert max(OUT_DIMS) <= HEAD_SLOT

    def z(shape):
        return jnp.zeros(shape, jnp.float32)

    # embedding folded into the LSTM input projection
    emb_proj = raw["emb_table"] @ raw["lstm_wih"]                    # (V, 4H)
    # h lives in the o-block lanes [3H,4H): lift Whh / fc1 into those rows
    whh_wide = z((G4, G4)).at[3 * H:4 * H, :].set(raw["lstm_whh"])
    fc1w_wide = z((G4, D_TEXT)).at[3 * H:4 * H, :].set(raw["text_fc1_w"])

    a1_w, a1_b = z((A, AC1_CAT)), z((1, AC1_CAT))
    a2_w, a2_b = z((AC1_CAT, AC2_CAT)), z((1, AC2_CAT))
    f1_wa, f1_wt, f1_b = z((AC2_CAT, FH_CAT)), z((D_TEXT, FH_CAT)), z((1, FH_CAT))
    f2_w, f2_b = z((FH_CAT, OUT_CAT)), z((1, OUT_CAT))
    for n, hd in enumerate(raw["head_list"]):
        r1, c1, c2, c3 = n * AC_H, n * AC_OUT, n * FH, n * HEAD_SLOT
        od = OUT_DIMS[n]
        a1_w = a1_w.at[:, r1:r1 + AC_H].set(hd["a1_w"])
        a1_b = a1_b.at[:, r1:r1 + AC_H].set(hd["a1_b"])
        a2_w = a2_w.at[r1:r1 + AC_H, c1:c1 + AC_OUT].set(hd["a2_w"])
        a2_b = a2_b.at[:, c1:c1 + AC_OUT].set(hd["a2_b"])
        f1_wa = f1_wa.at[c1:c1 + AC_OUT, c2:c2 + FH].set(hd["fc1_wa"])
        f1_wt = f1_wt.at[:, c2:c2 + FH].set(hd["fc1_wt"])
        f1_b = f1_b.at[:, c2:c2 + FH].set(hd["fc1_b"])
        f2_w = f2_w.at[c2:c2 + FH, c3:c3 + od].set(hd["fc2_w"])
        f2_b = f2_b.at[:, c3:c3 + od].set(hd["fc2_b"])

    return {
        "emb_proj": emb_proj, "lstm_whh_wide": whh_wide, "lstm_b": raw["lstm_b"],
        "text_fc1_w_wide": fc1w_wide, "text_fc1_b": raw["text_fc1_b"],
        "a1_w": a1_w, "a1_b": a1_b, "a2_w": a2_w, "a2_b": a2_b,
        "f1_wa": f1_wa, "f1_wt": f1_wt, "f1_b": f1_b,
        "f2_w": f2_w, "f2_b": f2_b,
    }


# --------------------------- pure-JAX reference ------------------------------
def reference_forward(raw, acoustic_input, text_input, length_input):
    """Straightforward jnp implementation of the same forward (all 5 heads)."""
    emb = raw["emb_table"][text_input]                               # (B, T, E)
    xs = jnp.einsum("bte,eg->btg", emb, raw["lstm_wih"]) + raw["lstm_b"]
    b = text_input.shape[0]
    h = jnp.zeros((b, H), jnp.float32)
    c = jnp.zeros((b, H), jnp.float32)
    for t in range(T):
        gates = xs[:, t, :] + h @ raw["lstm_whh"]
        i_g = jax.nn.sigmoid(gates[:, 0 * H:1 * H])
        f_g = jax.nn.sigmoid(gates[:, 1 * H:2 * H])
        g_g = jnp.tanh(gates[:, 2 * H:3 * H])
        o_g = jax.nn.sigmoid(gates[:, 3 * H:4 * H])
        c_new = f_g * c + i_g * g_g
        h_new = o_g * jnp.tanh(c_new)
        valid = (length_input > t)[:, None]
        h = jnp.where(valid, h_new, h)
        c = jnp.where(valid, c_new, c)
    txt = jnp.tanh(h @ raw["text_fc1_w"] + raw["text_fc1_b"])
    ac_mean = jnp.mean(acoustic_input, axis=1)
    outs = []
    for hd in raw["head_list"]:
        a1 = jnp.tanh(ac_mean @ hd["a1_w"] + hd["a1_b"])
        a2 = jnp.tanh(a1 @ hd["a2_w"] + hd["a2_b"])
        hid = jnp.tanh(a2 @ hd["fc1_wa"] + txt @ hd["fc1_wt"] + hd["fc1_b"])
        outs.append(hid @ hd["fc2_w"] + hd["fc2_b"])
    return outs


# --------------------------------- main ---------------------------------------
if __name__ == "__main__":
    root = jax.random.PRNGKey(0)
    k_par, k_txt, k_len, k_ac = jax.random.split(root, 4)

    raw = init_params(k_par)
    packed = pack_params(raw)

    text_input = jax.random.randint(k_txt, (B, T), 0, V, dtype=jnp.int32)
    length_input = jax.random.randint(k_len, (B,), 1, T + 1, dtype=jnp.int32)
    acoustic_input = jax.random.normal(k_ac, (B, T_A, A), jnp.float32)

    # multi_dataset=False: all 5 heads from the single fused kernel.
    outs_all = multitask_text_shared_forward(packed, acoustic_input, text_input,
                                             length_input, multi_dataset=False)
    jax.block_until_ready(outs_all)
    refs = reference_forward(raw, acoustic_input, text_input, length_input)
    for o, r, od in zip(outs_all, refs, OUT_DIMS):
        assert o.shape == (B, od)
        assert jnp.allclose(o, r, rtol=1e-3, atol=1e-3), "kernel/reference mismatch"

    # multi_dataset=True: same kernel, one task's logits selected outside.
    outs_one = multitask_text_shared_forward(packed, acoustic_input, text_input,
                                             length_input, task_num=2,
                                             multi_dataset=True)
    jax.block_until_ready(outs_one[2])
    assert outs_one[2].shape == (B, OUT_DIMS[2])
    assert all(outs_one[i] is None for i in range(N_HEADS) if i != 2)
    assert jnp.allclose(outs_one[2], refs[2], rtol=1e-3, atol=1e-3)

    print("KERNEL_OK")
</pallas_src>

<mosaic_0001>
module attributes {stable_mosaic.version = 11 : i64} {
  func.func @_fused_forward_kernel(%arg0: i32, %arg1: memref<384x1xi32, #tpu.memory_space<vmem>>, %arg2: memref<32x1xi32, #tpu.memory_space<vmem>>, %arg3: memref<10x32x16xf32, #tpu.memory_space<vmem>>, %arg4: memref<100x128xf32, #tpu.memory_space<vmem>>, %arg5: memref<128x128xf32, #tpu.memory_space<vmem>>, %arg6: memref<1x128xf32, #tpu.memory_space<vmem>>, %arg7: memref<128x32xf32, #tpu.memory_space<vmem>>, %arg8: memref<1x32xf32, #tpu.memory_space<vmem>>, %arg9: memref<16x256xf32, #tpu.memory_space<vmem>>, %arg10: memref<1x256xf32, #tpu.memory_space<vmem>>, %arg11: memref<256x256xf32, #tpu.memory_space<vmem>>, %arg12: memref<1x256xf32, #tpu.memory_space<vmem>>, %arg13: memref<256x384xf32, #tpu.memory_space<vmem>>, %arg14: memref<32x384xf32, #tpu.memory_space<vmem>>, %arg15: memref<1x384xf32, #tpu.memory_space<vmem>>, %arg16: memref<384x256xf32, #tpu.memory_space<vmem>>, %arg17: memref<1x256xf32, #tpu.memory_space<vmem>>, %arg18: memref<32x256xf32, #tpu.memory_space<vmem>>) attributes {dimension_semantics = [#tpu.dimension_semantics<parallel>], iteration_bounds = array<i64: 2>, scalar_prefetch = 0 : i64, scratch_operands = 0 : i64, tpu.core_type = #tpu.core_type<tc>, window_params = [{transform_indices = @transform_0, window_bounds = array<i64: 384, 1>}, {transform_indices = @transform_1, window_bounds = array<i64: 32, 1>}, {transform_indices = @transform_2, window_bounds = array<i64: 10, 32, 16>}, {pipeline_mode = #tpu.pipeline_mode<synchronous>, transform_indices = @transform_3, window_bounds = array<i64: 100, 128>}, {pipeline_mode = #tpu.pipeline_mode<synchronous>, transform_indices = @transform_4, window_bounds = array<i64: 128, 128>}, {pipeline_mode = #tpu.pipeline_mode<synchronous>, transform_indices = @transform_5, window_bounds = array<i64: 1, 128>}, {pipeline_mode = #tpu.pipeline_mode<synchronous>, transform_indices = @transform_6, window_bounds = array<i64: 128, 32>}, {pipeline_mode = #tpu.pipeline_mode<synchronous>, transform_indices = @transform_7, window_bounds = array<i64: 1, 32>}, {pipeline_mode = #tpu.pipeline_mode<synchronous>, transform_indices = @transform_8, window_bounds = array<i64: 16, 256>}, {pipeline_mode = #tpu.pipeline_mode<synchronous>, transform_indices = @transform_9, window_bounds = array<i64: 1, 256>}, {pipeline_mode = #tpu.pipeline_mode<synchronous>, transform_indices = @transform_10, window_bounds = array<i64: 256, 256>}, {pipeline_mode = #tpu.pipeline_mode<synchronous>, transform_indices = @transform_11, window_bounds = array<i64: 1, 256>}, {pipeline_mode = #tpu.pipeline_mode<synchronous>, transform_indices = @transform_12, window_bounds = array<i64: 256, 384>}, {pipeline_mode = #tpu.pipeline_mode<synchronous>, transform_indices = @transform_13, window_bounds = array<i64: 32, 384>}, {pipeline_mode = #tpu.pipeline_mode<synchronous>, transform_indices = @transform_14, window_bounds = array<i64: 1, 384>}, {pipeline_mode = #tpu.pipeline_mode<synchronous>, transform_indices = @transform_15, window_bounds = array<i64: 384, 256>}, {pipeline_mode = #tpu.pipeline_mode<synchronous>, transform_indices = @transform_16, window_bounds = array<i64: 1, 256>}, {transform_indices = @transform_17, window_bounds = array<i64: 32, 256>}]} {
    %c0 = arith.constant 0 : index
    %c0_0 = arith.constant 0 : index
    %0 = vector.load %arg1[%c0, %c0_0] : memref<384x1xi32, #tpu.memory_space<vmem>>, vector<384x1xi32>
    %1 = tpu.iota {dimensions = array<i32: 1>} : vector<384x100xi32>
    %2 = vector.broadcast %0 : vector<384x1xi32> to vector<384x100xi32>
    %3 = arith.cmpi eq, %2, %1 : vector<384x100xi32>
    %4 = arith.extui %3 : vector<384x100xi1> to vector<384x100xi32>
    %5 = arith.sitofp %4 : vector<384x100xi32> to vector<384x100xf32>
    %c0_1 = arith.constant 0 : index
    %c0_2 = arith.constant 0 : index
    %6 = vector.load %arg4[%c0_1, %c0_2] : memref<100x128xf32, #tpu.memory_space<vmem>>, vector<100x128xf32>
    %cst = arith.constant dense<0.000000e+00> : vector<384x128xf32>
    %7 = tpu.matmul %5, %6, %cst {dimension_numbers = #tpu.dot_dimension_numbers<[1], [0], [0], [1], [0, 0, 1, 1], [], []>} : vector<384x100xf32>, vector<100x128xf32>, vector<384x128xf32> -> vector<384x128xf32>
    %c0_3 = arith.constant 0 : index
    %c0_4 = arith.constant 0 : index
    %8 = vector.load %arg6[%c0_3, %c0_4] : memref<1x128xf32, #tpu.memory_space<vmem>>, vector<1x128xf32>
    %9 = vector.broadcast %8 : vector<1x128xf32> to vector<384x128xf32>
    %10 = arith.addf %7, %9 : vector<384x128xf32>
    %c0_5 = arith.constant 0 : index
    %c0_6 = arith.constant 0 : index
    %11 = vector.load %arg5[%c0_5, %c0_6] : memref<128x128xf32, #tpu.memory_space<vmem>>, vector<128x128xf32>
    %c0_7 = arith.constant 0 : index
    %c0_8 = arith.constant 0 : index
    %12 = vector.load %arg2[%c0_7, %c0_8] : memref<32x1xi32, #tpu.memory_space<vmem>>, vector<32x1xi32>
    %13 = vector.shape_cast %12 : vector<32x1xi32> to vector<32x1xi32>
    %14 = vector.broadcast %13 : vector<32x1xi32> to vector<32x128xi32>
    %c0_i32 = arith.constant 0 : i32
    %15 = vector.broadcast %c0_i32 : i32 to vector<32x128xi32>
    %16 = arith.cmpi sgt, %14, %15 : vector<32x128xi32>
    %c1_i32 = arith.constant 1 : i32
    %17 = vector.broadcast %c1_i32 : i32 to vector<32x128xi32>
    %18 = arith.cmpi sgt, %14, %17 : vector<32x128xi32>
    %c2_i32 = arith.constant 2 : i32
    %19 = vector.broadcast %c2_i32 : i32 to vector<32x128xi32>
    %20 = arith.cmpi sgt, %14, %19 : vector<32x128xi32>
    %c3_i32 = arith.constant 3 : i32
    %21 = vector.broadcast %c3_i32 : i32 to vector<32x128xi32>
    %22 = arith.cmpi sgt, %14, %21 : vector<32x128xi32>
    %c4_i32 = arith.constant 4 : i32
    %23 = vector.broadcast %c4_i32 : i32 to vector<32x128xi32>
    %24 = arith.cmpi sgt, %14, %23 : vector<32x128xi32>
    %c5_i32 = arith.constant 5 : i32
    %25 = vector.broadcast %c5_i32 : i32 to vector<32x128xi32>
    %26 = arith.cmpi sgt, %14, %25 : vector<32x128xi32>
    %c6_i32 = arith.constant 6 : i32
    %27 = vector.broadcast %c6_i32 : i32 to vector<32x128xi32>
    %28 = arith.cmpi sgt, %14, %27 : vector<32x128xi32>
    %c7_i32 = arith.constant 7 : i32
    %29 = vector.broadcast %c7_i32 : i32 to vector<32x128xi32>
    %30 = arith.cmpi sgt, %14, %29 : vector<32x128xi32>
    %c8_i32 = arith.constant 8 : i32
    %31 = vector.broadcast %c8_i32 : i32 to vector<32x128xi32>
    %32 = arith.cmpi sgt, %14, %31 : vector<32x128xi32>
    %c9_i32 = arith.constant 9 : i32
    %33 = vector.broadcast %c9_i32 : i32 to vector<32x128xi32>
    %34 = arith.cmpi sgt, %14, %33 : vector<32x128xi32>
    %c10_i32 = arith.constant 10 : i32
    %35 = vector.broadcast %c10_i32 : i32 to vector<32x128xi32>
    %36 = arith.cmpi sgt, %14, %35 : vector<32x128xi32>
    %c11_i32 = arith.constant 11 : i32
    %37 = vector.broadcast %c11_i32 : i32 to vector<32x128xi32>
    %38 = arith.cmpi sgt, %14, %37 : vector<32x128xi32>
    %39 = tpu.iota {dimensions = array<i32: 1>} : vector<32x128xi32>
    %c64_i32 = arith.constant 64 : i32
    %40 = vector.broadcast %c64_i32 : i32 to vector<32x128xi32>
    %41 = arith.cmpi slt, %39, %40 : vector<32x128xi32>
    %cst_9 = arith.constant 0.000000e+00 : f32
    %42 = vector.broadcast %cst_9 : f32 to vector<32x128xf32>
    %cst_10 = arith.constant 0.000000e+00 : f32
    %43 = vector.broadcast %cst_10 : f32 to vector<32x128xf32>
    %44 = vector.extract_strided_slice %10 {offsets = [0, 0], sizes = [32, 128], strides = [1, 1]} : vector<384x128xf32> to vector<32x128xf32>
    %cst_11 = arith.constant dense<0.000000e+00> : vector<32x128xf32>
    %45 = tpu.matmul %42, %11, %cst_11 {dimension_numbers = #tpu.dot_dimension_numbers<[1], [0], [0], [1], [0, 0, 1, 1], [], []>} : vector<32x128xf32>, vector<128x128xf32>, vector<32x128xf32> -> vector<32x128xf32>
    %46 = arith.addf %44, %45 : vector<32x128xf32>
    %47 = arith.negf %46 : vector<32x128xf32>
    %48 = math.exp %47 : vector<32x128xf32>
    %cst_12 = arith.constant 1.000000e+00 : f32
    %49 = vector.broadcast %cst_12 : f32 to vector<32x128xf32>
    %50 = arith.addf %49, %48 : vector<32x128xf32>
    %51 = arith.divf %49, %50 : vector<32x128xf32>
    %52 = math.tanh %46 : vector<32x128xf32>
    %c64_i32_13 = arith.constant 64 : i32
    %53 = tpu.dynamic_rotate %51 by %c64_i32_13 dim 1 : vector<32x128xf32>, i32 -> vector<32x128xf32>
    %c64_i32_14 = arith.constant 64 : i32
    %54 = tpu.dynamic_rotate %52 by %c64_i32_14 dim 1 : vector<32x128xf32>, i32 -> vector<32x128xf32>
    %55 = arith.mulf %51, %54 : vector<32x128xf32>
    %56 = arith.mulf %53, %52 : vector<32x128xf32>
    %57 = arith.select %41, %55, %56 : vector<32x128xi1>, vector<32x128xf32>
    %c32_i32 = arith.constant 32 : i32
    %58 = tpu.dynamic_rotate %57 by %c32_i32 dim 1 : vector<32x128xf32>, i32 -> vector<32x128xf32>
    %59 = arith.mulf %51, %43 : vector<32x128xf32>
    %60 = arith.addf %59, %58 : vector<32x128xf32>
    %61 = math.tanh %60 : vector<32x128xf32>
    %c64_i32_15 = arith.constant 64 : i32
    %62 = tpu.dynamic_rotate %61 by %c64_i32_15 dim 1 : vector<32x128xf32>, i32 -> vector<32x128xf32>
    %63 = arith.mulf %51, %62 : vector<32x128xf32>
    %64 = arith.select %16, %60, %43 : vector<32x128xi1>, vector<32x128xf32>
    %65 = arith.select %16, %63, %42 : vector<32x128xi1>, vector<32x128xf32>
    %66 = vector.extract_strided_slice %10 {offsets = [32, 0], sizes = [32, 128], strides = [1, 1]} : vector<384x128xf32> to vector<32x128xf32>
    %cst_16 = arith.constant dense<0.000000e+00> : vector<32x128xf32>
    %67 = tpu.matmul %65, %11, %cst_16 {dimension_numbers = #tpu.dot_dimension_numbers<[1], [0], [0], [1], [0, 0, 1, 1], [], []>} : vector<32x128xf32>, vector<128x128xf32>, vector<32x128xf32> -> vector<32x128xf32>
    %68 = arith.addf %66, %67 : vector<32x128xf32>
    %69 = arith.negf %68 : vector<32x128xf32>
    %70 = math.exp %69 : vector<32x128xf32>
    %cst_17 = arith.constant 1.000000e+00 : f32
    %71 = vector.broadcast %cst_17 : f32 to vector<32x128xf32>
    %72 = arith.addf %71, %70 : vector<32x128xf32>
    %73 = arith.divf %71, %72 : vector<32x128xf32>
    %74 = math.tanh %68 : vector<32x128xf32>
    %c64_i32_18 = arith.constant 64 : i32
    %75 = tpu.dynamic_rotate %73 by %c64_i32_18 dim 1 : vector<32x128xf32>, i32 -> vector<32x128xf32>
    %c64_i32_19 = arith.constant 64 : i32
    %76 = tpu.dynamic_rotate %74 by %c64_i32_19 dim 1 : vector<32x128xf32>, i32 -> vector<32x128xf32>
    %77 = arith.mulf %73, %76 : vector<32x128xf32>
    %78 = arith.mulf %75, %74 : vector<32x128xf32>
    %79 = arith.select %41, %77, %78 : vector<32x128xi1>, vector<32x128xf32>
    %c32_i32_20 = arith.constant 32 : i32
    %80 = tpu.dynamic_rotate %79 by %c32_i32_20 dim 1 : vector<32x128xf32>, i32 -> vector<32x128xf32>
    %81 = arith.mulf %73, %64 : vector<32x128xf32>
    %82 = arith.addf %81, %80 : vector<32x128xf32>
    %83 = math.tanh %82 : vector<32x128xf32>
    %c64_i32_21 = arith.constant 64 : i32
    %84 = tpu.dynamic_rotate %83 by %c64_i32_21 dim 1 : vector<32x128xf32>, i32 -> vector<32x128xf32>
    %85 = arith.mulf %73, %84 : vector<32x128xf32>
    %86 = arith.select %18, %82, %64 : vector<32x128xi1>, vector<32x128xf32>
    %87 = arith.select %18, %85, %65 : vector<32x128xi1>, vector<32x128xf32>
    %88 = vector.extract_strided_slice %10 {offsets = [64, 0], sizes = [32, 128], strides = [1, 1]} : vector<384x128xf32> to vector<32x128xf32>
    %cst_22 = arith.constant dense<0.000000e+00> : vector<32x128xf32>
    %89 = tpu.matmul %87, %11, %cst_22 {dimension_numbers = #tpu.dot_dimension_numbers<[1], [0], [0], [1], [0, 0, 1, 1], [], []>} : vector<32x128xf32>, vector<128x128xf32>, vector<32x128xf32> -> vector<32x128xf32>
    %90 = arith.addf %88, %89 : vector<32x128xf32>
    %91 = arith.negf %90 : vector<32x128xf32>
    %92 = math.exp %91 : vector<32x128xf32>
    %cst_23 = arith.constant 1.000000e+00 : f32
    %93 = vector.broadcast %cst_23 : f32 to vector<32x128xf32>
    %94 = arith.addf %93, %92 : vector<32x128xf32>
    %95 = arith.divf %93, %94 : vector<32x128xf32>
    %96 = math.tanh %90 : vector<32x128xf32>
    %c64_i32_24 = arith.constant 64 : i32
    %97 = tpu.dynamic_rotate %95 by %c64_i32_24 dim 1 : vector<32x128xf32>, i32 -> vector<32x128xf32>
    %c64_i32_25 = arith.constant 64 : i32
    %98 = tpu.dynamic_rotate %96 by %c64_i32_25 dim 1 : vector<32x128xf32>, i32 -> vector<32x128xf32>
    %99 = arith.mulf %95, %98 : vector<32x128xf32>
    %100 = arith.mulf %97, %96 : vector<32x128xf32>
    %101 = arith.select %41, %99, %100 : vector<32x128xi1>, vector<32x128xf32>
    %c32_i32_26 = arith.constant 32 : i32
    %102 = tpu.dynamic_rotate %101 by %c32_i32_26 dim 1 : vector<32x128xf32>, i32 -> vector<32x128xf32>
    %103 = arith.mulf %95, %86 : vector<32x128xf32>
    %104 = arith.addf %103, %102 : vector<32x128xf32>
    %105 = math.tanh %104 : vector<32x128xf32>
    %c64_i32_27 = arith.constant 64 : i32
    %106 = tpu.dynamic_rotate %105 by %c64_i32_27 dim 1 : vector<32x128xf32>, i32 -> vector<32x128xf32>
    %107 = arith.mulf %95, %106 : vector<32x128xf32>
    %108 = arith.select %20, %104, %86 : vector<32x128xi1>, vector<32x128xf32>
    %109 = arith.select %20, %107, %87 : vector<32x128xi1>, vector<32x128xf32>
    %110 = vector.extract_strided_slice %10 {offsets = [96, 0], sizes = [32, 128], strides = [1, 1]} : vector<384x128xf32> to vector<32x128xf32>
    %cst_28 = arith.constant dense<0.000000e+00> : vector<32x128xf32>
    %111 = tpu.matmul %109, %11, %cst_28 {dimension_numbers = #tpu.dot_dimension_numbers<[1], [0], [0], [1], [0, 0, 1, 1], [], []>} : vector<32x128xf32>, vector<128x128xf32>, vector<32x128xf32> -> vector<32x128xf32>
    %112 = arith.addf %110, %111 : vector<32x128xf32>
    %113 = arith.negf %112 : vector<32x128xf32>
    %114 = math.exp %113 : vector<32x128xf32>
    %cst_29 = arith.constant 1.000000e+00 : f32
    %115 = vector.broadcast %cst_29 : f32 to vector<32x128xf32>
    %116 = arith.addf %115, %114 : vector<32x128xf32>
    %117 = arith.divf %115, %116 : vector<32x128xf32>
    %118 = math.tanh %112 : vector<32x128xf32>
    %c64_i32_30 = arith.constant 64 : i32
    %119 = tpu.dynamic_rotate %117 by %c64_i32_30 dim 1 : vector<32x128xf32>, i32 -> vector<32x128xf32>
    %c64_i32_31 = arith.constant 64 : i32
    %120 = tpu.dynamic_rotate %118 by %c64_i32_31 dim 1 : vector<32x128xf32>, i32 -> vector<32x128xf32>
    %121 = arith.mulf %117, %120 : vector<32x128xf32>
    %122 = arith.mulf %119, %118 : vector<32x128xf32>
    %123 = arith.select %41, %121, %122 : vector<32x128xi1>, vector<32x128xf32>
    %c32_i32_32 = arith.constant 32 : i32
    %124 = tpu.dynamic_rotate %123 by %c32_i32_32 dim 1 : vector<32x128xf32>, i32 -> vector<32x128xf32>
    %125 = arith.mulf %117, %108 : vector<32x128xf32>
    %126 = arith.addf %125, %124 : vector<32x128xf32>
    %127 = math.tanh %126 : vector<32x128xf32>
    %c64_i32_33 = arith.constant 64 : i32
    %128 = tpu.dynamic_rotate %127 by %c64_i32_33 dim 1 : vector<32x128xf32>, i32 -> vector<32x128xf32>
    %129 = arith.mulf %117, %128 : vector<32x128xf32>
    %130 = arith.select %22, %126, %108 : vector<32x128xi1>, vector<32x128xf32>
    %131 = arith.select %22, %129, %109 : vector<32x128xi1>, vector<32x128xf32>
    %132 = vector.extract_strided_slice %10 {offsets = [128, 0], sizes = [32, 128], strides = [1, 1]} : vector<384x128xf32> to vector<32x128xf32>
    %cst_34 = arith.constant dense<0.000000e+00> : vector<32x128xf32>
    %133 = tpu.matmul %131, %11, %cst_34 {dimension_numbers = #tpu.dot_dimension_numbers<[1], [0], [0], [1], [0, 0, 1, 1], [], []>} : vector<32x128xf32>, vector<128x128xf32>, vector<32x128xf32> -> vector<32x128xf32>
    %134 = arith.addf %132, %133 : vector<32x128xf32>
    %135 = arith.negf %134 : vector<32x128xf32>
    %136 = math.exp %135 : vector<32x128xf32>
    %cst_35 = arith.constant 1.000000e+00 : f32
    %137 = vector.broadcast %cst_35 : f32 to vector<32x128xf32>
    %138 = arith.addf %137, %136 : vector<32x128xf32>
    %139 = arith.divf %137, %138 : vector<32x128xf32>
    %140 = math.tanh %134 : vector<32x128xf32>
    %c64_i32_36 = arith.constant 64 : i32
    %141 = tpu.dynamic_rotate %139 by %c64_i32_36 dim 1 : vector<32x128xf32>, i32 -> vector<32x128xf32>
    %c64_i32_37 = arith.constant 64 : i32
    %142 = tpu.dynamic_rotate %140 by %c64_i32_37 dim 1 : vector<32x128xf32>, i32 -> vector<32x128xf32>
    %143 = arith.mulf %139, %142 : vector<32x128xf32>
    %144 = arith.mulf %141, %140 : vector<32x128xf32>
    %145 = arith.select %41, %143, %144 : vector<32x128xi1>, vector<32x128xf32>
    %c32_i32_38 = arith.constant 32 : i32
    %146 = tpu.dynamic_rotate %145 by %c32_i32_38 dim 1 : vector<32x128xf32>, i32 -> vector<32x128xf32>
    %147 = arith.mulf %139, %130 : vector<32x128xf32>
    %148 = arith.addf %147, %146 : vector<32x128xf32>
    %149 = math.tanh %148 : vector<32x128xf32>
    %c64_i32_39 = arith.constant 64 : i32
    %150 = tpu.dynamic_rotate %149 by %c64_i32_39 dim 1 : vector<32x128xf32>, i32 -> vector<32x128xf32>
    %151 = arith.mulf %139, %150 : vector<32x128xf32>
    %152 = arith.select %24, %148, %130 : vector<32x128xi1>, vector<32x128xf32>
    %153 = arith.select %24, %151, %131 : vector<32x128xi1>, vector<32x128xf32>
    %154 = vector.extract_strided_slice %10 {offsets = [160, 0], sizes = [32, 128], strides = [1, 1]} : vector<384x128xf32> to vector<32x128xf32>
    %cst_40 = arith.constant dense<0.000000e+00> : vector<32x128xf32>
    %155 = tpu.matmul %153, %11, %cst_40 {dimension_numbers = #tpu.dot_dimension_numbers<[1], [0], [0], [1], [0, 0, 1, 1], [], []>} : vector<32x128xf32>, vector<128x128xf32>, vector<32x128xf32> -> vector<32x128xf32>
    %156 = arith.addf %154, %155 : vector<32x128xf32>
    %157 = arith.negf %156 : vector<32x128xf32>
    %158 = math.exp %157 : vector<32x128xf32>
    %cst_41 = arith.constant 1.000000e+00 : f32
    %159 = vector.broadcast %cst_41 : f32 to vector<32x128xf32>
    %160 = arith.addf %159, %158 : vector<32x128xf32>
    %161 = arith.divf %159, %160 : vector<32x128xf32>
    %162 = math.tanh %156 : vector<32x128xf32>
    %c64_i32_42 = arith.constant 64 : i32
    %163 = tpu.dynamic_rotate %161 by %c64_i32_42 dim 1 : vector<32x128xf32>, i32 -> vector<32x128xf32>
    %c64_i32_43 = arith.constant 64 : i32
    %164 = tpu.dynamic_rotate %162 by %c64_i32_43 dim 1 : vector<32x128xf32>, i32 -> vector<32x128xf32>
    %165 = arith.mulf %161, %164 : vector<32x128xf32>
    %166 = arith.mulf %163, %162 : vector<32x128xf32>
    %167 = arith.select %41, %165, %166 : vector<32x128xi1>, vector<32x128xf32>
    %c32_i32_44 = arith.constant 32 : i32
    %168 = tpu.dynamic_rotate %167 by %c32_i32_44 dim 1 : vector<32x128xf32>, i32 -> vector<32x128xf32>
    %169 = arith.mulf %161, %152 : vector<32x128xf32>
    %170 = arith.addf %169, %168 : vector<32x128xf32>
    %171 = math.tanh %170 : vector<32x128xf32>
    %c64_i32_45 = arith.constant 64 : i32
    %172 = tpu.dynamic_rotate %171 by %c64_i32_45 dim 1 : vector<32x128xf32>, i32 -> vector<32x128xf32>
    %173 = arith.mulf %161, %172 : vector<32x128xf32>
    %174 = arith.select %26, %170, %152 : vector<32x128xi1>, vector<32x128xf32>
    %175 = arith.select %26, %173, %153 : vector<32x128xi1>, vector<32x128xf32>
    %176 = vector.extract_strided_slice %10 {offsets = [192, 0], sizes = [32, 128], strides = [1, 1]} : vector<384x128xf32> to vector<32x128xf32>
    %cst_46 = arith.constant dense<0.000000e+00> : vector<32x128xf32>
    %177 = tpu.matmul %175, %11, %cst_46 {dimension_numbers = #tpu.dot_dimension_numbers<[1], [0], [0], [1], [0, 0, 1, 1], [], []>} : vector<32x128xf32>, vector<128x128xf32>, vector<32x128xf32> -> vector<32x128xf32>
    %178 = arith.addf %176, %177 : vector<32x128xf32>
    %179 = arith.negf %178 : vector<32x128xf32>
    %180 = math.exp %179 : vector<32x128xf32>
    %cst_47 = arith.constant 1.000000e+00 : f32
    %181 = vector.broadcast %cst_47 : f32 to vector<32x128xf32>
    %182 = arith.addf %181, %180 : vector<32x128xf32>
    %183 = arith.divf %181, %182 : vector<32x128xf32>
    %184 = math.tanh %178 : vector<32x128xf32>
    %c64_i32_48 = arith.constant 64 : i32
    %185 = tpu.dynamic_rotate %183 by %c64_i32_48 dim 1 : vector<32x128xf32>, i32 -> vector<32x128xf32>
    %c64_i32_49 = arith.constant 64 : i32
    %186 = tpu.dynamic_rotate %184 by %c64_i32_49 dim 1 : vector<32x128xf32>, i32 -> vector<32x128xf32>
    %187 = arith.mulf %183, %186 : vector<32x128xf32>
    %188 = arith.mulf %185, %184 : vector<32x128xf32>
    %189 = arith.select %41, %187, %188 : vector<32x128xi1>, vector<32x128xf32>
    %c32_i32_50 = arith.constant 32 : i32
    %190 = tpu.dynamic_rotate %189 by %c32_i32_50 dim 1 : vector<32x128xf32>, i32 -> vector<32x128xf32>
    %191 = arith.mulf %183, %174 : vector<32x128xf32>
    %192 = arith.addf %191, %190 : vector<32x128xf32>
    %193 = math.tanh %192 : vector<32x128xf32>
    %c64_i32_51 = arith.constant 64 : i32
    %194 = tpu.dynamic_rotate %193 by %c64_i32_51 dim 1 : vector<32x128xf32>, i32 -> vector<32x128xf32>
    %195 = arith.mulf %183, %194 : vector<32x128xf32>
    %196 = arith.select %28, %192, %174 : vector<32x128xi1>, vector<32x128xf32>
    %197 = arith.select %28, %195, %175 : vector<32x128xi1>, vector<32x128xf32>
    %198 = vector.extract_strided_slice %10 {offsets = [224, 0], sizes = [32, 128], strides = [1, 1]} : vector<384x128xf32> to vector<32x128xf32>
    %cst_52 = arith.constant dense<0.000000e+00> : vector<32x128xf32>
    %199 = tpu.matmul %197, %11, %cst_52 {dimension_numbers = #tpu.dot_dimension_numbers<[1], [0], [0], [1], [0, 0, 1, 1], [], []>} : vector<32x128xf32>, vector<128x128xf32>, vector<32x128xf32> -> vector<32x128xf32>
    %200 = arith.addf %198, %199 : vector<32x128xf32>
    %201 = arith.negf %200 : vector<32x128xf32>
    %202 = math.exp %201 : vector<32x128xf32>
    %cst_53 = arith.constant 1.000000e+00 : f32
    %203 = vector.broadcast %cst_53 : f32 to vector<32x128xf32>
    %204 = arith.addf %203, %202 : vector<32x128xf32>
    %205 = arith.divf %203, %204 : vector<32x128xf32>
    %206 = math.tanh %200 : vector<32x128xf32>
    %c64_i32_54 = arith.constant 64 : i32
    %207 = tpu.dynamic_rotate %205 by %c64_i32_54 dim 1 : vector<32x128xf32>, i32 -> vector<32x128xf32>
    %c64_i32_55 = arith.constant 64 : i32
    %208 = tpu.dynamic_rotate %206 by %c64_i32_55 dim 1 : vector<32x128xf32>, i32 -> vector<32x128xf32>
    %209 = arith.mulf %205, %208 : vector<32x128xf32>
    %210 = arith.mulf %207, %206 : vector<32x128xf32>
    %211 = arith.select %41, %209, %210 : vector<32x128xi1>, vector<32x128xf32>
    %c32_i32_56 = arith.constant 32 : i32
    %212 = tpu.dynamic_rotate %211 by %c32_i32_56 dim 1 : vector<32x128xf32>, i32 -> vector<32x128xf32>
    %213 = arith.mulf %205, %196 : vector<32x128xf32>
    %214 = arith.addf %213, %212 : vector<32x128xf32>
    %215 = math.tanh %214 : vector<32x128xf32>
    %c64_i32_57 = arith.constant 64 : i32
    %216 = tpu.dynamic_rotate %215 by %c64_i32_57 dim 1 : vector<32x128xf32>, i32 -> vector<32x128xf32>
    %217 = arith.mulf %205, %216 : vector<32x128xf32>
    %218 = arith.select %30, %214, %196 : vector<32x128xi1>, vector<32x128xf32>
    %219 = arith.select %30, %217, %197 : vector<32x128xi1>, vector<32x128xf32>
    %220 = vector.extract_strided_slice %10 {offsets = [256, 0], sizes = [32, 128], strides = [1, 1]} : vector<384x128xf32> to vector<32x128xf32>
    %cst_58 = arith.constant dense<0.000000e+00> : vector<32x128xf32>
    %221 = tpu.matmul %219, %11, %cst_58 {dimension_numbers = #tpu.dot_dimension_numbers<[1], [0], [0], [1], [0, 0, 1, 1], [], []>} : vector<32x128xf32>, vector<128x128xf32>, vector<32x128xf32> -> vector<32x128xf32>
    %222 = arith.addf %220, %221 : vector<32x128xf32>
    %223 = arith.negf %222 : vector<32x128xf32>
    %224 = math.exp %223 : vector<32x128xf32>
    %cst_59 = arith.constant 1.000000e+00 : f32
    %225 = vector.broadcast %cst_59 : f32 to vector<32x128xf32>
    %226 = arith.addf %225, %224 : vector<32x128xf32>
    %227 = arith.divf %225, %226 : vector<32x128xf32>
    %228 = math.tanh %222 : vector<32x128xf32>
    %c64_i32_60 = arith.constant 64 : i32
    %229 = tpu.dynamic_rotate %227 by %c64_i32_60 dim 1 : vector<32x128xf32>, i32 -> vector<32x128xf32>
    %c64_i32_61 = arith.constant 64 : i32
    %230 = tpu.dynamic_rotate %228 by %c64_i32_61 dim 1 : vector<32x128xf32>, i32 -> vector<32x128xf32>
    %231 = arith.mulf %227, %230 : vector<32x128xf32>
    %232 = arith.mulf %229, %228 : vector<32x128xf32>
    %233 = arith.select %41, %231, %232 : vector<32x128xi1>, vector<32x128xf32>
    %c32_i32_62 = arith.constant 32 : i32
    %234 = tpu.dynamic_rotate %233 by %c32_i32_62 dim 1 : vector<32x128xf32>, i32 -> vector<32x128xf32>
    %235 = arith.mulf %227, %218 : vector<32x128xf32>
    %236 = arith.addf %235, %234 : vector<32x128xf32>
    %237 = math.tanh %236 : vector<32x128xf32>
    %c64_i32_63 = arith.constant 64 : i32
    %238 = tpu.dynamic_rotate %237 by %c64_i32_63 dim 1 : vector<32x128xf32>, i32 -> vector<32x128xf32>
    %239 = arith.mulf %227, %238 : vector<32x128xf32>
    %240 = arith.select %32, %236, %218 : vector<32x128xi1>, vector<32x128xf32>
    %241 = arith.select %32, %239, %219 : vector<32x128xi1>, vector<32x128xf32>
    %242 = vector.extract_strided_slice %10 {offsets = [288, 0], sizes = [32, 128], strides = [1, 1]} : vector<384x128xf32> to vector<32x128xf32>
    %cst_64 = arith.constant dense<0.000000e+00> : vector<32x128xf32>
    %243 = tpu.matmul %241, %11, %cst_64 {dimension_numbers = #tpu.dot_dimension_numbers<[1], [0], [0], [1], [0, 0, 1, 1], [], []>} : vector<32x128xf32>, vector<128x128xf32>, vector<32x128xf32> -> vector<32x128xf32>
    %244 = arith.addf %242, %243 : vector<32x128xf32>
    %245 = arith.negf %244 : vector<32x128xf32>
    %246 = math.exp %245 : vector<32x128xf32>
    %cst_65 = arith.constant 1.000000e+00 : f32
    %247 = vector.broadcast %cst_65 : f32 to vector<32x128xf32>
    %248 = arith.addf %247, %246 : vector<32x128xf32>
    %249 = arith.divf %247, %248 : vector<32x128xf32>
    %250 = math.tanh %244 : vector<32x128xf32>
    %c64_i32_66 = arith.constant 64 : i32
    %251 = tpu.dynamic_rotate %249 by %c64_i32_66 dim 1 : vector<32x128xf32>, i32 -> vector<32x128xf32>
    %c64_i32_67 = arith.constant 64 : i32
    %252 = tpu.dynamic_rotate %250 by %c64_i32_67 dim 1 : vector<32x128xf32>, i32 -> vector<32x128xf32>
    %253 = arith.mulf %249, %252 : vector<32x128xf32>
    %254 = arith.mulf %251, %250 : vector<32x128xf32>
    %255 = arith.select %41, %253, %254 : vector<32x128xi1>, vector<32x128xf32>
    %c32_i32_68 = arith.constant 32 : i32
    %256 = tpu.dynamic_rotate %255 by %c32_i32_68 dim 1 : vector<32x128xf32>, i32 -> vector<32x128xf32>
    %257 = arith.mulf %249, %240 : vector<32x128xf32>
    %258 = arith.addf %257, %256 : vector<32x128xf32>
    %259 = math.tanh %258 : vector<32x128xf32>
    %c64_i32_69 = arith.constant 64 : i32
    %260 = tpu.dynamic_rotate %259 by %c64_i32_69 dim 1 : vector<32x128xf32>, i32 -> vector<32x128xf32>
    %261 = arith.mulf %249, %260 : vector<32x128xf32>
    %262 = arith.select %34, %258, %240 : vector<32x128xi1>, vector<32x128xf32>
    %263 = arith.select %34, %261, %241 : vector<32x128xi1>, vector<32x128xf32>
    %264 = vector.extract_strided_slice %10 {offsets = [320, 0], sizes = [32, 128], strides = [1, 1]} : vector<384x128xf32> to vector<32x128xf32>
    %cst_70 = arith.constant dense<0.000000e+00> : vector<32x128xf32>
    %265 = tpu.matmul %263, %11, %cst_70 {dimension_numbers = #tpu.dot_dimension_numbers<[1], [0], [0], [1], [0, 0, 1, 1], [], []>} : vector<32x128xf32>, vector<128x128xf32>, vector<32x128xf32> -> vector<32x128xf32>
    %266 = arith.addf %264, %265 : vector<32x128xf32>
    %267 = arith.negf %266 : vector<32x128xf32>
    %268 = math.exp %267 : vector<32x128xf32>
    %cst_71 = arith.constant 1.000000e+00 : f32
    %269 = vector.broadcast %cst_71 : f32 to vector<32x128xf32>
    %270 = arith.addf %269, %268 : vector<32x128xf32>
    %271 = arith.divf %269, %270 : vector<32x128xf32>
    %272 = math.tanh %266 : vector<32x128xf32>
    %c64_i32_72 = arith.constant 64 : i32
    %273 = tpu.dynamic_rotate %271 by %c64_i32_72 dim 1 : vector<32x128xf32>, i32 -> vector<32x128xf32>
    %c64_i32_73 = arith.constant 64 : i32
    %274 = tpu.dynamic_rotate %272 by %c64_i32_73 dim 1 : vector<32x128xf32>, i32 -> vector<32x128xf32>
    %275 = arith.mulf %271, %274 : vector<32x128xf32>
    %276 = arith.mulf %273, %272 : vector<32x128xf32>
    %277 = arith.select %41, %275, %276 : vector<32x128xi1>, vector<32x128xf32>
    %c32_i32_74 = arith.constant 32 : i32
    %278 = tpu.dynamic_rotate %277 by %c32_i32_74 dim 1 : vector<32x128xf32>, i32 -> vector<32x128xf32>
    %279 = arith.mulf %271, %262 : vector<32x128xf32>
    %280 = arith.addf %279, %278 : vector<32x128xf32>
    %281 = math.tanh %280 : vector<32x128xf32>
    %c64_i32_75 = arith.constant 64 : i32
    %282 = tpu.dynamic_rotate %281 by %c64_i32_75 dim 1 : vector<32x128xf32>, i32 -> vector<32x128xf32>
    %283 = arith.mulf %271, %282 : vector<32x128xf32>
    %284 = arith.select %36, %280, %262 : vector<32x128xi1>, vector<32x128xf32>
    %285 = arith.select %36, %283, %263 : vector<32x128xi1>, vector<32x128xf32>
    %286 = vector.extract_strided_slice %10 {offsets = [352, 0], sizes = [32, 128], strides = [1, 1]} : vector<384x128xf32> to vector<32x128xf32>
    %cst_76 = arith.constant dense<0.000000e+00> : vector<32x128xf32>
    %287 = tpu.matmul %285, %11, %cst_76 {dimension_numbers = #tpu.dot_dimension_numbers<[1], [0], [0], [1], [0, 0, 1, 1], [], []>} : vector<32x128xf32>, vector<128x128xf32>, vector<32x128xf32> -> vector<32x128xf32>
    %288 = arith.addf %286, %287 : vector<32x128xf32>
    %289 = arith.negf %288 : vector<32x128xf32>
    %290 = math.exp %289 : vector<32x128xf32>
    %cst_77 = arith.constant 1.000000e+00 : f32
    %291 = vector.broadcast %cst_77 : f32 to vector<32x128xf32>
    %292 = arith.addf %291, %290 : vector<32x128xf32>
    %293 = arith.divf %291, %292 : vector<32x128xf32>
    %294 = math.tanh %288 : vector<32x128xf32>
    %c64_i32_78 = arith.constant 64 : i32
    %295 = tpu.dynamic_rotate %293 by %c64_i32_78 dim 1 : vector<32x128xf32>, i32 -> vector<32x128xf32>
    %c64_i32_79 = arith.constant 64 : i32
    %296 = tpu.dynamic_rotate %294 by %c64_i32_79 dim 1 : vector<32x128xf32>, i32 -> vector<32x128xf32>
    %297 = arith.mulf %293, %296 : vector<32x128xf32>
    %298 = arith.mulf %295, %294 : vector<32x128xf32>
    %299 = arith.select %41, %297, %298 : vector<32x128xi1>, vector<32x128xf32>
    %c32_i32_80 = arith.constant 32 : i32
    %300 = tpu.dynamic_rotate %299 by %c32_i32_80 dim 1 : vector<32x128xf32>, i32 -> vector<32x128xf32>
    %301 = arith.mulf %293, %284 : vector<32x128xf32>
    %302 = arith.addf %301, %300 : vector<32x128xf32>
    %303 = math.tanh %302 : vector<32x128xf32>
    %c64_i32_81 = arith.constant 64 : i32
    %304 = tpu.dynamic_rotate %303 by %c64_i32_81 dim 1 : vector<32x128xf32>, i32 -> vector<32x128xf32>
    %305 = arith.mulf %293, %304 : vector<32x128xf32>
    %306 = arith.select %38, %305, %285 : vector<32x128xi1>, vector<32x128xf32>
    %c0_82 = arith.constant 0 : index
    %c0_83 = arith.constant 0 : index
    %307 = vector.load %arg7[%c0_82, %c0_83] : memref<128x32xf32, #tpu.memory_space<vmem>>, vector<128x32xf32>
    %cst_84 = arith.constant dense<0.000000e+00> : vector<32x32xf32>
    %308 = tpu.matmul %306, %307, %cst_84 {dimension_numbers = #tpu.dot_dimension_numbers<[1], [0], [0], [1], [0, 0, 1, 1], [], []>} : vector<32x128xf32>, vector<128x32xf32>, vector<32x32xf32> -> vector<32x32xf32>
    %c0_85 = arith.constant 0 : index
    %c0_86 = arith.constant 0 : index
    %309 = vector.load %arg8[%c0_85, %c0_86] : memref<1x32xf32, #tpu.memory_space<vmem>>, vector<1x32xf32>
    %310 = vector.broadcast %309 : vector<1x32xf32> to vector<32x32xf32>
    %311 = arith.addf %308, %310 : vector<32x32xf32>
    %312 = math.tanh %311 : vector<32x32xf32>
    %c0_87 = arith.constant 0 : index
    %c0_88 = arith.constant 0 : index
    %c0_89 = arith.constant 0 : index
    %313 = vector.load %arg3[%c0_87, %c0_88, %c0_89] : memref<10x32x16xf32, #tpu.memory_space<vmem>>, vector<10x32x16xf32>
    %cst_90 = arith.constant dense<0.000000e+00> : vector<32x16xf32>
    %314 = vector.multi_reduction <add>, %313, %cst_90 [0] : vector<10x32x16xf32> to vector<32x16xf32>
    %cst_91 = arith.constant 1.000000e+01 : f32
    %315 = vector.broadcast %cst_91 : f32 to vector<32x16xf32>
    %316 = arith.divf %314, %315 : vector<32x16xf32>
    %c0_92 = arith.constant 0 : index
    %c0_93 = arith.constant 0 : index
    %317 = vector.load %arg9[%c0_92, %c0_93] : memref<16x256xf32, #tpu.memory_space<vmem>>, vector<16x256xf32>
    %cst_94 = arith.constant dense<0.000000e+00> : vector<32x256xf32>
    %318 = tpu.matmul %316, %317, %cst_94 {dimension_numbers = #tpu.dot_dimension_numbers<[1], [0], [0], [1], [0, 0, 1, 1], [], []>} : vector<32x16xf32>, vector<16x256xf32>, vector<32x256xf32> -> vector<32x256xf32>
    %c0_95 = arith.constant 0 : index
    %c0_96 = arith.constant 0 : index
    %319 = vector.load %arg10[%c0_95, %c0_96] : memref<1x256xf32, #tpu.memory_space<vmem>>, vector<1x256xf32>
    %320 = vector.broadcast %319 : vector<1x256xf32> to vector<32x256xf32>
    %321 = arith.addf %318, %320 : vector<32x256xf32>
    %322 = math.tanh %321 : vector<32x256xf32>
    %c0_97 = arith.constant 0 : index
    %c0_98 = arith.constant 0 : index
    %323 = vector.load %arg11[%c0_97, %c0_98] : memref<256x256xf32, #tpu.memory_space<vmem>>, vector<256x256xf32>
    %cst_99 = arith.constant dense<0.000000e+00> : vector<32x256xf32>
    %324 = tpu.matmul %322, %323, %cst_99 {dimension_numbers = #tpu.dot_dimension_numbers<[1], [0], [0], [1], [0, 0, 1, 1], [], []>} : vector<32x256xf32>, vector<256x256xf32>, vector<32x256xf32> -> vector<32x256xf32>
    %c0_100 = arith.constant 0 : index
    %c0_101 = arith.constant 0 : index
    %325 = vector.load %arg12[%c0_100, %c0_101] : memref<1x256xf32, #tpu.memory_space<vmem>>, vector<1x256xf32>
    %326 = vector.broadcast %325 : vector<1x256xf32> to vector<32x256xf32>
    %327 = arith.addf %324, %326 : vector<32x256xf32>
    %328 = math.tanh %327 : vector<32x256xf32>
    %c0_102 = arith.constant 0 : index
    %c0_103 = arith.constant 0 : index
    %329 = vector.load %arg13[%c0_102, %c0_103] : memref<256x384xf32, #tpu.memory_space<vmem>>, vector<256x384xf32>
    %cst_104 = arith.constant dense<0.000000e+00> : vector<32x384xf32>
    %330 = tpu.matmul %328, %329, %cst_104 {dimension_numbers = #tpu.dot_dimension_numbers<[1], [0], [0], [1], [0, 0, 1, 1], [], []>} : vector<32x256xf32>, vector<256x384xf32>, vector<32x384xf32> -> vector<32x384xf32>
    %c0_105 = arith.constant 0 : index
    %c0_106 = arith.constant 0 : index
    %331 = vector.load %arg14[%c0_105, %c0_106] : memref<32x384xf32, #tpu.memory_space<vmem>>, vector<32x384xf32>
    %cst_107 = arith.constant dense<0.000000e+00> : vector<32x384xf32>
    %332 = tpu.matmul %312, %331, %cst_107 {dimension_numbers = #tpu.dot_dimension_numbers<[1], [0], [0], [1], [0, 0, 1, 1], [], []>} : vector<32x32xf32>, vector<32x384xf32>, vector<32x384xf32> -> vector<32x384xf32>
    %333 = arith.addf %330, %332 : vector<32x384xf32>
    %c0_108 = arith.constant 0 : index
    %c0_109 = arith.constant 0 : index
    %334 = vector.load %arg15[%c0_108, %c0_109] : memref<1x384xf32, #tpu.memory_space<vmem>>, vector<1x384xf32>
    %335 = vector.broadcast %334 : vector<1x384xf32> to vector<32x384xf32>
    %336 = arith.addf %333, %335 : vector<32x384xf32>
    %337 = math.tanh %336 : vector<32x384xf32>
    %c0_110 = arith.constant 0 : index
    %c0_111 = arith.constant 0 : index
    %338 = vector.load %arg16[%c0_110, %c0_111] : memref<384x256xf32, #tpu.memory_space<vmem>>, vector<384x256xf32>
    %cst_112 = arith.constant dense<0.000000e+00> : vector<32x256xf32>
    %339 = tpu.matmul %337, %338, %cst_112 {dimension_numbers = #tpu.dot_dimension_numbers<[1], [0], [0], [1], [0, 0, 1, 1], [], []>} : vector<32x384xf32>, vector<384x256xf32>, vector<32x256xf32> -> vector<32x256xf32>
    %c0_113 = arith.constant 0 : index
    %c0_114 = arith.constant 0 : index
    %340 = vector.load %arg17[%c0_113, %c0_114] : memref<1x256xf32, #tpu.memory_space<vmem>>, vector<1x256xf32>
    %341 = vector.broadcast %340 : vector<1x256xf32> to vector<32x256xf32>
    %342 = arith.addf %339, %341 : vector<32x256xf32>
    %c0_115 = arith.constant 0 : index
    %c0_116 = arith.constant 0 : index
    %343 = vector.load %arg18[%c0_115, %c0_116] : memref<32x256xf32, #tpu.memory_space<vmem>>, vector<32x256xf32>
    tpu.vector_store %arg18[%c0_115, %c0_116], %342 {strides = array<i32>} : memref<32x256xf32, #tpu.memory_space<vmem>>, vector<32x256xf32>,
    return
  }
  func.func @transform_0(%arg0: i32) -> (i32, i32) {
    %c0_i32 = arith.constant 0 : i32
    %c0_i32_0 = arith.constant 0 : i32
    return %arg0, %c0_i32 : i32, i32
  }
  func.func @transform_1(%arg0: i32) -> (i32, i32) {
    %c0_i32 = arith.constant 0 : i32
    %c0_i32_0 = arith.constant 0 : i32
    return %arg0, %c0_i32 : i32, i32
  }
  func.func @transform_2(%arg0: i32) -> (i32, i32, i32) {
    %c0_i32 = arith.constant 0 : i32
    %c0_i32_0 = arith.constant 0 : i32
    %c0_i32_1 = arith.constant 0 : i32
    return %c0_i32, %arg0, %c0_i32_0 : i32, i32, i32
  }
  func.func @transform_3(%arg0: i32) -> (i32, i32) {
    %c0_i32 = arith.constant 0 : i32
    %c0_i32_0 = arith.constant 0 : i32
    %c0_i32_1 = arith.constant 0 : i32
    return %c0_i32, %c0_i32_0 : i32, i32
  }
  func.func @transform_4(%arg0: i32) -> (i32, i32) {
    %c0_i32 = arith.constant 0 : i32
    %c0_i32_0 = arith.constant 0 : i32
    %c0_i32_1 = arith.constant 0 : i32
    return %c0_i32, %c0_i32_0 : i32, i32
  }
  func.func @transform_5(%arg0: i32) -> (i32, i32) {
    %c0_i32 = arith.constant 0 : i32
    %c0_i32_0 = arith.constant 0 : i32
    %c0_i32_1 = arith.constant 0 : i32
    return %c0_i32, %c0_i32_0 : i32, i32
  }
  func.func @transform_6(%arg0: i32) -> (i32, i32) {
    %c0_i32 = arith.constant 0 : i32
    %c0_i32_0 = arith.constant 0 : i32
    %c0_i32_1 = arith.constant 0 : i32
    return %c0_i32, %c0_i32_0 : i32, i32
  }
  func.func @transform_7(%arg0: i32) -> (i32, i32) {
    %c0_i32 = arith.constant 0 : i32
    %c0_i32_0 = arith.constant 0 : i32
    %c0_i32_1 = arith.constant 0 : i32
    return %c0_i32, %c0_i32_0 : i32, i32
  }
  func.func @transform_8(%arg0: i32) -> (i32, i32) {
    %c0_i32 = arith.constant 0 : i32
    %c0_i32_0 = arith.constant 0 : i32
    %c0_i32_1 = arith.constant 0 : i32
    return %c0_i32, %c0_i32_0 : i32, i32
  }
  func.func @transform_9(%arg0: i32) -> (i32, i32) {
    %c0_i32 = arith.constant 0 : i32
    %c0_i32_0 = arith.constant 0 : i32
    %c0_i32_1 = arith.constant 0 : i32
    return %c0_i32, %c0_i32_0 : i32, i32
  }
  func.func @transform_10(%arg0: i32) -> (i32, i32) {
    %c0_i32 = arith.constant 0 : i32
    %c0_i32_0 = arith.constant 0 : i32
    %c0_i32_1 = arith.constant 0 : i32
    return %c0_i32, %c0_i32_0 : i32, i32
  }
  func.func @transform_11(%arg0: i32) -> (i32, i32) {
    %c0_i32 = arith.constant 0 : i32
    %c0_i32_0 = arith.constant 0 : i32
    %c0_i32_1 = arith.constant 0 : i32
    return %c0_i32, %c0_i32_0 : i32, i32
  }
  func.func @transform_12(%arg0: i32) -> (i32, i32) {
    %c0_i32 = arith.constant 0 : i32
    %c0_i32_0 = arith.constant 0 : i32
    %c0_i32_1 = arith.constant 0 : i32
    return %c0_i32, %c0_i32_0 : i32, i32
  }
  func.func @transform_13(%arg0: i32) -> (i32, i32) {
    %c0_i32 = arith.constant 0 : i32
    %c0_i32_0 = arith.constant 0 : i32
    %c0_i32_1 = arith.constant 0 : i32
    return %c0_i32, %c0_i32_0 : i32, i32
  }
  func.func @transform_14(%arg0: i32) -> (i32, i32) {
    %c0_i32 = arith.constant 0 : i32
    %c0_i32_0 = arith.constant 0 : i32
    %c0_i32_1 = arith.constant 0 : i32
    return %c0_i32, %c0_i32_0 : i32, i32
  }
  func.func @transform_15(%arg0: i32) -> (i32, i32) {
    %c0_i32 = arith.constant 0 : i32
    %c0_i32_0 = arith.constant 0 : i32
    %c0_i32_1 = arith.constant 0 : i32
    return %c0_i32, %c0_i32_0 : i32, i32
  }
  func.func @transform_16(%arg0: i32) -> (i32, i32) {
    %c0_i32 = arith.constant 0 : i32
    %c0_i32_0 = arith.constant 0 : i32
    %c0_i32_1 = arith.constant 0 : i32
    return %c0_i32, %c0_i32_0 : i32, i32
  }
  func.func @transform_17(%arg0: i32) -> (i32, i32) {
    %c0_i32 = arith.constant 0 : i32
    %c0_i32_0 = arith.constant 0 : i32
    return %arg0, %c0_i32 : i32, i32
  }
}

</mosaic_0001>

<llo_original>
// kernel: multitask_text_shared_forward.1
$region0: #{multitask_text_shared_forward.1}
  #allocation0 [shape = 'u32[]', space=smem, size = 0x4, offset = 0x4, fixed_abs, tag = 'smem constant byte address 0x4 - core index']
  #allocation1 [shape = 'u32[72,128]{1,0:T(1,128)}', space=vmem, size = 0x9000, scoped, tag = 'internal scratch']
  %s0 = inlined_call_operand.vmem [shape: s32[768,1], index: 0, kind: input, shape index: {}]
  %s1 = inlined_call_operand.vmem [shape: s32[64,1], index: 1, kind: input, shape index: {}]
  %s2 = inlined_call_operand.vmem [shape: f32[10,64,16], index: 2, kind: input, shape index: {}]
  %s3 = inlined_call_operand.hbm [shape: f32[100,128], index: 3, kind: input, shape index: {}]
  %s4 = inlined_call_operand.vmem [shape: f32[128,128], index: 4, kind: input, shape index: {}]
  %s5 = inlined_call_operand.vmem [shape: f32[1,128], index: 5, kind: input, shape index: {}]
  %s6 = inlined_call_operand.vmem [shape: f32[128,32], index: 6, kind: input, shape index: {}]
  %s7 = inlined_call_operand.vmem [shape: f32[1,32], index: 7, kind: input, shape index: {}]
  %s8 = inlined_call_operand.vmem [shape: f32[16,256], index: 8, kind: input, shape index: {}]
  %s9 = inlined_call_operand.vmem [shape: f32[1,256], index: 9, kind: input, shape index: {}]
  %s10 = inlined_call_operand.hbm [shape: f32[256,256], index: 10, kind: input, shape index: {}]
  %s11 = inlined_call_operand.vmem [shape: f32[1,256], index: 11, kind: input, shape index: {}]
  %s12 = inlined_call_operand.vmem [shape: f32[256,384], index: 12, kind: input, shape index: {}]
  %s13 = inlined_call_operand.hbm [shape: f32[32,384], index: 13, kind: input, shape index: {}]
  %s14 = inlined_call_operand.vmem [shape: f32[1,384], index: 14, kind: input, shape index: {}]
  %s15 = inlined_call_operand.vmem [shape: f32[384,256], index: 15, kind: input, shape index: {}]
  %s16 = inlined_call_operand.vmem [shape: f32[1,256], index: 16, kind: input, shape index: {}]
  %s17 = inlined_call_operand.vmem [shape: f32[64,256], index: 17, kind: output, shape index: {}]
  %s18 = sld [smem:[#allocation0]]
  $region151: #{multitask_text_shared_forward.1} parent=0
    _
  %s20 = ssub.s32 1, %s18
  %s21 = scalar_select 0, %s20, %s18
  $region1: #{multitask_text_shared_forward.1} parent=0
    #allocation2 [shape = 'u8[327680]{0}', space=vmem, size = 0x50000, scoped, tag = 'input window, operand 2']
    #allocation3 [shape = 'u8[53248]{0}', space=vmem, size = 0xd000, scoped, tag = 'input window, operand 3, single buffered']
    #allocation4 [shape = 's32[2]{0}', space=sflag, size = 0x8, scoped, tag = 'scoped memory for multitask_text_shared_forward.1']
    #allocation5 [shape = 'u8[262144]{0}', space=vmem, size = 0x40000, scoped, tag = 'input window, operand 10, single buffered']
    #allocation6 [shape = 's32[1]{0}', space=sflag, size = 0x4, scoped, tag = 'scoped memory for multitask_text_shared_forward.1']
    #allocation7 [shape = 'u8[49152]{0}', space=vmem, size = 0xc000, scoped, tag = 'input window, operand 13, single buffered']
    %22 = vsyncpa [#allocation4], 0
    %23 = vsyncpa [#allocation6], 0
    loop: start=0, step=1, limit=4
    $region2: #{multitask_text_shared_forward.1} parent=1 // loop_pre_header
      _
    $region3: #{multitask_text_shared_forward.1} parent=1 // loop_header
      %s25 = sphi 0, %s29
      %p26 = scmp.ge.s32.totalorder %s25, 4
      %s35 = sphi 0, %s37
      %s38 = sphi 0, %s35
      %s39 = sphi 0, %s38
      %s55 = sphi 0, %s39
      %s61 = sphi 0, %s63
      %s64 = sphi 0, %s61
      %s65 = sphi 0, %s64
      %s81 = sphi 0, %s65
      %s87 = sphi 0, %s89
      %s90 = sphi 0, %s87
      %s91 = sphi 0, %s90
      %s107 = sphi 0, %s91
      %s111 = sphi 0, %s111
      %s113 = sphi 0, %s111
      %s114 = sphi 0, %s113
      %s128 = sphi 0, %s114
      %s132 = sphi 0, %s132
      %s134 = sphi 0, %s132
      %s135 = sphi 0, %s134
      %s149 = sphi 0, %s135
      %s153 = sphi 0, %s153
      %s155 = sphi 0, %s153
      %s156 = sphi 0, %s155
      %s170 = sphi 0, %s156
      %s174 = sphi 0, %s174
      %s176 = sphi 0, %s174
      %s177 = sphi 0, %s176
      %s191 = sphi 0, %s177
      %s195 = sphi 0, %s195
      %s197 = sphi 0, %s195
      %s198 = sphi 0, %s197
      %s212 = sphi 0, %s198
      %s216 = sphi 0, %s216
      %s218 = sphi 0, %s216
      %s219 = sphi 0, %s218
      %s233 = sphi 0, %s219
      %s237 = sphi 0, %s237
      %s239 = sphi 0, %s237
      %s240 = sphi 0, %s239
      %s254 = sphi 0, %s240
      %s258 = sphi 0, %s258
      %s260 = sphi 0, %s258
      %s261 = sphi 0, %s260
      %s275 = sphi 0, %s261
      %s279 = sphi 0, %s279
      %s281 = sphi 0, %s279
      %s282 = sphi 0, %s281
      %s296 = sphi 0, %s282
      %s300 = sphi 0, %s300
      %s302 = sphi 0, %s300
      %s303 = sphi 0, %s302
      %s317 = sphi 0, %s303
      %s321 = sphi 0, %s321
      %s323 = sphi 0, %s321
      %s324 = sphi 0, %s323
      %s338 = sphi 0, %s324
      %s342 = sphi 0, %s342
      %s344 = sphi 0, %s342
      %s345 = sphi 0, %s344
      %s359 = sphi 0, %s345
      %s363 = sphi 0, %s363
      %s365 = sphi 0, %s363
      %s366 = sphi 0, %s365
      %s380 = sphi 0, %s366
      %s384 = sphi 0, %s384
      %s386 = sphi 0, %s384
      %s387 = sphi 0, %s386
      %s401 = sphi 0, %s387
      %s407 = sphi 0, %s409
      %s410 = sphi 0, %s407
      %s411 = sphi 0, %s410
      %s427 = sphi 0, %s411
    $region4: #{multitask_text_shared_forward.1} parent=1 // loop_header_branch
      %28 = sbr.rel (%p26) target = $region8
    $region5: #{multitask_text_shared_forward.1} parent=1 // loop_body
      %s30 = ssub.s32 %s25, 1
      %s31 = ssub.s32 %s25, 2
      %s32 = sadd.s32 %s25, 1
      %s33 = ssub.s32 %s25, %s32
      %p34 = scmp.eq.s32.totalorder %s33, 0
      %s36 = sadd.s32 %s35, 1
      %s37 = scalar_select %p34, %s35, %s36
      %p40 = pneg %p34
      %p41 = scmp.eq.s32.totalorder %s25, 1
      %p42 = por %p40, %p41
      %p43 = scmp.ne.s32.totalorder %s35, %s38
      %p44 = scmp.eq.s32.totalorder %s25, 0
      %p45 = por %p43, %p44
      %p46 = scmp.ne.s32.totalorder %s35, %s38
      %p47 = scmp.eq.s32.totalorder %s30, 1
      %p48 = por %p46, %p47
      %p49 = scmp.ne.s32.totalorder %s38, %s39
      %p50 = scmp.eq.s32.totalorder %s30, 0
      %p51 = por %p49, %p50
      %p52 = scmp.ne.s32.totalorder %s38, %s39
      %p53 = scmp.eq.s32.totalorder %s31, 1
      %p54 = por %p52, %p53
      %p56 = scmp.ne.s32.totalorder %s39, %s55
      %p57 = scmp.eq.s32.totalorder %s31, 0
      %p58 = por %p56, %p57
      %s59 = ssub.s32 %s25, %s32
      %p60 = scmp.eq.s32.totalorder %s59, 0
      %s62 = sadd.s32 %s61, 1
      %s63 = scalar_select %p60, %s61, %s62
      %p66 = pneg %p60
      %p67 = scmp.eq.s32.totalorder %s25, 1
      %p68 = por %p66, %p67
      %p69 = scmp.ne.s32.totalorder %s61, %s64
      %p70 = scmp.eq.s32.totalorder %s25, 0
      %p71 = por %p69, %p70
      %p72 = scmp.ne.s32.totalorder %s61, %s64
      %p73 = scmp.eq.s32.totalorder %s30, 1
      %p74 = por %p72, %p73
      %p75 = scmp.ne.s32.totalorder %s64, %s65
      %p76 = scmp.eq.s32.totalorder %s30, 0
      %p77 = por %p75, %p76
      %p78 = scmp.ne.s32.totalorder %s64, %s65
      %p79 = scmp.eq.s32.totalorder %s31, 1
      %p80 = por %p78, %p79
      %p82 = scmp.ne.s32.totalorder %s65, %s81
      %p83 = scmp.eq.s32.totalorder %s31, 0
      %p84 = por %p82, %p83
      %s85 = ssub.s32 %s25, %s32
      %p86 = scmp.eq.s32.totalorder %s85, 0
      %s88 = sadd.s32 %s87, 1
      %s89 = scalar_select %p86, %s87, %s88
      %p92 = pneg %p86
      %p93 = scmp.eq.s32.totalorder %s25, 1
      %p94 = por %p92, %p93
      %p95 = scmp.ne.s32.totalorder %s87, %s90
      %p96 = scmp.eq.s32.totalorder %s25, 0
      %p97 = por %p95, %p96
      %p98 = scmp.ne.s32.totalorder %s87, %s90
      %p99 = scmp.eq.s32.totalorder %s30, 1
      %p100 = por %p98, %p99
      %p101 = scmp.ne.s32.totalorder %s90, %s91
      %p102 = scmp.eq.s32.totalorder %s30, 0
      %p103 = por %p101, %p102
      %p104 = scmp.ne.s32.totalorder %s90, %s91
      %p105 = scmp.eq.s32.totalorder %s31, 1
      %p106 = por %p104, %p105
      %p108 = scmp.ne.s32.totalorder %s91, %s107
      %p109 = scmp.eq.s32.totalorder %s31, 0
      %p110 = por %p108, %p109
      %s112 = sadd.s32 %s111, 1
      %p115 = scmp.eq.s32.totalorder %s25, 1
      %p116 = scmp.ne.s32.totalorder %s111, %s113
      %p117 = scmp.eq.s32.totalorder %s25, 0
      %p118 = por %p116, %p117
      %p119 = scmp.ne.s32.totalorder %s111, %s113
      %p120 = scmp.eq.s32.totalorder %s30, 1
      %p121 = por %p119, %p120
      %p122 = scmp.ne.s32.totalorder %s113, %s114
      %p123 = scmp.eq.s32.totalorder %s30, 0
      %p124 = por %p122, %p123
      %p125 = scmp.ne.s32.totalorder %s113, %s114
      %p126 = scmp.eq.s32.totalorder %s31, 1
      %p127 = por %p125, %p126
      %p129 = scmp.ne.s32.totalorder %s114, %s128
      %p130 = scmp.eq.s32.totalorder %s31, 0
      %p131 = por %p129, %p130
      %s133 = sadd.s32 %s132, 1
      %p136 = scmp.eq.s32.totalorder %s25, 1
      %p137 = scmp.ne.s32.totalorder %s132, %s134
      %p138 = scmp.eq.s32.totalorder %s25, 0
      %p139 = por %p137, %p138
      %p140 = scmp.ne.s32.totalorder %s132, %s134
      %p141 = scmp.eq.s32.totalorder %s30, 1
      %p142 = por %p140, %p141
      %p143 = scmp.ne.s32.totalorder %s134, %s135
      %p144 = scmp.eq.s32.totalorder %s30, 0
      %p145 = por %p143, %p144
      %p146 = scmp.ne.s32.totalorder %s134, %s135
      %p147 = scmp.eq.s32.totalorder %s31, 1
      %p148 = por %p146, %p147
      %p150 = scmp.ne.s32.totalorder %s135, %s149
      %p151 = scmp.eq.s32.totalorder %s31, 0
      %p152 = por %p150, %p151
      %s154 = sadd.s32 %s153, 1
      %p157 = scmp.eq.s32.totalorder %s25, 1
      %p158 = scmp.ne.s32.totalorder %s153, %s155
      %p159 = scmp.eq.s32.totalorder %s25, 0
      %p160 = por %p158, %p159
      %p161 = scmp.ne.s32.totalorder %s153, %s155
      %p162 = scmp.eq.s32.totalorder %s30, 1
      %p163 = por %p161, %p162
      %p164 = scmp.ne.s32.totalorder %s155, %s156
      %p165 = scmp.eq.s32.totalorder %s30, 0
      %p166 = por %p164, %p165
      %p167 = scmp.ne.s32.totalorder %s155, %s156
      %p168 = scmp.eq.s32.totalorder %s31, 1
      %p169 = por %p167, %p168
      %p171 = scmp.ne.s32.totalorder %s156, %s170
      %p172 = scmp.eq.s32.totalorder %s31, 0
      %p173 = por %p171, %p172
      %s175 = sadd.s32 %s174, 1
      %p178 = scmp.eq.s32.totalorder %s25, 1
      %p179 = scmp.ne.s32.totalorder %s174, %s176
      %p180 = scmp.eq.s32.totalorder %s25, 0
      %p181 = por %p179, %p180
      %p182 = scmp.ne.s32.totalorder %s174, %s176
      %p183 = scmp.eq.s32.totalorder %s30, 1
      %p184 = por %p182, %p183
      %p185 = scmp.ne.s32.totalorder %s176, %s177
      %p186 = scmp.eq.s32.totalorder %s30, 0
      %p187 = por %p185, %p186
      %p188 = scmp.ne.s32.totalorder %s176, %s177
      %p189 = scmp.eq.s32.totalorder %s31, 1
      %p190 = por %p188, %p189
      %p192 = scmp.ne.s32.totalorder %s177, %s191
      %p193 = scmp.eq.s32.totalorder %s31, 0
      %p194 = por %p192, %p193
      %s196 = sadd.s32 %s195, 1
      %p199 = scmp.eq.s32.totalorder %s25, 1
      %p200 = scmp.ne.s32.totalorder %s195, %s197
      %p201 = scmp.eq.s32.totalorder %s25, 0
      %p202 = por %p200, %p201
      %p203 = scmp.ne.s32.totalorder %s195, %s197
      %p204 = scmp.eq.s32.totalorder %s30, 1
      %p205 = por %p203, %p204
      %p206 = scmp.ne.s32.totalorder %s197, %s198
      %p207 = scmp.eq.s32.totalorder %s30, 0
      %p208 = por %p206, %p207
      %p209 = scmp.ne.s32.totalorder %s197, %s198
      %p210 = scmp.eq.s32.totalorder %s31, 1
      %p211 = por %p209, %p210
      %p213 = scmp.ne.s32.totalorder %s198, %s212
      %p214 = scmp.eq.s32.totalorder %s31, 0
      %p215 = por %p213, %p214
      %s217 = sadd.s32 %s216, 1
      %p220 = scmp.eq.s32.totalorder %s25, 1
      %p221 = scmp.ne.s32.totalorder %s216, %s218
      %p222 = scmp.eq.s32.totalorder %s25, 0
      %p223 = por %p221, %p222
      %p224 = scmp.ne.s32.totalorder %s216, %s218
      %p225 = scmp.eq.s32.totalorder %s30, 1
      %p226 = por %p224, %p225
      %p227 = scmp.ne.s32.totalorder %s218, %s219
      %p228 = scmp.eq.s32.totalorder %s30, 0
      %p229 = por %p227, %p228
      %p230 = scmp.ne.s32.totalorder %s218, %s219
      %p231 = scmp.eq.s32.totalorder %s31, 1
      %p232 = por %p230, %p231
      %p234 = scmp.ne.s32.totalorder %s219, %s233
      %p235 = scmp.eq.s32.totalorder %s31, 0
      %p236 = por %p234, %p235
      %s238 = sadd.s32 %s237, 1
      %p241 = scmp.eq.s32.totalorder %s25, 1
      %p242 = scmp.ne.s32.totalorder %s237, %s239
      %p243 = scmp.eq.s32.totalorder %s25, 0
      %p244 = por %p242, %p243
      %p245 = scmp.ne.s32.totalorder %s237, %s239
      %p246 = scmp.eq.s32.totalorder %s30, 1
      %p247 = por %p245, %p246
      %p248 = scmp.ne.s32.totalorder %s239, %s240
      %p249 = scmp.eq.s32.totalorder %s30, 0
      %p250 = por %p248, %p249
      %p251 = scmp.ne.s32.totalorder %s239, %s240
      %p252 = scmp.eq.s32.totalorder %s31, 1
      %p253 = por %p251, %p252
      %p255 = scmp.ne.s32.totalorder %s240, %s254
      %p256 = scmp.eq.s32.totalorder %s31, 0
      %p257 = por %p255, %p256
      %s259 = sadd.s32 %s258, 1
      %p262 = scmp.eq.s32.totalorder %s25, 1
      %p263 = scmp.ne.s32.totalorder %s258, %s260
      %p264 = scmp.eq.s32.totalorder %s25, 0
      %p265 = por %p263, %p264
      %p266 = scmp.ne.s32.totalorder %s258, %s260
      %p267 = scmp.eq.s32.totalorder %s30, 1
      %p268 = por %p266, %p267
      %p269 = scmp.ne.s32.totalorder %s260, %s261
      %p270 = scmp.eq.s32.totalorder %s30, 0
      %p271 = por %p269, %p270
      %p272 = scmp.ne.s32.totalorder %s260, %s261
      %p273 = scmp.eq.s32.totalorder %s31, 1
      %p274 = por %p272, %p273
      %p276 = scmp.ne.s32.totalorder %s261, %s275
      %p277 = scmp.eq.s32.totalorder %s31, 0
      %p278 = por %p276, %p277
      %s280 = sadd.s32 %s279, 1
      %p283 = scmp.eq.s32.totalorder %s25, 1
      %p284 = scmp.ne.s32.totalorder %s279, %s281
      %p285 = scmp.eq.s32.totalorder %s25, 0
      %p286 = por %p284, %p285
      %p287 = scmp.ne.s32.totalorder %s279, %s281
      %p288 = scmp.eq.s32.totalorder %s30, 1
      %p289 = por %p287, %p288
      %p290 = scmp.ne.s32.totalorder %s281, %s282
      %p291 = scmp.eq.s32.totalorder %s30, 0
      %p292 = por %p290, %p291
      %p293 = scmp.ne.s32.totalorder %s281, %s282
      %p294 = scmp.eq.s32.totalorder %s31, 1
      %p295 = por %p293, %p294
      %p297 = scmp.ne.s32.totalorder %s282, %s296
      %p298 = scmp.eq.s32.totalorder %s31, 0
      %p299 = por %p297, %p298
      %s301 = sadd.s32 %s300, 1
      %p304 = scmp.eq.s32.totalorder %s25, 1
      %p305 = scmp.ne.s32.totalorder %s300, %s302
      %p306 = scmp.eq.s32.totalorder %s25, 0
      %p307 = por %p305, %p306
      %p308 = scmp.ne.s32.totalorder %s300, %s302
      %p309 = scmp.eq.s32.totalorder %s30, 1
      %p310 = por %p308, %p309
      %p311 = scmp.ne.s32.totalorder %s302, %s303
      %p312 = scmp.eq.s32.totalorder %s30, 0
      %p313 = por %p311, %p312
      %p314 = scmp.ne.s32.totalorder %s302, %s303
      %p315 = scmp.eq.s32.totalorder %s31, 1
      %p316 = por %p314, %p315
      %p318 = scmp.ne.s32.totalorder %s303, %s317
      %p319 = scmp.eq.s32.totalorder %s31, 0
      %p320 = por %p318, %p319
      %s322 = sadd.s32 %s321, 1
      %p325 = scmp.eq.s32.totalorder %s25, 1
      %p326 = scmp.ne.s32.totalorder %s321, %s323
      %p327 = scmp.eq.s32.totalorder %s25, 0
      %p328 = por %p326, %p327
      %p329 = scmp.ne.s32.totalorder %s321, %s323
      %p330 = scmp.eq.s32.totalorder %s30, 1
      %p331 = por %p329, %p330
      %p332 = scmp.ne.s32.totalorder %s323, %s324
      %p333 = scmp.eq.s32.totalorder %s30, 0
      %p334 = por %p332, %p333
      %p335 = scmp.ne.s32.totalorder %s323, %s324
      %p336 = scmp.eq.s32.totalorder %s31, 1
      %p337 = por %p335, %p336
      %p339 = scmp.ne.s32.totalorder %s324, %s338
      %p340 = scmp.eq.s32.totalorder %s31, 0
      %p341 = por %p339, %p340
      %s343 = sadd.s32 %s342, 1
      %p346 = scmp.eq.s32.totalorder %s25, 1
      %p347 = scmp.ne.s32.totalorder %s342, %s344
      %p348 = scmp.eq.s32.totalorder %s25, 0
      %p349 = por %p347, %p348
      %p350 = scmp.ne.s32.totalorder %s342, %s344
      %p351 = scmp.eq.s32.totalorder %s30, 1
      %p352 = por %p350, %p351
      %p353 = scmp.ne.s32.totalorder %s344, %s345
      %p354 = scmp.eq.s32.totalorder %s30, 0
      %p355 = por %p353, %p354
      %p356 = scmp.ne.s32.totalorder %s344, %s345
      %p357 = scmp.eq.s32.totalorder %s31, 1
      %p358 = por %p356, %p357
      %p360 = scmp.ne.s32.totalorder %s345, %s359
      %p361 = scmp.eq.s32.totalorder %s31, 0
      %p362 = por %p360, %p361
      %s364 = sadd.s32 %s363, 1
      %p367 = scmp.eq.s32.totalorder %s25, 1
      %p368 = scmp.ne.s32.totalorder %s363, %s365
      %p369 = scmp.eq.s32.totalorder %s25, 0
      %p370 = por %p368, %p369
      %p371 = scmp.ne.s32.totalorder %s363, %s365
      %p372 = scmp.eq.s32.totalorder %s30, 1
      %p373 = por %p371, %p372
      %p374 = scmp.ne.s32.totalorder %s365, %s366
      %p375 = scmp.eq.s32.totalorder %s30, 0
      %p376 = por %p374, %p375
      %p377 = scmp.ne.s32.totalorder %s365, %s366
      %p378 = scmp.eq.s32.totalorder %s31, 1
      %p379 = por %p377, %p378
      %p381 = scmp.ne.s32.totalorder %s366, %s380
      %p382 = scmp.eq.s32.totalorder %s31, 0
      %p383 = por %p381, %p382
      %s385 = sadd.s32 %s384, 1
      %p388 = scmp.eq.s32.totalorder %s25, 1
      %p389 = scmp.ne.s32.totalorder %s384, %s386
      %p390 = scmp.eq.s32.totalorder %s25, 0
      %p391 = por %p389, %p390
      %p392 = scmp.ne.s32.totalorder %s384, %s386
      %p393 = scmp.eq.s32.totalorder %s30, 1
      %p394 = por %p392, %p393
      %p395 = scmp.ne.s32.totalorder %s386, %s387
      %p396 = scmp.eq.s32.totalorder %s30, 0
      %p397 = por %p395, %p396
      %p398 = scmp.ne.s32.totalorder %s386, %s387
      %p399 = scmp.eq.s32.totalorder %s31, 1
      %p400 = por %p398, %p399
      %p402 = scmp.ne.s32.totalorder %s387, %s401
      %p403 = scmp.eq.s32.totalorder %s31, 0
      %p404 = por %p402, %p403
      %s405 = ssub.s32 %s25, %s32
      %p406 = scmp.eq.s32.totalorder %s405, 0
      %s408 = sadd.s32 %s407, 1
      %s409 = scalar_select %p406, %s407, %s408
      %p412 = pneg %p406
      %p413 = scmp.eq.s32.totalorder %s25, 1
      %p414 = por %p412, %p413
      %p415 = scmp.ne.s32.totalorder %s407, %s410
      %p416 = scmp.eq.s32.totalorder %s25, 0
      %p417 = por %p415, %p416
      %p418 = scmp.ne.s32.totalorder %s407, %s410
      %p419 = scmp.eq.s32.totalorder %s30, 1
      %p420 = por %p418, %p419
      %p421 = scmp.ne.s32.totalorder %s410, %s411
      %p422 = scmp.eq.s32.totalorder %s30, 0
      %p423 = por %p421, %p422
      %p424 = scmp.ne.s32.totalorder %s410, %s411
      %p425 = scmp.eq.s32.totalorder %s31, 1
      %p426 = por %p424, %p425
      %p428 = scmp.ne.s32.totalorder %s411, %s427
      %p429 = scmp.eq.s32.totalorder %s31, 0
      %p430 = por %p428, %p429
      %p431 = scmp.le.s32.totalorder 1, %s25
      %p432 = scmp.lt.s32.totalorder %s25, 3
      %p433 = pnand %p431, %p432
      %p434 = pneg %p433
      // Predicated region
      $region9: #{multitask_text_shared_forward.1} parent=5 // pred_check
        _
      $region10: #{multitask_text_shared_forward.1} parent=5 // pred_check_branch
        %436 = sbr.rel (%p433) target = $region12
      $region11: #{multitask_text_shared_forward.1} parent=5 // pred_region
        %s437 = ssub.s32 %s25, 1
        // Predicated region
        $region13: #{multitask_text_shared_forward.1} parent=11 // pred_check
          %p438 = pneg %p124
        $region14: #{multitask_text_shared_forward.1} parent=11 // pred_check_branch
          %440 = sbr.rel (%p438) target = $region16
        $region15: #{multitask_text_shared_forward.1} parent=11 // pred_region
          %442 = vsyncadd [#allocation4], 0
          %s443 = sshll.u32 %s3, 4
          %s444 = int_to_ptr.hbm [resolvable:$true] %s443
          %s445 = sshll.u32 [#allocation3], 4
          %s446 = int_to_ptr.vmem [resolvable:$true] %s445
          %451 = dma.hbm_to_vmem [thread:$0]  %s444, 1664, %s446, [#allocation4], 128, 128, 8
        $region16: #{multitask_text_shared_forward.1} parent=11 // pred_fallthru
          _
        // Predicated region
        $region17: #{multitask_text_shared_forward.1} parent=11 // pred_check
          %p452 = pneg %p145
        $region18: #{multitask_text_shared_forward.1} parent=11 // pred_check_branch
          %454 = sbr.rel (%p452) target = $region20
        $region19: #{multitask_text_shared_forward.1} parent=11 // pred_region
          _
        $region20: #{multitask_text_shared_forward.1} parent=11 // pred_fallthru
          _
        // Predicated region
        $region21: #{multitask_text_shared_forward.1} parent=11 // pred_check
          %p455 = pneg %p166
        $region22: #{multitask_text_shared_forward.1} parent=11 // pred_check_branch
          %457 = sbr.rel (%p455) target = $region24
        $region23: #{multitask_text_shared_forward.1} parent=11 // pred_region
          _
        $region24: #{multitask_text_shared_forward.1} parent=11 // pred_fallthru
          _
        // Predicated region
        $region25: #{multitask_text_shared_forward.1} parent=11 // pred_check
          %p458 = pneg %p187
        $region26: #{multitask_text_shared_forward.1} parent=11 // pred_check_branch
          %460 = sbr.rel (%p458) target = $region28
        $region27: #{multitask_text_shared_forward.1} parent=11 // pred_region
          _
        $region28: #{multitask_text_shared_forward.1} parent=11 // pred_fallthru
          _
        // Predicated region
        $region29: #{multitask_text_shared_forward.1} parent=11 // pred_check
          %p461 = pneg %p208
        $region30: #{multitask_text_shared_forward.1} parent=11 // pred_check_branch
          %463 = sbr.rel (%p461) target = $region32
        $region31: #{multitask_text_shared_forward.1} parent=11 // pred_region
          _
        $region32: #{multitask_text_shared_forward.1} parent=11 // pred_fallthru
          _
        // Predicated region
        $region33: #{multitask_text_shared_forward.1} parent=11 // pred_check
          %p464 = pneg %p229
        $region34: #{multitask_text_shared_forward.1} parent=11 // pred_check_branch
          %466 = sbr.rel (%p464) target = $region36
        $region35: #{multitask_text_shared_forward.1} parent=11 // pred_region
          _
        $region36: #{multitask_text_shared_forward.1} parent=11 // pred_fallthru
          _
        // Predicated region
        $region37: #{multitask_text_shared_forward.1} parent=11 // pred_check
          %p467 = pneg %p250
        $region38: #{multitask_text_shared_forward.1} parent=11 // pred_check_branch
          %469 = sbr.rel (%p467) target = $region40
        $region39: #{multitask_text_shared_forward.1} parent=11 // pred_region
          _
        $region40: #{multitask_text_shared_forward.1} parent=11 // pred_fallthru
          _
        // Predicated region
        $region41: #{multitask_text_shared_forward.1} parent=11 // pred_check
          %p470 = pneg %p271
        $region42: #{multitask_text_shared_forward.1} parent=11 // pred_check_branch
          %472 = sbr.rel (%p470) target = $region44
        $region43: #{multitask_text_shared_forward.1} parent=11 // pred_region
          %474 = vsyncadd [#allocation6], 0
          %s475 = sshll.u32 %s10, 4
          %s476 = int_to_ptr.hbm [resolvable:$true] %s475
          %s477 = sshll.u32 [#allocation5], 4
          %s478 = int_to_ptr.vmem [resolvable:$true] %s477
          %483 = dma.hbm_to_vmem [thread:$0]  %s476, 8192, %s478, [#allocation6], 256, 256, 16
        $region44: #{multitask_text_shared_forward.1} parent=11 // pred_fallthru
          _
        // Predicated region
        $region45: #{multitask_text_shared_forward.1} parent=11 // pred_check
          %p484 = pneg %p292
        $region46: #{multitask_text_shared_forward.1} parent=11 // pred_check_branch
          %486 = sbr.rel (%p484) target = $region48
        $region47: #{multitask_text_shared_forward.1} parent=11 // pred_region
          _
        $region48: #{multitask_text_shared_forward.1} parent=11 // pred_fallthru
          _
        // Predicated region
        $region49: #{multitask_text_shared_forward.1} parent=11 // pred_check
          %p487 = pneg %p313
        $region50: #{multitask_text_shared_forward.1} parent=11 // pred_check_branch
          %489 = sbr.rel (%p487) target = $region52
        $region51: #{multitask_text_shared_forward.1} parent=11 // pred_region
          _
        $region52: #{multitask_text_shared_forward.1} parent=11 // pred_fallthru
          _
        // Predicated region
        $region53: #{multitask_text_shared_forward.1} parent=11 // pred_check
          %p490 = pneg %p334
        $region54: #{multitask_text_shared_forward.1} parent=11 // pred_check_branch
          %492 = sbr.rel (%p490) target = $region56
        $region55: #{multitask_text_shared_forward.1} parent=11 // pred_region
          %494 = vsyncadd [#allocation6], 0
          %s495 = sshll.u32 %s13, 4
          %s496 = int_to_ptr.hbm [resolvable:$true] %s495
          %s497 = sshll.u32 [#allocation7], 4
          %s498 = int_to_ptr.vmem [resolvable:$true] %s497
          %503 = dma.hbm_to_vmem [thread:$0]  %s496, 1536, %s498, [#allocation6], 384, 384, 24
        $region56: #{multitask_text_shared_forward.1} parent=11 // pred_fallthru
          _
        // Predicated region
        $region57: #{multitask_text_shared_forward.1} parent=11 // pred_check
          %p504 = pneg %p355
        $region58: #{multitask_text_shared_forward.1} parent=11 // pred_check_branch
          %506 = sbr.rel (%p504) target = $region60
        $region59: #{multitask_text_shared_forward.1} parent=11 // pred_region
          _
        $region60: #{multitask_text_shared_forward.1} parent=11 // pred_fallthru
          _
        // Predicated region
        $region61: #{multitask_text_shared_forward.1} parent=11 // pred_check
          %p507 = pneg %p376
        $region62: #{multitask_text_shared_forward.1} parent=11 // pred_check_branch
          %509 = sbr.rel (%p507) target = $region64
        $region63: #{multitask_text_shared_forward.1} parent=11 // pred_region
          _
        $region64: #{multitask_text_shared_forward.1} parent=11 // pred_fallthru
          _
        // Predicated region
        $region65: #{multitask_text_shared_forward.1} parent=11 // pred_check
          %p510 = pneg %p397
        $region66: #{multitask_text_shared_forward.1} parent=11 // pred_check_branch
          %512 = sbr.rel (%p510) target = $region68
        $region67: #{multitask_text_shared_forward.1} parent=11 // pred_region
          _
        $region68: #{multitask_text_shared_forward.1} parent=11 // pred_fallthru
          _
      $region12: #{multitask_text_shared_forward.1} parent=5 // pred_fallthru
        _
      %p513 = scmp.lt.s32.totalorder %s25, 2
      // Predicated region
      $region69: #{multitask_text_shared_forward.1} parent=5 // pred_check
        %p514 = pneg %p513
      $region70: #{multitask_text_shared_forward.1} parent=5 // pred_check_branch
        %516 = sbr.rel (%p514) target = $region72
      $region71: #{multitask_text_shared_forward.1} parent=5 // pred_region
        // Predicated region
        $region73: #{multitask_text_shared_forward.1} parent=71 // pred_check
          %p517 = pneg %p45
        $region74: #{multitask_text_shared_forward.1} parent=71 // pred_check_branch
          %519 = sbr.rel (%p517) target = $region76
        $region75: #{multitask_text_shared_forward.1} parent=71 // pred_region
          %s520 = smul.u32 48, %s25
          %p521 = scmp.lt.s32.totalorder %s520, 95
          %s522 = scalar_select %p521, %s520, 95
          %s523 = smul.addr %s522, 8
          %s524 = scalar_lea.vmem %s0, %s523
          %s525 = smul.u32 48, %s25
        $region76: #{multitask_text_shared_forward.1} parent=71 // pred_fallthru
          _
        // Predicated region
        $region77: #{multitask_text_shared_forward.1} parent=71 // pred_check
          %p526 = pneg %p71
        $region78: #{multitask_text_shared_forward.1} parent=71 // pred_check_branch
          %528 = sbr.rel (%p526) target = $region80
        $region79: #{multitask_text_shared_forward.1} parent=71 // pred_region
          %s529 = smul.u32 4, %s25
          %p530 = scmp.lt.s32.totalorder %s529, 7
          %s531 = scalar_select %p530, %s529, 7
          %s532 = smul.addr %s531, 8
          %s533 = scalar_lea.vmem %s1, %s532
          %s534 = smul.u32 4, %s25
        $region80: #{multitask_text_shared_forward.1} parent=71 // pred_fallthru
          _
        // Predicated region
        $region81: #{multitask_text_shared_forward.1} parent=71 // pred_check
          %p535 = pneg %p97
        $region82: #{multitask_text_shared_forward.1} parent=71 // pred_check_branch
          %537 = sbr.rel (%p535) target = $region84
        $region83: #{multitask_text_shared_forward.1} parent=71 // pred_region
          %s538 = sand.u32 %s87, 1
          %s539 = sand.u32 %s87, 1
          %s540 = smul.addr %s539, 320
          %s541 = scalar_lea.vmem [#allocation2], %s540
          %s542 = smul.u32 4, %s25
          %s543 = smul.addr %s542, 8
          %s544 = scalar_lea.vmem %s2, %s543
          // Predicated region
          $region85: #{multitask_text_shared_forward.1} parent=83 // pred_check
            _
          $region86: #{multitask_text_shared_forward.1} parent=83 // pred_check_branch
            %546 = sbr.rel (0) target = $region88
          $region87: #{multitask_text_shared_forward.1} parent=83 // pred_region
            // Predicated region
            $region89: #{multitask_text_shared_forward.1} parent=87 // pred_check
              _
            $region90: #{multitask_text_shared_forward.1} parent=87 // pred_check_branch
              %548 = sbr.rel (0) target = $region92
            $region91: #{multitask_text_shared_forward.1} parent=87 // pred_region
              // Predicated region
              $region104: #{multitask_text_shared_forward.1} parent=91 // pred_check
                _
              $region105: #{multitask_text_shared_forward.1} parent=91 // pred_check_branch
                %642 = sbr.rel (0) target = $region107
              $region106: #{multitask_text_shared_forward.1} parent=91 // pred_region
                loop: start=0, step=1, limit=1
                $region108: #{multitask_text_shared_forward.1} parent=106 // loop_pre_header
                  _
                $region109: #{multitask_text_shared_forward.1} parent=106 // loop_header
                  %s644 = sphi 0, %s648
                  %p645 = scmp.ge.s32.totalorder %s644, 1
                  %s649 = sphi %s544, %s544
                  %s650 = sphi %s541, %s541
                $region110: #{multitask_text_shared_forward.1} parent=106 // loop_header_branch
                  %647 = sbr.rel (%p645) target = $region114
                $region111: #{multitask_text_shared_forward.1} parent=106 // loop_body
                  %v651 = vld [vmem:[%s649] sm:$0xff]
                  %652 = vst [vmem:[%s650] sm:$0xff] %v651
                  %v653 = vld [vmem:[%s649 + $0x8] sm:$0xff]
                  %654 = vst [vmem:[%s650 + $0x8] sm:$0xff] %v653
                  %v655 = vld [vmem:[%s649 + $0x10] sm:$0xff]
                  %656 = vst [vmem:[%s650 + $0x10] sm:$0xff] %v655
                  %v657 = vld [vmem:[%s649 + $0x18] sm:$0xff]
                  %658 = vst [vmem:[%s650 + $0x18] sm:$0xff] %v657
                  %v659 = vld [vmem:[%s649 + $0x40] sm:$0xff]
                  %660 = vst [vmem:[%s650 + $0x20] sm:$0xff] %v659
                  %v661 = vld [vmem:[%s649 + $0x48] sm:$0xff]
                  %662 = vst [vmem:[%s650 + $0x28] sm:$0xff] %v661
                  %v663 = vld [vmem:[%s649 + $0x50] sm:$0xff]
                  %664 = vst [vmem:[%s650 + $0x30] sm:$0xff] %v663
                  %v665 = vld [vmem:[%s649 + $0x58] sm:$0xff]
                  %666 = vst [vmem:[%s650 + $0x38] sm:$0xff] %v665
                  %v667 = vld [vmem:[%s649 + $0x80] sm:$0xff]
                  %668 = vst [vmem:[%s650 + $0x40] sm:$0xff] %v667
                  %v669 = vld [vmem:[%s649 + $0x88] sm:$0xff]
                  %670 = vst [vmem:[%s650 + $0x48] sm:$0xff] %v669
                  %v671 = vld [vmem:[%s649 + $0x90] sm:$0xff]
                  %672 = vst [vmem:[%s650 + $0x50] sm:$0xff] %v671
                  %v673 = vld [vmem:[%s649 + $0x98] sm:$0xff]
                  %674 = vst [vmem:[%s650 + $0x58] sm:$0xff] %v673
                  %v675 = vld [vmem:[%s649 + $0xc0] sm:$0xff]
                  %676 = vst [vmem:[%s650 + $0x60] sm:$0xff] %v675
                  %v677 = vld [vmem:[%s649 + $0xc8] sm:$0xff]
                  %678 = vst [vmem:[%s650 + $0x68] sm:$0xff] %v677
                  %v679 = vld [vmem:[%s649 + $0xd0] sm:$0xff]
                  %680 = vst [vmem:[%s650 + $0x70] sm:$0xff] %v679
                  %v681 = vld [vmem:[%s649 + $0xd8] sm:$0xff]
                  %682 = vst [vmem:[%s650 + $0x78] sm:$0xff] %v681
                  %v683 = vld [vmem:[%s649 + $0x100] sm:$0xff]
                  %684 = vst [vmem:[%s650 + $0x80] sm:$0xff] %v683
                  %v685 = vld [vmem:[%s649 + $0x108] sm:$0xff]
                  %686 = vst [vmem:[%s650 + $0x88] sm:$0xff] %v685
                  %v687 = vld [vmem:[%s649 + $0x110] sm:$0xff]
                  %688 = vst [vmem:[%s650 + $0x90] sm:$0xff] %v687
                  %v689 = vld [vmem:[%s649 + $0x118] sm:$0xff]
                  %690 = vst [vmem:[%s650 + $0x98] sm:$0xff] %v689
                  %v691 = vld [vmem:[%s649 + $0x140] sm:$0xff]
                  %692 = vst [vmem:[%s650 + $0xa0] sm:$0xff] %v691
                  %v693 = vld [vmem:[%s649 + $0x148] sm:$0xff]
                  %694 = vst [vmem:[%s650 + $0xa8] sm:$0xff] %v693
                  %v695 = vld [vmem:[%s649 + $0x150] sm:$0xff]
                  %696 = vst [vmem:[%s650 + $0xb0] sm:$0xff] %v695
                  %v697 = vld [vmem:[%s649 + $0x158] sm:$0xff]
                  %698 = vst [vmem:[%s650 + $0xb8] sm:$0xff] %v697
                  %v699 = vld [vmem:[%s649 + $0x180] sm:$0xff]
                  %700 = vst [vmem:[%s650 + $0xc0] sm:$0xff] %v699
                  %v701 = vld [vmem:[%s649 + $0x188] sm:$0xff]
                  %702 = vst [vmem:[%s650 + $0xc8] sm:$0xff] %v701
                  %v703 = vld [vmem:[%s649 + $0x190] sm:$0xff]
                  %704 = vst [vmem:[%s650 + $0xd0] sm:$0xff] %v703
                  %v705 = vld [vmem:[%s649 + $0x198] sm:$0xff]
                  %706 = vst [vmem:[%s650 + $0xd8] sm:$0xff] %v705
                  %v707 = vld [vmem:[%s649 + $0x1c0] sm:$0xff]
                  %708 = vst [vmem:[%s650 + $0xe0] sm:$0xff] %v707
                  %v709 = vld [vmem:[%s649 + $0x1c8] sm:$0xff]
                  %710 = vst [vmem:[%s650 + $0xe8] sm:$0xff] %v709
                  %v711 = vld [vmem:[%s649 + $0x1d0] sm:$0xff]
                  %712 = vst [vmem:[%s650 + $0xf0] sm:$0xff] %v711
                  %v713 = vld [vmem:[%s649 + $0x1d8] sm:$0xff]
                  %714 = vst [vmem:[%s650 + $0xf8] sm:$0xff] %v713
                  %v715 = vld [vmem:[%s649 + $0x200] sm:$0xff]
                  %716 = vst [vmem:[%s650 + $0x100] sm:$0xff] %v715
                  %v717 = vld [vmem:[%s649 + $0x208] sm:$0xff]
                  %718 = vst [vmem:[%s650 + $0x108] sm:$0xff] %v717
                  %v719 = vld [vmem:[%s649 + $0x210] sm:$0xff]
                  %720 = vst [vmem:[%s650 + $0x110] sm:$0xff] %v719
                  %v721 = vld [vmem:[%s649 + $0x218] sm:$0xff]
                  %722 = vst [vmem:[%s650 + $0x118] sm:$0xff] %v721
                  %v723 = vld [vmem:[%s649 + $0x240] sm:$0xff]
                  %724 = vst [vmem:[%s650 + $0x120] sm:$0xff] %v723
                  %v725 = vld [vmem:[%s649 + $0x248] sm:$0xff]
                  %726 = vst [vmem:[%s650 + $0x128] sm:$0xff] %v725
                  %v727 = vld [vmem:[%s649 + $0x250] sm:$0xff]
                  %728 = vst [vmem:[%s650 + $0x130] sm:$0xff] %v727
                  %v729 = vld [vmem:[%s649 + $0x258] sm:$0xff]
                  %730 = vst [vmem:[%s650 + $0x138] sm:$0xff] %v729
                $region112: #{multitask_text_shared_forward.1} parent=106 // loop_footer
                  %s648 = sadd.s32 1, %s644
                $region113: #{multitask_text_shared_forward.1} parent=106 // loop_footer_branch
                  %643 = sbr.rel target = $region109
                $region114: #{multitask_text_shared_forward.1} parent=106 // loop_exit
                  _
              $region107: #{multitask_text_shared_forward.1} parent=91 // pred_fallthru
                _
              // Predicated region
              $region115: #{multitask_text_shared_forward.1} parent=91 // pred_check
                _
              $region116: #{multitask_text_shared_forward.1} parent=91 // pred_check_branch
                %732 = sbr.rel target = $region118
              $region117: #{multitask_text_shared_forward.1} parent=91 // pred_region
                _
              $region118: #{multitask_text_shared_forward.1} parent=91 // pred_fallthru
                _
            $region92: #{multitask_text_shared_forward.1} parent=87 // pred_fallthru
              _
            // Predicated region
            $region93: #{multitask_text_shared_forward.1} parent=87 // pred_check
              _
            $region94: #{multitask_text_shared_forward.1} parent=87 // pred_check_branch
              %550 = sbr.rel target = $region96
            $region95: #{multitask_text_shared_forward.1} parent=87 // pred_region
              %s552 = ssub.s32 256, 1
              loop: start=0, step=1, limit=1
              $region97: #{multitask_text_shared_forward.1} parent=95 // loop_pre_header
                _
              $region98: #{multitask_text_shared_forward.1} parent=95 // loop_header
                %s554 = sphi 0, %s558
                %p555 = scmp.ge.s32.totalorder %s554, 1
                %s559 = sphi %s544, %s544
                %s560 = sphi %s541, %s541
              $region99: #{multitask_text_shared_forward.1} parent=95 // loop_header_branch
                %557 = sbr.rel (%p555) target = $region103
              $region100: #{multitask_text_shared_forward.1} parent=95 // loop_body
                %v561 = vld [vmem:[%s559] sm:%s552]
                %562 = vst [vmem:[%s560] sm:%s552] %v561
                %v563 = vld [vmem:[%s559 + $0x8] sm:%s552]
                %564 = vst [vmem:[%s560 + $0x8] sm:%s552] %v563
                %v565 = vld [vmem:[%s559 + $0x10] sm:%s552]
                %566 = vst [vmem:[%s560 + $0x10] sm:%s552] %v565
                %v567 = vld [vmem:[%s559 + $0x18] sm:%s552]
                %568 = vst [vmem:[%s560 + $0x18] sm:%s552] %v567
                %v569 = vld [vmem:[%s559 + $0x40] sm:%s552]
                %570 = vst [vmem:[%s560 + $0x20] sm:%s552] %v569
                %v571 = vld [vmem:[%s559 + $0x48] sm:%s552]
                %572 = vst [vmem:[%s560 + $0x28] sm:%s552] %v571
                %v573 = vld [vmem:[%s559 + $0x50] sm:%s552]
                %574 = vst [vmem:[%s560 + $0x30] sm:%s552] %v573
                %v575 = vld [vmem:[%s559 + $0x58] sm:%s552]
                %576 = vst [vmem:[%s560 + $0x38] sm:%s552] %v575
                %v577 = vld [vmem:[%s559 + $0x80] sm:%s552]
                %578 = vst [vmem:[%s560 + $0x40] sm:%s552] %v577
                %v579 = vld [vmem:[%s559 + $0x88] sm:%s552]
                %580 = vst [vmem:[%s560 + $0x48] sm:%s552] %v579
                %v581 = vld [vmem:[%s559 + $0x90] sm:%s552]
                %582 = vst [vmem:[%s560 + $0x50] sm:%s552] %v581
                %v583 = vld [vmem:[%s559 + $0x98] sm:%s552]
                %584 = vst [vmem:[%s560 + $0x58] sm:%s552] %v583
                %v585 = vld [vmem:[%s559 + $0xc0] sm:%s552]
                %586 = vst [vmem:[%s560 + $0x60] sm:%s552] %v585
                %v587 = vld [vmem:[%s559 + $0xc8] sm:%s552]
                %588 = vst [vmem:[%s560 + $0x68] sm:%s552] %v587
                %v589 = vld [vmem:[%s559 + $0xd0] sm:%s552]
                %590 = vst [vmem:[%s560 + $0x70] sm:%s552] %v589
                %v591 = vld [vmem:[%s559 + $0xd8] sm:%s552]
                %592 = vst [vmem:[%s560 + $0x78] sm:%s552] %v591
                %v593 = vld [vmem:[%s559 + $0x100] sm:%s552]
                %594 = vst [vmem:[%s560 + $0x80] sm:%s552] %v593
                %v595 = vld [vmem:[%s559 + $0x108] sm:%s552]
                %596 = vst [vmem:[%s560 + $0x88] sm:%s552] %v595
                %v597 = vld [vmem:[%s559 + $0x110] sm:%s552]
                %598 = vst [vmem:[%s560 + $0x90] sm:%s552] %v597
                %v599 = vld [vmem:[%s559 + $0x118] sm:%s552]
                %600 = vst [vmem:[%s560 + $0x98] sm:%s552] %v599
                %v601 = vld [vmem:[%s559 + $0x140] sm:%s552]
                %602 = vst [vmem:[%s560 + $0xa0] sm:%s552] %v601
                %v603 = vld [vmem:[%s559 + $0x148] sm:%s552]
                %604 = vst [vmem:[%s560 + $0xa8] sm:%s552] %v603
                %v605 = vld [vmem:[%s559 + $0x150] sm:%s552]
                %606 = vst [vmem:[%s560 + $0xb0] sm:%s552] %v605
                %v607 = vld [vmem:[%s559 + $0x158] sm:%s552]
                %608 = vst [vmem:[%s560 + $0xb8] sm:%s552] %v607
                %v609 = vld [vmem:[%s559 + $0x180] sm:%s552]
                %610 = vst [vmem:[%s560 + $0xc0] sm:%s552] %v609
                %v611 = vld [vmem:[%s559 + $0x188] sm:%s552]
                %612 = vst [vmem:[%s560 + $0xc8] sm:%s552] %v611
                %v613 = vld [vmem:[%s559 + $0x190] sm:%s552]
                %614 = vst [vmem:[%s560 + $0xd0] sm:%s552] %v613
                %v615 = vld [vmem:[%s559 + $0x198] sm:%s552]
                %616 = vst [vmem:[%s560 + $0xd8] sm:%s552] %v615
                %v617 = vld [vmem:[%s559 + $0x1c0] sm:%s552]
                %618 = vst [vmem:[%s560 + $0xe0] sm:%s552] %v617
                %v619 = vld [vmem:[%s559 + $0x1c8] sm:%s552]
                %620 = vst [vmem:[%s560 + $0xe8] sm:%s552] %v619
                %v621 = vld [vmem:[%s559 + $0x1d0] sm:%s552]
                %622 = vst [vmem:[%s560 + $0xf0] sm:%s552] %v621
                %v623 = vld [vmem:[%s559 + $0x1d8] sm:%s552]
                %624 = vst [vmem:[%s560 + $0xf8] sm:%s552] %v623
                %v625 = vld [vmem:[%s559 + $0x200] sm:%s552]
                %626 = vst [vmem:[%s560 + $0x100] sm:%s552] %v625
                %v627 = vld [vmem:[%s559 + $0x208] sm:%s552]
                %628 = vst [vmem:[%s560 + $0x108] sm:%s552] %v627
                %v629 = vld [vmem:[%s559 + $0x210] sm:%s552]
                %630 = vst [vmem:[%s560 + $0x110] sm:%s552] %v629
                %v631 = vld [vmem:[%s559 + $0x218] sm:%s552]
                %632 = vst [vmem:[%s560 + $0x118] sm:%s552] %v631
                %v633 = vld [vmem:[%s559 + $0x240] sm:%s552]
                %634 = vst [vmem:[%s560 + $0x120] sm:%s552] %v633
                %v635 = vld [vmem:[%s559 + $0x248] sm:%s552]
                %636 = vst [vmem:[%s560 + $0x128] sm:%s552] %v635
                %v637 = vld [vmem:[%s559 + $0x250] sm:%s552]
                %638 = vst [vmem:[%s560 + $0x130] sm:%s552] %v637
                %v639 = vld [vmem:[%s559 + $0x258] sm:%s552]
                %640 = vst [vmem:[%s560 + $0x138] sm:%s552] %v639
              $region101: #{multitask_text_shared_forward.1} parent=95 // loop_footer
                %s558 = sadd.s32 1, %s554
              $region102: #{multitask_text_shared_forward.1} parent=95 // loop_footer_branch
                %553 = sbr.rel target = $region98
              $region103: #{multitask_text_shared_forward.1} parent=95 // loop_exit
                _
            $region96: #{multitask_text_shared_forward.1} parent=87 // pred_fallthru
              _
          $region88: #{multitask_text_shared_forward.1} parent=83 // pred_fallthru
            _
          %733 = vnop
        $region84: #{multitask_text_shared_forward.1} parent=71 // pred_fallthru
          _
      $region72: #{multitask_text_shared_forward.1} parent=5 // pred_fallthru
        _
      %p734 = scmp.le.s32.totalorder 1, %s25
      %p735 = scmp.lt.s32.totalorder %s25, 3
      %p736 = pnand %p734, %p735
      %p737 = pneg %p736
      // Predicated region
      $region119: #{multitask_text_shared_forward.1} parent=5 // pred_check
        _
      $region120: #{multitask_text_shared_forward.1} parent=5 // pred_check_branch
        %739 = sbr.rel (%p736) target = $region122
      $region121: #{multitask_text_shared_forward.1} parent=5 // pred_region
        %s740 = ssub.s32 %s25, 1
        %s741 = sand.u32 %s90, 1
        %s742 = sand.u32 %s90, 1
        %s743 = smul.addr %s742, 320
        %s744 = scalar_lea.vmem [#allocation2], %s743
        // Predicated region
        $region123: #{multitask_text_shared_forward.1} parent=121 // pred_check
          %p745 = pneg %p103
        $region124: #{multitask_text_shared_forward.1} parent=121 // pred_check_branch
          %747 = sbr.rel (%p745) target = $region126
        $region125: #{multitask_text_shared_forward.1} parent=121 // pred_region
          _
        $region126: #{multitask_text_shared_forward.1} parent=121 // pred_fallthru
          _
        // Predicated region
        $region127: #{multitask_text_shared_forward.1} parent=121 // pred_check
          %p748 = pneg %p124
        $region128: #{multitask_text_shared_forward.1} parent=121 // pred_check_branch
          %750 = sbr.rel (%p748) target = $region130
        $region129: #{multitask_text_shared_forward.1} parent=121 // pred_region
          %752 = dma.done [#allocation4], 1664
        $region130: #{multitask_text_shared_forward.1} parent=121 // pred_fallthru
          _
        // Predicated region
        $region131: #{multitask_text_shared_forward.1} parent=121 // pred_check
          %p753 = pneg %p271
        $region132: #{multitask_text_shared_forward.1} parent=121 // pred_check_branch
          %755 = sbr.rel (%p753) target = $region134
        $region133: #{multitask_text_shared_forward.1} parent=121 // pred_region
          %757 = dma.done [#allocation6], 8192
        $region134: #{multitask_text_shared_forward.1} parent=121 // pred_fallthru
          _
        // Predicated region
        $region135: #{multitask_text_shared_forward.1} parent=121 // pred_check
          %p758 = pneg %p334
        $region136: #{multitask_text_shared_forward.1} parent=121 // pred_check_branch
          %760 = sbr.rel (%p758) target = $region138
        $region137: #{multitask_text_shared_forward.1} parent=121 // pred_region
          %762 = dma.done [#allocation6], 1536
        $region138: #{multitask_text_shared_forward.1} parent=121 // pred_fallthru
          _
        %s763 = smul.u32 48, %s30
        %p764 = scmp.lt.s32.totalorder %s763, 95
        %s765 = scalar_select %p764, %s763, 95
        %s766 = smul.addr %s765, 8
        %s767 = scalar_lea.vmem %s0, %s766
        %p768 = pneg %p51
        %p769 = pneg %p48
        %s770 = smul.u32 4, %s30
        %p771 = scmp.lt.s32.totalorder %s770, 7
        %s772 = scalar_select %p771, %s770, 7
        %s773 = smul.addr %s772, 8
        %s774 = scalar_lea.vmem %s1, %s773
        %p775 = pneg %p77
        %p776 = pneg %p74
        %s777 = sand.u32 %s90, 1
        %s778 = sand.u32 %s90, 1
        %s779 = smul.addr %s778, 320
        %s780 = scalar_lea.vmem [#allocation2], %s779
        %p781 = pneg %p103
        %p782 = pneg %p100
        %p783 = pneg %p124
        %p784 = pneg %p121
        %p785 = pneg %p145
        %p786 = pneg %p142
        %p787 = pneg %p166
        %p788 = pneg %p163
        %p789 = pneg %p187
        %p790 = pneg %p184
        %p791 = pneg %p208
        %p792 = pneg %p205
        %p793 = pneg %p229
        %p794 = pneg %p226
        %p795 = pneg %p250
        %p796 = pneg %p247
        %p797 = pneg %p271
        %p798 = pneg %p268
        %p799 = pneg %p292
        %p800 = pneg %p289
        %p801 = pneg %p313
        %p802 = pneg %p310
        %p803 = pneg %p334
        %p804 = pneg %p331
        %p805 = pneg %p355
        %p806 = pneg %p352
        %p807 = pneg %p376
        %p808 = pneg %p373
        %p809 = pneg %p397
        %p810 = pneg %p394
        %p811 = pneg %p423
        %p812 = pneg %p420
        %s813 = smul.u32 4, %s30
        %p814 = scmp.lt.s32.totalorder %s813, 7
        %s815 = scalar_select %p814, %s813, 7
        %s816 = smul.addr %s815, 2
        %s817 = smul.addr %s816, 8
        %s818 = scalar_lea.vmem %s17, %s817
        %s819 = smul.u32 48, %s30
        %p820 = scmp.lt.s32.totalorder %s819, 95
        %s821 = scalar_select %p820, %s819, 95
        %s822 = smul.addr %s821, 8
        %s823 = scalar_lea.vmem %s0, %s822
        %s824 = smul.u32 48, %s30
        %s825 = smul.u32 4, %s30
        %p826 = scmp.lt.s32.totalorder %s825, 7
        %s827 = scalar_select %p826, %s825, 7
        %s828 = smul.addr %s827, 8
        %s829 = scalar_lea.vmem %s1, %s828
        %s830 = smul.u32 4, %s30
        %s831 = smul.u32 4, %s30
        %s832 = smul.u32 4, %s30
        %p833 = scmp.lt.s32.totalorder %s832, 7
        %s834 = scalar_select %p833, %s832, 7
        %s835 = smul.addr %s834, 2
        %s836 = smul.addr %s835, 8
        %s837 = scalar_lea.vmem %s17, %s836
        %s838 = smul.u32 4, %s30
        %v839 = vld [vmem:[%s823] sm:$0xff]
        %v840 = vld [vmem:[%s823 + $0x8] sm:$0xff]
        %v841 = vld [vmem:[%s823 + $0x10] sm:$0xff]
        %v842 = vld [vmem:[%s823 + $0x18] sm:$0xff]
        %v843 = vld [vmem:[%s823 + $0x20] sm:$0xff]
        %v844 = vld [vmem:[%s823 + $0x28] sm:$0xff]
        %v845 = vld [vmem:[%s823 + $0x30] sm:$0xff]
        %v846 = vld [vmem:[%s823 + $0x38] sm:$0xff]
        %v847 = vld [vmem:[%s823 + $0x40] sm:$0xff]
        %v848 = vld [vmem:[%s823 + $0x48] sm:$0xff]
        %v849 = vld [vmem:[%s823 + $0x50] sm:$0xff]
        %v850 = vld [vmem:[%s823 + $0x58] sm:$0xff]
        %v851 = vld [vmem:[%s823 + $0x60] sm:$0xff]
        %v852 = vld [vmem:[%s823 + $0x68] sm:$0xff]
        %v853 = vld [vmem:[%s823 + $0x70] sm:$0xff]
        %v854 = vld [vmem:[%s823 + $0x78] sm:$0xff]
        %v855 = vld [vmem:[%s823 + $0x80] sm:$0xff]
        %v856 = vld [vmem:[%s823 + $0x88] sm:$0xff]
        %v857 = vld [vmem:[%s823 + $0x90] sm:$0xff]
        %v858 = vld [vmem:[%s823 + $0x98] sm:$0xff]
        %v859 = vld [vmem:[%s823 + $0xa0] sm:$0xff]
        %v860 = vld [vmem:[%s823 + $0xa8] sm:$0xff]
        %v861 = vld [vmem:[%s823 + $0xb0] sm:$0xff]
        %v862 = vld [vmem:[%s823 + $0xb8] sm:$0xff]
        %v863 = vld [vmem:[%s823 + $0xc0] sm:$0xff]
        %v864 = vld [vmem:[%s823 + $0xc8] sm:$0xff]
        %v865 = vld [vmem:[%s823 + $0xd0] sm:$0xff]
        %v866 = vld [vmem:[%s823 + $0xd8] sm:$0xff]
        %v867 = vld [vmem:[%s823 + $0xe0] sm:$0xff]
        %v868 = vld [vmem:[%s823 + $0xe8] sm:$0xff]
        %v869 = vld [vmem:[%s823 + $0xf0] sm:$0xff]
        %v870 = vld [vmem:[%s823 + $0xf8] sm:$0xff]
        %v871 = vld [vmem:[%s823 + $0x100] sm:$0xff]
        %v872 = vld [vmem:[%s823 + $0x108] sm:$0xff]
        %v873 = vld [vmem:[%s823 + $0x110] sm:$0xff]
        %v874 = vld [vmem:[%s823 + $0x118] sm:$0xff]
        %v875 = vld [vmem:[%s823 + $0x120] sm:$0xff]
        %v876 = vld [vmem:[%s823 + $0x128] sm:$0xff]
        %v877 = vld [vmem:[%s823 + $0x130] sm:$0xff]
        %v878 = vld [vmem:[%s823 + $0x138] sm:$0xff]
        %v879 = vld [vmem:[%s823 + $0x140] sm:$0xff]
        %v880 = vld [vmem:[%s823 + $0x148] sm:$0xff]
        %v881 = vld [vmem:[%s823 + $0x150] sm:$0xff]
        %v882 = vld [vmem:[%s823 + $0x158] sm:$0xff]
        %v883 = vld [vmem:[%s823 + $0x160] sm:$0xff]
        %v884 = vld [vmem:[%s823 + $0x168] sm:$0xff]
        %v885 = vld [vmem:[%s823 + $0x170] sm:$0xff]
        %v886 = vld [vmem:[%s823 + $0x178] sm:$0xff]
        %v887 = vlaneseq
        %v888 = vand.u32 %v887, 127
        %889 = vset.pattern.permute.xlu0 0
        %890 = vperm.xlu0 %889, %v839
        %v891 = vpop.permute.xlu0 %890
        %892 = vset.pattern.permute.xlu0 0
        %893 = vperm.xlu0 %892, %v840
        %v894 = vpop.permute.xlu0 %893
        %895 = vset.pattern.permute.xlu0 0
        %896 = vperm.xlu0 %895, %v841
        %v897 = vpop.permute.xlu0 %896
        %898 = vset.pattern.permute.xlu0 0
        %899 = vperm.xlu0 %898, %v842
        %v900 = vpop.permute.xlu0 %899
        %901 = vset.pattern.permute.xlu0 0
        %902 = vperm.xlu0 %901, %v843
        %v903 = vpop.permute.xlu0 %902
        %904 = vset.pattern.permute.xlu0 0
        %905 = vperm.xlu0 %904, %v844
        %v906 = vpop.permute.xlu0 %905
        %907 = vset.pattern.permute.xlu0 0
        %908 = vperm.xlu0 %907, %v845
        %v909 = vpop.permute.xlu0 %908
        %910 = vset.pattern.permute.xlu0 0
        %911 = vperm.xlu0 %910, %v846
        %v912 = vpop.permute.xlu0 %911
        %913 = vset.pattern.permute.xlu0 0
        %914 = vperm.xlu0 %913, %v847
        %v915 = vpop.permute.xlu0 %914
        %916 = vset.pattern.permute.xlu0 0
        %917 = vperm.xlu0 %916, %v848
        %v918 = vpop.permute.xlu0 %917
        %919 = vset.pattern.permute.xlu0 0
        %920 = vperm.xlu0 %919, %v849
        %v921 = vpop.permute.xlu0 %920
        %922 = vset.pattern.permute.xlu0 0
        %923 = vperm.xlu0 %922, %v850
        %v924 = vpop.permute.xlu0 %923
        %925 = vset.pattern.permute.xlu0 0
        %926 = vperm.xlu0 %925, %v851
        %v927 = vpop.permute.xlu0 %926
        %928 = vset.pattern.permute.xlu0 0
        %929 = vperm.xlu0 %928, %v852
        %v930 = vpop.permute.xlu0 %929
        %931 = vset.pattern.permute.xlu0 0
        %932 = vperm.xlu0 %931, %v853
        %v933 = vpop.permute.xlu0 %932
        %934 = vset.pattern.permute.xlu0 0
        %935 = vperm.xlu0 %934, %v854
        %v936 = vpop.permute.xlu0 %935
        %937 = vset.pattern.permute.xlu0 0
        %938 = vperm.xlu0 %937, %v855
        %v939 = vpop.permute.xlu0 %938
        %940 = vset.pattern.permute.xlu0 0
        %941 = vperm.xlu0 %940, %v856
        %v942 = vpop.permute.xlu0 %941
        %943 = vset.pattern.permute.xlu0 0
        %944 = vperm.xlu0 %943, %v857
        %v945 = vpop.permute.xlu0 %944
        %946 = vset.pattern.permute.xlu0 0
        %947 = vperm.xlu0 %946, %v858
        %v948 = vpop.permute.xlu0 %947
        %949 = vset.pattern.permute.xlu0 0
        %950 = vperm.xlu0 %949, %v859
        %v951 = vpop.permute.xlu0 %950
        %952 = vset.pattern.permute.xlu0 0
        %953 = vperm.xlu0 %952, %v860
        %v954 = vpop.permute.xlu0 %953
        %955 = vset.pattern.permute.xlu0 0
        %956 = vperm.xlu0 %955, %v861
        %v957 = vpop.permute.xlu0 %956
        %958 = vset.pattern.permute.xlu0 0
        %959 = vperm.xlu0 %958, %v862
        %v960 = vpop.permute.xlu0 %959
        %961 = vset.pattern.permute.xlu0 0
        %962 = vperm.xlu0 %961, %v863
        %v963 = vpop.permute.xlu0 %962
        %964 = vset.pattern.permute.xlu0 0
        %965 = vperm.xlu0 %964, %v864
        %v966 = vpop.permute.xlu0 %965
        %967 = vset.pattern.permute.xlu0 0
        %968 = vperm.xlu0 %967, %v865
        %v969 = vpop.permute.xlu0 %968
        %970 = vset.pattern.permute.xlu0 0
        %971 = vperm.xlu0 %970, %v866
        %v972 = vpop.permute.xlu0 %971
        %973 = vset.pattern.permute.xlu0 0
        %974 = vperm.xlu0 %973, %v867
        %v975 = vpop.permute.xlu0 %974
        %976 = vset.pattern.permute.xlu0 0
        %977 = vperm.xlu0 %976, %v868
        %v978 = vpop.permute.xlu0 %977
        %979 = vset.pattern.permute.xlu0 0
        %980 = vperm.xlu0 %979, %v869
        %v981 = vpop.permute.xlu0 %980
        %982 = vset.pattern.permute.xlu0 0
        %983 = vperm.xlu0 %982, %v870
        %v984 = vpop.permute.xlu0 %983
        %985 = vset.pattern.permute.xlu0 0
        %986 = vperm.xlu0 %985, %v871
        %v987 = vpop.permute.xlu0 %986
        %988 = vset.pattern.permute.xlu0 0
        %989 = vperm.xlu0 %988, %v872
        %v990 = vpop.permute.xlu0 %989
        %991 = vset.pattern.permute.xlu0 0
        %992 = vperm.xlu0 %991, %v873
        %v993 = vpop.permute.xlu0 %992
        %994 = vset.pattern.permute.xlu0 0
        %995 = vperm.xlu0 %994, %v874
        %v996 = vpop.permute.xlu0 %995
        %997 = vset.pattern.permute.xlu0 0
        %998 = vperm.xlu0 %997, %v875
        %v999 = vpop.permute.xlu0 %998
        %1000 = vset.pattern.permute.xlu0 0
        %1001 = vperm.xlu0 %1000, %v876
        %v1002 = vpop.permute.xlu0 %1001
        %1003 = vset.pattern.permute.xlu0 0
        %1004 = vperm.xlu0 %1003, %v877
        %v1005 = vpop.permute.xlu0 %1004
        %1006 = vset.pattern.permute.xlu0 0
        %1007 = vperm.xlu0 %1006, %v878
        %v1008 = vpop.permute.xlu0 %1007
        %1009 = vset.pattern.permute.xlu0 0
        %1010 = vperm.xlu0 %1009, %v879
        %v1011 = vpop.permute.xlu0 %1010
        %1012 = vset.pattern.permute.xlu0 0
        %1013 = vperm.xlu0 %1012, %v880
        %v1014 = vpop.permute.xlu0 %1013
        %1015 = vset.pattern.permute.xlu0 0
        %1016 = vperm.xlu0 %1015, %v881
        %v1017 = vpop.permute.xlu0 %1016
        %1018 = vset.pattern.permute.xlu0 0
        %1019 = vperm.xlu0 %1018, %v882
        %v1020 = vpop.permute.xlu0 %1019
        %1021 = vset.pattern.permute.xlu0 0
        %1022 = vperm.xlu0 %1021, %v883
        %v1023 = vpop.permute.xlu0 %1022
        %1024 = vset.pattern.permute.xlu0 0
        %1025 = vperm.xlu0 %1024, %v884
        %v1026 = vpop.permute.xlu0 %1025
        %1027 = vset.pattern.permute.xlu0 0
        %1028 = vperm.xlu0 %1027, %v885
        %v1029 = vpop.permute.xlu0 %1028
        %1030 = vset.pattern.permute.xlu0 0
        %1031 = vperm.xlu0 %1030, %v886
        %v1032 = vpop.permute.xlu0 %1031
        %vm1033 = vcmp.eq.s32.totalorder %v891, %v888
        %vm1034 = vcmp.eq.s32.totalorder %v894, %v888
        %vm1035 = vcmp.eq.s32.totalorder %v897, %v888
        %vm1036 = vcmp.eq.s32.totalorder %v900, %v888
        %vm1037 = vcmp.eq.s32.totalorder %v903, %v888
        %vm1038 = vcmp.eq.s32.totalorder %v906, %v888
        %vm1039 = vcmp.eq.s32.totalorder %v909, %v888
        %vm1040 = vcmp.eq.s32.totalorder %v912, %v888
        %vm1041 = vcmp.eq.s32.totalorder %v915, %v888
        %vm1042 = vcmp.eq.s32.totalorder %v918, %v888
        %vm1043 = vcmp.eq.s32.totalorder %v921, %v888
        %vm1044 = vcmp.eq.s32.totalorder %v924, %v888
        %vm1045 = vcmp.eq.s32.totalorder %v927, %v888
        %vm1046 = vcmp.eq.s32.totalorder %v930, %v888
        %vm1047 = vcmp.eq.s32.totalorder %v933, %v888
        %vm1048 = vcmp.eq.s32.totalorder %v936, %v888
        %vm1049 = vcmp.eq.s32.totalorder %v939, %v888
        %vm1050 = vcmp.eq.s32.totalorder %v942, %v888
        %vm1051 = vcmp.eq.s32.totalorder %v945, %v888
        %vm1052 = vcmp.eq.s32.totalorder %v948, %v888
        %vm1053 = vcmp.eq.s32.totalorder %v951, %v888
        %vm1054 = vcmp.eq.s32.totalorder %v954, %v888
        %vm1055 = vcmp.eq.s32.totalorder %v957, %v888
        %vm1056 = vcmp.eq.s32.totalorder %v960, %v888
        %vm1057 = vcmp.eq.s32.totalorder %v963, %v888
        %vm1058 = vcmp.eq.s32.totalorder %v966, %v888
        %vm1059 = vcmp.eq.s32.totalorder %v969, %v888
        %vm1060 = vcmp.eq.s32.totalorder %v972, %v888
        %vm1061 = vcmp.eq.s32.totalorder %v975, %v888
        %vm1062 = vcmp.eq.s32.totalorder %v978, %v888
        %vm1063 = vcmp.eq.s32.totalorder %v981, %v888
        %vm1064 = vcmp.eq.s32.totalorder %v984, %v888
        %vm1065 = vcmp.eq.s32.totalorder %v987, %v888
        %vm1066 = vcmp.eq.s32.totalorder %v990, %v888
        %vm1067 = vcmp.eq.s32.totalorder %v993, %v888
        %vm1068 = vcmp.eq.s32.totalorder %v996, %v888
        %vm1069 = vcmp.eq.s32.totalorder %v999, %v888
        %vm1070 = vcmp.eq.s32.totalorder %v1002, %v888
        %vm1071 = vcmp.eq.s32.totalorder %v1005, %v888
        %vm1072 = vcmp.eq.s32.totalorder %v1008, %v888
        %vm1073 = vcmp.eq.s32.totalorder %v1011, %v888
        %vm1074 = vcmp.eq.s32.totalorder %v1014, %v888
        %vm1075 = vcmp.eq.s32.totalorder %v1017, %v888
        %vm1076 = vcmp.eq.s32.totalorder %v1020, %v888
        %vm1077 = vcmp.eq.s32.totalorder %v1023, %v888
        %vm1078 = vcmp.eq.s32.totalorder %v1026, %v888
        %vm1079 = vcmp.eq.s32.totalorder %v1029, %v888
        %vm1080 = vcmp.eq.s32.totalorder %v1032, %v888
        %v1081 = vsel %vm1033, 1, 0
        %v1082 = vsel %vm1034, 1, 0
        %v1083 = vsel %vm1035, 1, 0
        %v1084 = vsel %vm1036, 1, 0
        %v1085 = vsel %vm1037, 1, 0
        %v1086 = vsel %vm1038, 1, 0
        %v1087 = vsel %vm1039, 1, 0
        %v1088 = vsel %vm1040, 1, 0
        %v1089 = vsel %vm1041, 1, 0
        %v1090 = vsel %vm1042, 1, 0
        %v1091 = vsel %vm1043, 1, 0
        %v1092 = vsel %vm1044, 1, 0
        %v1093 = vsel %vm1045, 1, 0
        %v1094 = vsel %vm1046, 1, 0
        %v1095 = vsel %vm1047, 1, 0
        %v1096 = vsel %vm1048, 1, 0
        %v1097 = vsel %vm1049, 1, 0
        %v1098 = vsel %vm1050, 1, 0
        %v1099 = vsel %vm1051, 1, 0
        %v1100 = vsel %vm1052, 1, 0
        %v1101 = vsel %vm1053, 1, 0
        %v1102 = vsel %vm1054, 1, 0
        %v1103 = vsel %vm1055, 1, 0
        %v1104 = vsel %vm1056, 1, 0
        %v1105 = vsel %vm1057, 1, 0
        %v1106 = vsel %vm1058, 1, 0
        %v1107 = vsel %vm1059, 1, 0
        %v1108 = vsel %vm1060, 1, 0
        %v1109 = vsel %vm1061, 1, 0
        %v1110 = vsel %vm1062, 1, 0
        %v1111 = vsel %vm1063, 1, 0
        %v1112 = vsel %vm1064, 1, 0
        %v1113 = vsel %vm1065, 1, 0
        %v1114 = vsel %vm1066, 1, 0
        %v1115 = vsel %vm1067, 1, 0
        %v1116 = vsel %vm1068, 1, 0
        %v1117 = vsel %vm1069, 1, 0
        %v1118 = vsel %vm1070, 1, 0
        %v1119 = vsel %vm1071, 1, 0
        %v1120 = vsel %vm1072, 1, 0
        %v1121 = vsel %vm1073, 1, 0
        %v1122 = vsel %vm1074, 1, 0
        %v1123 = vsel %vm1075, 1, 0
        %v1124 = vsel %vm1076, 1, 0
        %v1125 = vsel %vm1077, 1, 0
        %v1126 = vsel %vm1078, 1, 0
        %v1127 = vsel %vm1079, 1, 0
        %v1128 = vsel %vm1080, 1, 0
        %v1129 = vcvt.s32.f32 %v1081
        %v1130 = vcvt.s32.f32 %v1082
        %v1131 = vcvt.s32.f32 %v1083
        %v1132 = vcvt.s32.f32 %v1084
        %v1133 = vcvt.s32.f32 %v1085
        %v1134 = vcvt.s32.f32 %v1086
        %v1135 = vcvt.s32.f32 %v1087
        %v1136 = vcvt.s32.f32 %v1088
        %v1137 = vcvt.s32.f32 %v1089
        %v1138 = vcvt.s32.f32 %v1090
        %v1139 = vcvt.s32.f32 %v1091
        %v1140 = vcvt.s32.f32 %v1092
        %v1141 = vcvt.s32.f32 %v1093
        %v1142 = vcvt.s32.f32 %v1094
        %v1143 = vcvt.s32.f32 %v1095
        %v1144 = vcvt.s32.f32 %v1096
        %v1145 = vcvt.s32.f32 %v1097
        %v1146 = vcvt.s32.f32 %v1098
        %v1147 = vcvt.s32.f32 %v1099
        %v1148 = vcvt.s32.f32 %v1100
        %v1149 = vcvt.s32.f32 %v1101
        %v1150 = vcvt.s32.f32 %v1102
        %v1151 = vcvt.s32.f32 %v1103
        %v1152 = vcvt.s32.f32 %v1104
        %v1153 = vcvt.s32.f32 %v1105
        %v1154 = vcvt.s32.f32 %v1106
        %v1155 = vcvt.s32.f32 %v1107
        %v1156 = vcvt.s32.f32 %v1108
        %v1157 = vcvt.s32.f32 %v1109
        %v1158 = vcvt.s32.f32 %v1110
        %v1159 = vcvt.s32.f32 %v1111
        %v1160 = vcvt.s32.f32 %v1112
        %v1161 = vcvt.s32.f32 %v1113
        %v1162 = vcvt.s32.f32 %v1114
        %v1163 = vcvt.s32.f32 %v1115
        %v1164 = vcvt.s32.f32 %v1116
        %v1165 = vcvt.s32.f32 %v1117
        %v1166 = vcvt.s32.f32 %v1118
        %v1167 = vcvt.s32.f32 %v1119
        %v1168 = vcvt.s32.f32 %v1120
        %v1169 = vcvt.s32.f32 %v1121
        %v1170 = vcvt.s32.f32 %v1122
        %v1171 = vcvt.s32.f32 %v1123
        %v1172 = vcvt.s32.f32 %v1124
        %v1173 = vcvt.s32.f32 %v1125
        %v1174 = vcvt.s32.f32 %v1126
        %v1175 = vcvt.s32.f32 %v1127
        %v1176 = vcvt.s32.f32 %v1128
        %v1177 = vld [vmem:[#allocation3] sm:$0xff]
        %v1178 = vld [vmem:[#allocation3 + $0x8] sm:$0xff]
        %v1179 = vld [vmem:[#allocation3 + $0x10] sm:$0xff]
        %v1180 = vld [vmem:[#allocation3 + $0x18] sm:$0xff]
        %v1181 = vld [vmem:[#allocation3 + $0x20] sm:$0xff]
        %v1182 = vld [vmem:[#allocation3 + $0x28] sm:$0xff]
        %v1183 = vld [vmem:[#allocation3 + $0x30] sm:$0xff]
        %v1184 = vld [vmem:[#allocation3 + $0x38] sm:$0xff]
        %v1185 = vld [vmem:[#allocation3 + $0x40] sm:$0xff]
        %v1186 = vld [vmem:[#allocation3 + $0x48] sm:$0xff]
        %v1187 = vld [vmem:[#allocation3 + $0x50] sm:$0xff]
        %v1188 = vld [vmem:[#allocation3 + $0x58] sm:$0xff]
        %v1189 = vld [vmem:[#allocation3 + $0x60] sm:$0xf]
        %v1190 = vld [vmem:[%s5] sm:$0x1]
        %v1192 = vperm.slane %v1190, 0
        %vm1194 = vcmask 818176
        %v1196 = vsel %vm1194, %v1129, 0
        %v1199 = vsel %vm1194, %v1130, 0
        %v1202 = vsel %vm1194, %v1131, 0
        %v1205 = vsel %vm1194, %v1132, 0
        %v1208 = vsel %vm1194, %v1133, 0
        %v1211 = vsel %vm1194, %v1134, 0
        %v1214 = vsel %vm1194, %v1135, 0
        %v1217 = vsel %vm1194, %v1136, 0
        %v1220 = vsel %vm1194, %v1137, 0
        %v1223 = vsel %vm1194, %v1138, 0
        %v1226 = vsel %vm1194, %v1139, 0
        %v1229 = vsel %vm1194, %v1140, 0
        %v1232 = vsel %vm1194, %v1141, 0
        %v1235 = vsel %vm1194, %v1142, 0
        %v1238 = vsel %vm1194, %v1143, 0
        %v1241 = vsel %vm1194, %v1144, 0
        %v1244 = vsel %vm1194, %v1145, 0
        %v1247 = vsel %vm1194, %v1146, 0
        %v1250 = vsel %vm1194, %v1147, 0
        %v1253 = vsel %vm1194, %v1148, 0
        %v1256 = vsel %vm1194, %v1149, 0
        %v1259 = vsel %vm1194, %v1150, 0
        %v1262 = vsel %vm1194, %v1151, 0
        %v1265 = vsel %vm1194, %v1152, 0
        %v1268 = vsel %vm1194, %v1153, 0
        %v1271 = vsel %vm1194, %v1154, 0
        %v1274 = vsel %vm1194, %v1155, 0
        %v1277 = vsel %vm1194, %v1156, 0
        %v1280 = vsel %vm1194, %v1157, 0
        %v1283 = vsel %vm1194, %v1158, 0
        %v1286 = vsel %vm1194, %v1159, 0
        %v1289 = vsel %vm1194, %v1160, 0
        %v1292 = vsel %vm1194, %v1161, 0
        %v1295 = vsel %vm1194, %v1162, 0
        %v1298 = vsel %vm1194, %v1163, 0
        %v1301 = vsel %vm1194, %v1164, 0
        %v1304 = vsel %vm1194, %v1165, 0
        %v1307 = vsel %vm1194, %v1166, 0
        %v1310 = vsel %vm1194, %v1167, 0
        %v1313 = vsel %vm1194, %v1168, 0
        %v1316 = vsel %vm1194, %v1169, 0
        %v1319 = vsel %vm1194, %v1170, 0
        %v1322 = vsel %vm1194, %v1171, 0
        %v1325 = vsel %vm1194, %v1172, 0
        %v1328 = vsel %vm1194, %v1173, 0
        %v1331 = vsel %vm1194, %v1174, 0
        %v1334 = vsel %vm1194, %v1175, 0
        %v1337 = vsel %vm1194, %v1176, 0
        %vm1339 = vcmask 1043456
        %v1341 = vsel %vm1339, %v1189, 0
        %1343 = vmatpush.msra.mxu0 0.0
        %1344 = vmatpush.msra.mxu0 0.0
        %1345 = vmatpush.msra.mxu0 0.0
        %1346 = vmatpush.msra.mxu0 %v1341
        %1347 = vmatpush.msra.mxu0 %v1188
        %1348 = vmatpush.msra.mxu0 %v1187
        %1349 = vmatpush.msra.mxu0 %v1186
        %1350 = vmatpush.msra.mxu0 %v1185
        %1351 = vmatpush.msra.mxu0 %v1184
        %1352 = vmatpush.msra.mxu0 %v1183
        %1353 = vmatpush.msra.mxu0 %v1182
        %1354 = vmatpush.msra.mxu0 %v1181
        %1355 = vmatpush.msra.mxu0 %v1180
        %1356 = vmatpush.msra.mxu0 %v1179
        %1357 = vmatpush.msra.mxu0 %v1178
        %1358 = vmatpush.msra.mxu0 %v1177
        %1359 = vmatmul.f32.gmra.mxu0 %v1196
        %v1360 = vpop.f32.mrf.mxu0
        %v1361 = vadd.f32 %v1192, %v1360
        %1362 = vmatmul.f32.gmra.mxu0 %v1199
        %v1363 = vpop.f32.mrf.mxu0
        %v1364 = vadd.f32 %v1192, %v1363
        %1365 = vmatmul.f32.gmra.mxu0 %v1202
        %v1366 = vpop.f32.mrf.mxu0
        %v1367 = vadd.f32 %v1192, %v1366
        %1368 = vmatmul.f32.gmra.mxu0 %v1205
        %v1369 = vpop.f32.mrf.mxu0
        %v1370 = vadd.f32 %v1192, %v1369
        %1371 = vmatmul.f32.gmra.mxu0 %v1208
        %v1372 = vpop.f32.mrf.mxu0
        %v1373 = vadd.f32 %v1192, %v1372
        %1374 = vmatmul.f32.gmra.mxu0 %v1211
        %v1375 = vpop.f32.mrf.mxu0
        %v1376 = vadd.f32 %v1192, %v1375
        %1377 = vmatmul.f32.gmra.mxu0 %v1214
        %v1378 = vpop.f32.mrf.mxu0
        %v1379 = vadd.f32 %v1192, %v1378
        %1380 = vmatmul.f32.gmra.mxu0 %v1217
        %v1381 = vpop.f32.mrf.mxu0
        %v1382 = vadd.f32 %v1192, %v1381
        %1383 = vmatmul.f32.gmra.mxu0 %v1220
        %v1384 = vpop.f32.mrf.mxu0
        %v1385 = vadd.f32 %v1192, %v1384
        %1386 = vmatmul.f32.gmra.mxu0 %v1223
        %v1387 = vpop.f32.mrf.mxu0
        %v1388 = vadd.f32 %v1192, %v1387
        %1389 = vmatmul.f32.gmra.mxu0 %v1226
        %v1390 = vpop.f32.mrf.mxu0
        %v1391 = vadd.f32 %v1192, %v1390
        %1392 = vmatmul.f32.gmra.mxu0 %v1229
        %v1393 = vpop.f32.mrf.mxu0
        %v1394 = vadd.f32 %v1192, %v1393
        %1395 = vmatmul.f32.gmra.mxu0 %v1232
        %v1396 = vpop.f32.mrf.mxu0
        %v1397 = vadd.f32 %v1192, %v1396
        %1398 = vmatmul.f32.gmra.mxu0 %v1235
        %v1399 = vpop.f32.mrf.mxu0
        %v1400 = vadd.f32 %v1192, %v1399
        %1401 = vmatmul.f32.gmra.mxu0 %v1238
        %v1402 = vpop.f32.mrf.mxu0
        %v1403 = vadd.f32 %v1192, %v1402
        %1404 = vmatmul.f32.gmra.mxu0 %v1241
        %v1405 = vpop.f32.mrf.mxu0
        %v1406 = vadd.f32 %v1192, %v1405
        %1407 = vmatmul.f32.gmra.mxu0 %v1244
        %v1408 = vpop.f32.mrf.mxu0
        %v1409 = vadd.f32 %v1192, %v1408
        %1410 = vmatmul.f32.gmra.mxu0 %v1247
        %v1411 = vpop.f32.mrf.mxu0
        %v1412 = vadd.f32 %v1192, %v1411
        %1413 = vmatmul.f32.gmra.mxu0 %v1250
        %v1414 = vpop.f32.mrf.mxu0
        %v1415 = vadd.f32 %v1192, %v1414
        %1416 = vmatmul.f32.gmra.mxu0 %v1253
        %v1417 = vpop.f32.mrf.mxu0
        %v1418 = vadd.f32 %v1192, %v1417
        %1419 = vmatmul.f32.gmra.mxu0 %v1256
        %v1420 = vpop.f32.mrf.mxu0
        %v1421 = vadd.f32 %v1192, %v1420
        %1422 = vmatmul.f32.gmra.mxu0 %v1259
        %v1423 = vpop.f32.mrf.mxu0
        %v1424 = vadd.f32 %v1192, %v1423
        %1425 = vmatmul.f32.gmra.mxu0 %v1262
        %v1426 = vpop.f32.mrf.mxu0
        %v1427 = vadd.f32 %v1192, %v1426
        %1428 = vmatmul.f32.gmra.mxu0 %v1265
        %v1429 = vpop.f32.mrf.mxu0
        %v1430 = vadd.f32 %v1192, %v1429
        %1431 = vmatmul.f32.gmra.mxu0 %v1268
        %v1432 = vpop.f32.mrf.mxu0
        %v1433 = vadd.f32 %v1192, %v1432
        %1434 = vmatmul.f32.gmra.mxu0 %v1271
        %v1435 = vpop.f32.mrf.mxu0
        %v1436 = vadd.f32 %v1192, %v1435
        %1437 = vmatmul.f32.gmra.mxu0 %v1274
        %v1438 = vpop.f32.mrf.mxu0
        %v1439 = vadd.f32 %v1192, %v1438
        %1440 = vmatmul.f32.gmra.mxu0 %v1277
        %v1441 = vpop.f32.mrf.mxu0
        %v1442 = vadd.f32 %v1192, %v1441
        %1443 = vmatmul.f32.gmra.mxu0 %v1280
        %v1444 = vpop.f32.mrf.mxu0
        %v1445 = vadd.f32 %v1192, %v1444
        %1446 = vmatmul.f32.gmra.mxu0 %v1283
        %v1447 = vpop.f32.mrf.mxu0
        %v1448 = vadd.f32 %v1192, %v1447
        %1449 = vmatmul.f32.gmra.mxu0 %v1286
        %v1450 = vpop.f32.mrf.mxu0
        %v1451 = vadd.f32 %v1192, %v1450
        %1452 = vmatmul.f32.gmra.mxu0 %v1289
        %v1453 = vpop.f32.mrf.mxu0
        %v1454 = vadd.f32 %v1192, %v1453
        %1455 = vmatmul.f32.gmra.mxu0 %v1292
        %v1456 = vpop.f32.mrf.mxu0
        %v1457 = vadd.f32 %v1192, %v1456
        %1458 = vmatmul.f32.gmra.mxu0 %v1295
        %v1459 = vpop.f32.mrf.mxu0
        %v1460 = vadd.f32 %v1192, %v1459
        %1461 = vmatmul.f32.gmra.mxu0 %v1298
        %v1462 = vpop.f32.mrf.mxu0
        %v1463 = vadd.f32 %v1192, %v1462
        %1464 = vmatmul.f32.gmra.mxu0 %v1301
        %v1465 = vpop.f32.mrf.mxu0
        %v1466 = vadd.f32 %v1192, %v1465
        %1467 = vmatmul.f32.gmra.mxu0 %v1304
        %v1468 = vpop.f32.mrf.mxu0
        %v1469 = vadd.f32 %v1192, %v1468
        %1470 = vmatmul.f32.gmra.mxu0 %v1307
        %v1471 = vpop.f32.mrf.mxu0
        %v1472 = vadd.f32 %v1192, %v1471
        %1473 = vmatmul.f32.gmra.mxu0 %v1310
        %v1474 = vpop.f32.mrf.mxu0
        %v1475 = vadd.f32 %v1192, %v1474
        %1476 = vmatmul.f32.gmra.mxu0 %v1313
        %v1477 = vpop.f32.mrf.mxu0
        %v1478 = vadd.f32 %v1192, %v1477
        %1479 = vmatmul.f32.gmra.mxu0 %v1316
        %v1480 = vpop.f32.mrf.mxu0
        %v1481 = vadd.f32 %v1192, %v1480
        %1482 = vmatmul.f32.gmra.mxu0 %v1319
        %v1483 = vpop.f32.mrf.mxu0
        %v1484 = vadd.f32 %v1192, %v1483
        %1485 = vmatmul.f32.gmra.mxu0 %v1322
        %v1486 = vpop.f32.mrf.mxu0
        %v1487 = vadd.f32 %v1192, %v1486
        %1488 = vmatmul.f32.gmra.mxu0 %v1325
        %v1489 = vpop.f32.mrf.mxu0
        %v1490 = vadd.f32 %v1192, %v1489
        %1491 = vmatmul.f32.gmra.mxu0 %v1328
        %v1492 = vpop.f32.mrf.mxu0
        %v1493 = vadd.f32 %v1192, %v1492
        %1494 = vmatmul.f32.gmra.mxu0 %v1331
        %v1495 = vpop.f32.mrf.mxu0
        %v1496 = vadd.f32 %v1192, %v1495
        %1497 = vmatmul.f32.gmra.mxu0 %v1334
        %v1498 = vpop.f32.mrf.mxu0
        %v1499 = vadd.f32 %v1192, %v1498
        %1500 = vmatmul.f32.gmra.mxu0 %v1337
        %v1501 = vpop.f32.mrf.mxu0
        %v1502 = vadd.f32 %v1192, %v1501
        %1503 = vdwg.mxu0
        %v1504 = vld [vmem:[%s4] sm:$0xff]
        %v1505 = vld [vmem:[%s4 + $0x8] sm:$0xff]
        %v1506 = vld [vmem:[%s4 + $0x10] sm:$0xff]
        %v1507 = vld [vmem:[%s4 + $0x18] sm:$0xff]
        %v1508 = vld [vmem:[%s4 + $0x20] sm:$0xff]
        %v1509 = vld [vmem:[%s4 + $0x28] sm:$0xff]
        %v1510 = vld [vmem:[%s4 + $0x30] sm:$0xff]
        %v1511 = vld [vmem:[%s4 + $0x38] sm:$0xff]
        %v1512 = vld [vmem:[%s4 + $0x40] sm:$0xff]
        %v1513 = vld [vmem:[%s4 + $0x48] sm:$0xff]
        %v1514 = vld [vmem:[%s4 + $0x50] sm:$0xff]
        %v1515 = vld [vmem:[%s4 + $0x58] sm:$0xff]
        %v1516 = vld [vmem:[%s4 + $0x60] sm:$0xff]
        %v1517 = vld [vmem:[%s4 + $0x68] sm:$0xff]
        %v1518 = vld [vmem:[%s4 + $0x70] sm:$0xff]
        %v1519 = vld [vmem:[%s4 + $0x78] sm:$0xff]
        %v1520 = vld [vmem:[%s829] sm:$0xff]
        %v1521 = vld [vmem:[%s829 + $0x8] sm:$0xff]
        %v1522 = vld [vmem:[%s829 + $0x10] sm:$0xff]
        %v1523 = vld [vmem:[%s829 + $0x18] sm:$0xff]
        %1524 = vset.pattern.permute.xlu0 0
        %1525 = vperm.xlu0 %1524, %v1520
        %v1526 = vpop.permute.xlu0 %1525
        %1527 = vset.pattern.permute.xlu0 0
        %1528 = vperm.xlu0 %1527, %v1521
        %v1529 = vpop.permute.xlu0 %1528
        %1530 = vset.pattern.permute.xlu0 0
        %1531 = vperm.xlu0 %1530, %v1522
        %v1532 = vpop.permute.xlu0 %1531
        %1533 = vset.pattern.permute.xlu0 0
        %1534 = vperm.xlu0 %1533, %v1523
        %v1535 = vpop.permute.xlu0 %1534
        %vm1536 = vcmp.gt.s32.totalorder %v1526, 0
        %vm1537 = vcmp.gt.s32.totalorder %v1529, 0
        %vm1538 = vcmp.gt.s32.totalorder %v1532, 0
        %vm1539 = vcmp.gt.s32.totalorder %v1535, 0
        %vm1540 = vcmp.gt.s32.totalorder %v1526, 1
        %vm1541 = vcmp.gt.s32.totalorder %v1529, 1
        %vm1542 = vcmp.gt.s32.totalorder %v1532, 1
        %vm1543 = vcmp.gt.s32.totalorder %v1535, 1
        %vm1544 = vcmp.gt.s32.totalorder %v1526, 2
        %vm1545 = vcmp.gt.s32.totalorder %v1529, 2
        %vm1546 = vcmp.gt.s32.totalorder %v1532, 2
        %vm1547 = vcmp.gt.s32.totalorder %v1535, 2
        %vm1548 = vcmp.gt.s32.totalorder %v1526, 3
        %vm1549 = vcmp.gt.s32.totalorder %v1529, 3
        %vm1550 = vcmp.gt.s32.totalorder %v1532, 3
        %vm1551 = vcmp.gt.s32.totalorder %v1535, 3
        %vm1552 = vcmp.gt.s32.totalorder %v1526, 4
        %vm1553 = vcmp.gt.s32.totalorder %v1529, 4
        %vm1554 = vcmp.gt.s32.totalorder %v1532, 4
        %vm1555 = vcmp.gt.s32.totalorder %v1535, 4
        %vm1556 = vcmp.gt.s32.totalorder %v1526, 5
        %vm1557 = vcmp.gt.s32.totalorder %v1529, 5
        %vm1558 = vcmp.gt.s32.totalorder %v1532, 5
        %vm1559 = vcmp.gt.s32.totalorder %v1535, 5
        %vm1560 = vcmp.gt.s32.totalorder %v1526, 6
        %vm1561 = vcmp.gt.s32.totalorder %v1529, 6
        %vm1562 = vcmp.gt.s32.totalorder %v1532, 6
        %vm1563 = vcmp.gt.s32.totalorder %v1535, 6
        %vm1564 = vcmp.gt.s32.totalorder %v1526, 7
        %vm1565 = vcmp.gt.s32.totalorder %v1529, 7
        %vm1566 = vcmp.gt.s32.totalorder %v1532, 7
        %vm1567 = vcmp.gt.s32.totalorder %v1535, 7
        %vm1568 = vcmp.gt.s32.totalorder %v1526, 8
        %vm1569 = vcmp.gt.s32.totalorder %v1529, 8
        %vm1570 = vcmp.gt.s32.totalorder %v1532, 8
        %vm1571 = vcmp.gt.s32.totalorder %v1535, 8
        %vm1572 = vcmp.gt.s32.totalorder %v1526, 9
        %vm1573 = vcmp.gt.s32.totalorder %v1529, 9
        %vm1574 = vcmp.gt.s32.totalorder %v1532, 9
        %vm1575 = vcmp.gt.s32.totalorder %v1535, 9
        %vm1576 = vcmp.gt.s32.totalorder %v1526, 10
        %vm1577 = vcmp.gt.s32.totalorder %v1529, 10
        %vm1578 = vcmp.gt.s32.totalorder %v1532, 10
        %vm1579 = vcmp.gt.s32.totalorder %v1535, 10
        %vm1580 = vcmp.gt.s32.totalorder %v1526, 11
        %vm1581 = vcmp.gt.s32.totalorder %v1529, 11
        %vm1582 = vcmp.gt.s32.totalorder %v1532, 11
        %vm1583 = vcmp.gt.s32.totalorder %v1535, 11
        %vm1584 = vcmp.lt.s32.totalorder %v888, 64
        %1585 = vmatpush.msra.mxu0 %v1519
        %1586 = vmatpush.msra.mxu0 %v1518
        %1587 = vmatpush.msra.mxu0 %v1517
        %1588 = vmatpush.msra.mxu0 %v1516
        %1589 = vmatpush.msra.mxu0 %v1515
        %1590 = vmatpush.msra.mxu0 %v1514
        %1591 = vmatpush.msra.mxu0 %v1513
        %1592 = vmatpush.msra.mxu0 %v1512
        %1593 = vmatpush.msra.mxu0 %v1511
        %1594 = vmatpush.msra.mxu0 %v1510
        %1595 = vmatpush.msra.mxu0 %v1509
        %1596 = vmatpush.msra.mxu0 %v1508
        %1597 = vmatpush.msra.mxu0 %v1507
        %1598 = vmatpush.msra.mxu0 %v1506
        %1599 = vmatpush.msra.mxu0 %v1505
        %1600 = vmatpush.msra.mxu0 %v1504
        %1601 = vmatmul.f32.gmra.mxu0 0.0
        %v1602 = vpop.f32.mrf.mxu0
        %v1603 = vadd.f32 0.0, %v1602
        %1604 = vmatmul.f32.gmra.mxu0 0.0
        %v1605 = vpop.f32.mrf.mxu0
        %v1606 = vadd.f32 0.0, %v1605
        %1607 = vmatmul.f32.gmra.mxu0 0.0
        %v1608 = vpop.f32.mrf.mxu0
        %v1609 = vadd.f32 0.0, %v1608
        %1610 = vmatmul.f32.gmra.mxu0 0.0
        %v1611 = vpop.f32.mrf.mxu0
        %v1612 = vadd.f32 0.0, %v1611
        %1613 = vdwg.mxu0
        %v1614 = vadd.f32 %v1361, %v1603
        %v1615 = vadd.f32 %v1364, %v1606
        %v1616 = vadd.f32 %v1367, %v1609
        %v1617 = vadd.f32 %v1370, %v1612
        %v1618 = vxor.u32 %v1614, 2147483648
        %v1619 = vxor.u32 %v1615, 2147483648
        %v1620 = vxor.u32 %v1616, 2147483648
        %v1621 = vxor.u32 %v1617, 2147483648
        %v1622 = vmul.f32 %v1618, 1.442695
        %v1623 = vpow.pop %v1622
        %v1624 = vmul.f32 %v1619, 1.442695
        %v1625 = vpow.pop %v1624
        %v1626 = vmul.f32 %v1620, 1.442695
        %v1627 = vpow.pop %v1626
        %v1628 = vmul.f32 %v1621, 1.442695
        %v1629 = vpow.pop %v1628
        %v1630 = vadd.f32 %v1623, 1.0
        %v1631 = vadd.f32 %v1625, 1.0
        %v1632 = vadd.f32 %v1627, 1.0
        %v1633 = vadd.f32 %v1629, 1.0
        %v1634 = vrcp.pop %v1630
        %v1635 = vmul.f32 %v1630, %v1634
        %v1636 = vsub.f32 1.0, %v1635
        %v1637 = vmul.f32 %v1634, %v1636
        %v1638 = vadd.f32 %v1634, %v1637
        %vm1639 = vweird.f32 %v1630
        %vm1640 = vweird.f32 %v1634
        %vm1641 = vmor %vm1639, %vm1640
        %v1642 = vsel %vm1641, %v1634, %v1638
        %v1643 = vand.u32 2147483647, %v1630
        %vm1644 = vcmp.eq.f32.partialorder %v1643, 8.507059e+37
        %v1645 = vand.u32 %v1630, 2147483648
        %v1646 = vor.u32 1.1754944e-38, %v1645
        %v1647 = vsel %vm1644, %v1646, %v1642
        %v1648 = vmul.f32 1.0, %v1647
        %v1649 = vrcp.pop %v1631
        %v1650 = vmul.f32 %v1631, %v1649
        %v1651 = vsub.f32 1.0, %v1650
        %v1652 = vmul.f32 %v1649, %v1651
        %v1653 = vadd.f32 %v1649, %v1652
        %vm1654 = vweird.f32 %v1631
        %vm1655 = vweird.f32 %v1649
        %vm1656 = vmor %vm1654, %vm1655
        %v1657 = vsel %vm1656, %v1649, %v1653
        %v1658 = vand.u32 2147483647, %v1631
        %vm1659 = vcmp.eq.f32.partialorder %v1658, 8.507059e+37
        %v1660 = vand.u32 %v1631, 2147483648
        %v1661 = vor.u32 1.1754944e-38, %v1660
        %v1662 = vsel %vm1659, %v1661, %v1657
        %v1663 = vmul.f32 1.0, %v1662
        %v1664 = vrcp.pop %v1632
        %v1665 = vmul.f32 %v1632, %v1664
        %v1666 = vsub.f32 1.0, %v1665
        %v1667 = vmul.f32 %v1664, %v1666
        %v1668 = vadd.f32 %v1664, %v1667
        %vm1669 = vweird.f32 %v1632
        %vm1670 = vweird.f32 %v1664
        %vm1671 = vmor %vm1669, %vm1670
        %v1672 = vsel %vm1671, %v1664, %v1668
        %v1673 = vand.u32 2147483647, %v1632
        %vm1674 = vcmp.eq.f32.partialorder %v1673, 8.507059e+37
        %v1675 = vand.u32 %v1632, 2147483648
        %v1676 = vor.u32 1.1754944e-38, %v1675
        %v1677 = vsel %vm1674, %v1676, %v1672
        %v1678 = vmul.f32 1.0, %v1677
        %v1679 = vrcp.pop %v1633
        %v1680 = vmul.f32 %v1633, %v1679
        %v1681 = vsub.f32 1.0, %v1680
        %v1682 = vmul.f32 %v1679, %v1681
        %v1683 = vadd.f32 %v1679, %v1682
        %vm1684 = vweird.f32 %v1633
        %vm1685 = vweird.f32 %v1679
        %vm1686 = vmor %vm1684, %vm1685
        %v1687 = vsel %vm1686, %v1679, %v1683
        %v1688 = vand.u32 2147483647, %v1633
        %vm1689 = vcmp.eq.f32.partialorder %v1688, 8.507059e+37
        %v1690 = vand.u32 %v1633, 2147483648
        %v1691 = vor.u32 1.1754944e-38, %v1690
        %v1692 = vsel %vm1689, %v1691, %v1687
        %v1693 = vmul.f32 1.0, %v1692
        %v1694 = vtanh.pop %v1614
        %v1695 = vtanh.pop %v1615
        %v1696 = vtanh.pop %v1616
        %v1697 = vtanh.pop %v1617
        %1698 = vrot.lane.b32.xlu0 %v1648, 64
        %v1699 = vpop.permute.xlu0 %1698
        %1700 = vrot.lane.b32.xlu0 %v1663, 64
        %v1701 = vpop.permute.xlu0 %1700
        %1702 = vrot.lane.b32.xlu0 %v1678, 64
        %v1703 = vpop.permute.xlu0 %1702
        %1704 = vrot.lane.b32.xlu0 %v1693, 64
        %v1705 = vpop.permute.xlu0 %1704
        %1706 = vrot.lane.b32.xlu0 %v1694, 64
        %v1707 = vpop.permute.xlu0 %1706
        %1708 = vrot.lane.b32.xlu0 %v1695, 64
        %v1709 = vpop.permute.xlu0 %1708
        %1710 = vrot.lane.b32.xlu0 %v1696, 64
        %v1711 = vpop.permute.xlu0 %1710
        %1712 = vrot.lane.b32.xlu0 %v1697, 64
        %v1713 = vpop.permute.xlu0 %1712
        %v1714 = vmul.f32 %v1648, %v1707
        %v1715 = vmul.f32 %v1663, %v1709
        %v1716 = vmul.f32 %v1678, %v1711
        %v1717 = vmul.f32 %v1693, %v1713
        %v1718 = vmul.f32 %v1699, %v1694
        %v1719 = vmul.f32 %v1701, %v1695
        %v1720 = vmul.f32 %v1703, %v1696
        %v1721 = vmul.f32 %v1705, %v1697
        %v1722 = vsel %vm1584, %v1714, %v1718
        %v1723 = vsel %vm1584, %v1715, %v1719
        %v1724 = vsel %vm1584, %v1716, %v1720
        %v1725 = vsel %vm1584, %v1717, %v1721
        %1726 = vrot.lane.b32.xlu0 %v1722, 32
        %v1727 = vpop.permute.xlu0 %1726
        %1728 = vrot.lane.b32.xlu0 %v1723, 32
        %v1729 = vpop.permute.xlu0 %1728
        %1730 = vrot.lane.b32.xlu0 %v1724, 32
        %v1731 = vpop.permute.xlu0 %1730
        %1732 = vrot.lane.b32.xlu0 %v1725, 32
        %v1733 = vpop.permute.xlu0 %1732
        %v1734 = vmul.f32 %v1648, 0.0
        %v1735 = vmul.f32 %v1663, 0.0
        %v1736 = vmul.f32 %v1678, 0.0
        %v1737 = vmul.f32 %v1693, 0.0
        %v1738 = vadd.f32 %v1734, %v1727
        %v1739 = vadd.f32 %v1735, %v1729
        %v1740 = vadd.f32 %v1736, %v1731
        %v1741 = vadd.f32 %v1737, %v1733
        %v1742 = vtanh.pop %v1738
        %v1743 = vtanh.pop %v1739
        %v1744 = vtanh.pop %v1740
        %v1745 = vtanh.pop %v1741
        %1746 = vrot.lane.b32.xlu0 %v1742, 64
        %v1747 = vpop.permute.xlu0 %1746
        %1748 = vrot.lane.b32.xlu0 %v1743, 64
        %v1749 = vpop.permute.xlu0 %1748
        %1750 = vrot.lane.b32.xlu0 %v1744, 64
        %v1751 = vpop.permute.xlu0 %1750
        %1752 = vrot.lane.b32.xlu0 %v1745, 64
        %v1753 = vpop.permute.xlu0 %1752
        %v1754 = vmul.f32 %v1648, %v1747
        %v1755 = vmul.f32 %v1663, %v1749
        %v1756 = vmul.f32 %v1678, %v1751
        %v1757 = vmul.f32 %v1693, %v1753
        %v1758 = vsel %vm1536, %v1738, 0.0
        %v1759 = vsel %vm1537, %v1739, 0.0
        %v1760 = vsel %vm1538, %v1740, 0.0
        %v1761 = vsel %vm1539, %v1741, 0.0
        %v1762 = vsel %vm1536, %v1754, 0.0
        %v1763 = vsel %vm1537, %v1755, 0.0
        %v1764 = vsel %vm1538, %v1756, 0.0
        %v1765 = vsel %vm1539, %v1757, 0.0
        %1766 = vmatpush.msra.mxu0 %v1519
        %1767 = vmatpush.msra.mxu0 %v1518
        %1768 = vmatpush.msra.mxu0 %v1517
        %1769 = vmatpush.msra.mxu0 %v1516
        %1770 = vmatpush.msra.mxu0 %v1515
        %1771 = vmatpush.msra.mxu0 %v1514
        %1772 = vmatpush.msra.mxu0 %v1513
        %1773 = vmatpush.msra.mxu0 %v1512
        %1774 = vmatpush.msra.mxu0 %v1511
        %1775 = vmatpush.msra.mxu0 %v1510
        %1776 = vmatpush.msra.mxu0 %v1509
        %1777 = vmatpush.msra.mxu0 %v1508
        %1778 = vmatpush.msra.mxu0 %v1507
        %1779 = vmatpush.msra.mxu0 %v1506
        %1780 = vmatpush.msra.mxu0 %v1505
        %1781 = vmatpush.msra.mxu0 %v1504
        %1782 = vmatmul.f32.gmra.mxu0 %v1762
        %v1783 = vpop.f32.mrf.mxu0
        %v1784 = vadd.f32 0.0, %v1783
        %1785 = vmatmul.f32.gmra.mxu0 %v1763
        %v1786 = vpop.f32.mrf.mxu0
        %v1787 = vadd.f32 0.0, %v1786
        %1788 = vmatmul.f32.gmra.mxu0 %v1764
        %v1789 = vpop.f32.mrf.mxu0
        %v1790 = vadd.f32 0.0, %v1789
        %1791 = vmatmul.f32.gmra.mxu0 %v1765
        %v1792 = vpop.f32.mrf.mxu0
        %v1793 = vadd.f32 0.0, %v1792
        %1794 = vdwg.mxu0
        %v1795 = vadd.f32 %v1373, %v1784
        %v1796 = vadd.f32 %v1376, %v1787
        %v1797 = vadd.f32 %v1379, %v1790
        %v1798 = vadd.f32 %v1382, %v1793
        %v1799 = vxor.u32 %v1795, 2147483648
        %v1800 = vxor.u32 %v1796, 2147483648
        %v1801 = vxor.u32 %v1797, 2147483648
        %v1802 = vxor.u32 %v1798, 2147483648
        %v1803 = vmul.f32 %v1799, 1.442695
        %v1804 = vpow.pop %v1803
        %v1805 = vmul.f32 %v1800, 1.442695
        %v1806 = vpow.pop %v1805
        %v1807 = vmul.f32 %v1801, 1.442695
        %v1808 = vpow.pop %v1807
        %v1809 = vmul.f32 %v1802, 1.442695
        %v1810 = vpow.pop %v1809
        %v1811 = vadd.f32 %v1804, 1.0
        %v1812 = vadd.f32 %v1806, 1.0
        %v1813 = vadd.f32 %v1808, 1.0
        %v1814 = vadd.f32 %v1810, 1.0
        %v1815 = vrcp.pop %v1811
        %v1816 = vmul.f32 %v1811, %v1815
        %v1817 = vsub.f32 1.0, %v1816
        %v1818 = vmul.f32 %v1815, %v1817
        %v1819 = vadd.f32 %v1815, %v1818
        %vm1820 = vweird.f32 %v1811
        %vm1821 = vweird.f32 %v1815
        %vm1822 = vmor %vm1820, %vm1821
        %v1823 = vsel %vm1822, %v1815, %v1819
        %v1824 = vand.u32 2147483647, %v1811
        %vm1825 = vcmp.eq.f32.partialorder %v1824, 8.507059e+37
        %v1826 = vand.u32 %v1811, 2147483648
        %v1827 = vor.u32 1.1754944e-38, %v1826
        %v1828 = vsel %vm1825, %v1827, %v1823
        %v1829 = vmul.f32 1.0, %v1828
        %v1830 = vrcp.pop %v1812
        %v1831 = vmul.f32 %v1812, %v1830
        %v1832 = vsub.f32 1.0, %v1831
        %v1833 = vmul.f32 %v1830, %v1832
        %v1834 = vadd.f32 %v1830, %v1833
        %vm1835 = vweird.f32 %v1812
        %vm1836 = vweird.f32 %v1830
        %vm1837 = vmor %vm1835, %vm1836
        %v1838 = vsel %vm1837, %v1830, %v1834
        %v1839 = vand.u32 2147483647, %v1812
        %vm1840 = vcmp.eq.f32.partialorder %v1839, 8.507059e+37
        %v1841 = vand.u32 %v1812, 2147483648
        %v1842 = vor.u32 1.1754944e-38, %v1841
        %v1843 = vsel %vm1840, %v1842, %v1838
        %v1844 = vmul.f32 1.0, %v1843
        %v1845 = vrcp.pop %v1813
        %v1846 = vmul.f32 %v1813, %v1845
        %v1847 = vsub.f32 1.0, %v1846
        %v1848 = vmul.f32 %v1845, %v1847
        %v1849 = vadd.f32 %v1845, %v1848
        %vm1850 = vweird.f32 %v1813
        %vm1851 = vweird.f32 %v1845
        %vm1852 = vmor %vm1850, %vm1851
        %v1853 = vsel %vm1852, %v1845, %v1849
        %v1854 = vand.u32 2147483647, %v1813
        %vm1855 = vcmp.eq.f32.partialorder %v1854, 8.507059e+37
        %v1856 = vand.u32 %v1813, 2147483648
        %v1857 = vor.u32 1.1754944e-38, %v1856
        %v1858 = vsel %vm1855, %v1857, %v1853
        %v1859 = vmul.f32 1.0, %v1858
        %v1860 = vrcp.pop %v1814
        %v1861 = vmul.f32 %v1814, %v1860
        %v1862 = vsub.f32 1.0, %v1861
        %v1863 = vmul.f32 %v1860, %v1862
        %v1864 = vadd.f32 %v1860, %v1863
        %vm1865 = vweird.f32 %v1814
        %vm1866 = vweird.f32 %v1860
        %vm1867 = vmor %vm1865, %vm1866
        %v1868 = vsel %vm1867, %v1860, %v1864
        %v1869 = vand.u32 2147483647, %v1814
        %vm1870 = vcmp.eq.f32.partialorder %v1869, 8.507059e+37
        %v1871 = vand.u32 %v1814, 2147483648
        %v1872 = vor.u32 1.1754944e-38, %v1871
        %v1873 = vsel %vm1870, %v1872, %v1868
        %v1874 = vmul.f32 1.0, %v1873
        %v1875 = vtanh.pop %v1795
        %v1876 = vtanh.pop %v1796
        %v1877 = vtanh.pop %v1797
        %v1878 = vtanh.pop %v1798
        %1879 = vrot.lane.b32.xlu0 %v1829, 64
        %v1880 = vpop.permute.xlu0 %1879
        %1881 = vrot.lane.b32.xlu0 %v1844, 64
        %v1882 = vpop.permute.xlu0 %1881
        %1883 = vrot.lane.b32.xlu0 %v1859, 64
        %v1884 = vpop.permute.xlu0 %1883
        %1885 = vrot.lane.b32.xlu0 %v1874, 64
        %v1886 = vpop.permute.xlu0 %1885
        %1887 = vrot.lane.b32.xlu0 %v1875, 64
        %v1888 = vpop.permute.xlu0 %1887
        %1889 = vrot.lane.b32.xlu0 %v1876, 64
        %v1890 = vpop.permute.xlu0 %1889
        %1891 = vrot.lane.b32.xlu0 %v1877, 64
        %v1892 = vpop.permute.xlu0 %1891
        %1893 = vrot.lane.b32.xlu0 %v1878, 64
        %v1894 = vpop.permute.xlu0 %1893
        %v1895 = vmul.f32 %v1829, %v1888
        %v1896 = vmul.f32 %v1844, %v1890
        %v1897 = vmul.f32 %v1859, %v1892
        %v1898 = vmul.f32 %v1874, %v1894
        %v1899 = vmul.f32 %v1880, %v1875
        %v1900 = vmul.f32 %v1882, %v1876
        %v1901 = vmul.f32 %v1884, %v1877
        %v1902 = vmul.f32 %v1886, %v1878
        %v1903 = vsel %vm1584, %v1895, %v1899
        %v1904 = vsel %vm1584, %v1896, %v1900
        %v1905 = vsel %vm1584, %v1897, %v1901
        %v1906 = vsel %vm1584, %v1898, %v1902
        %1907 = vrot.lane.b32.xlu0 %v1903, 32
        %v1908 = vpop.permute.xlu0 %1907
        %1909 = vrot.lane.b32.xlu0 %v1904, 32
        %v1910 = vpop.permute.xlu0 %1909
        %1911 = vrot.lane.b32.xlu0 %v1905, 32
        %v1912 = vpop.permute.xlu0 %1911
        %1913 = vrot.lane.b32.xlu0 %v1906, 32
        %v1914 = vpop.permute.xlu0 %1913
        %v1915 = vmul.f32 %v1829, %v1758
        %v1916 = vmul.f32 %v1844, %v1759
        %v1917 = vmul.f32 %v1859, %v1760
        %v1918 = vmul.f32 %v1874, %v1761
        %v1919 = vadd.f32 %v1915, %v1908
        %v1920 = vadd.f32 %v1916, %v1910
        %v1921 = vadd.f32 %v1917, %v1912
        %v1922 = vadd.f32 %v1918, %v1914
        %v1923 = vtanh.pop %v1919
        %v1924 = vtanh.pop %v1920
        %v1925 = vtanh.pop %v1921
        %v1926 = vtanh.pop %v1922
        %1927 = vrot.lane.b32.xlu0 %v1923, 64
        %v1928 = vpop.permute.xlu0 %1927
        %1929 = vrot.lane.b32.xlu0 %v1924, 64
        %v1930 = vpop.permute.xlu0 %1929
        %1931 = vrot.lane.b32.xlu0 %v1925, 64
        %v1932 = vpop.permute.xlu0 %1931
        %1933 = vrot.lane.b32.xlu0 %v1926, 64
        %v1934 = vpop.permute.xlu0 %1933
        %v1935 = vmul.f32 %v1829, %v1928
        %v1936 = vmul.f32 %v1844, %v1930
        %v1937 = vmul.f32 %v1859, %v1932
        %v1938 = vmul.f32 %v1874, %v1934
        %v1939 = vsel %vm1540, %v1919, %v1758
        %v1940 = vsel %vm1541, %v1920, %v1759
        %v1941 = vsel %vm1542, %v1921, %v1760
        %v1942 = vsel %vm1543, %v1922, %v1761
        %v1943 = vsel %vm1540, %v1935, %v1762
        %v1944 = vsel %vm1541, %v1936, %v1763
        %v1945 = vsel %vm1542, %v1937, %v1764
        %v1946 = vsel %vm1543, %v1938, %v1765
        %1947 = vmatpush.msra.mxu0 %v1519
        %1948 = vmatpush.msra.mxu0 %v1518
        %1949 = vmatpush.msra.mxu0 %v1517
        %1950 = vmatpush.msra.mxu0 %v1516
        %1951 = vmatpush.msra.mxu0 %v1515
        %1952 = vmatpush.msra.mxu0 %v1514
        %1953 = vmatpush.msra.mxu0 %v1513
        %1954 = vmatpush.msra.mxu0 %v1512
        %1955 = vmatpush.msra.mxu0 %v1511
        %1956 = vmatpush.msra.mxu0 %v1510
        %1957 = vmatpush.msra.mxu0 %v1509
        %1958 = vmatpush.msra.mxu0 %v1508
        %1959 = vmatpush.msra.mxu0 %v1507
        %1960 = vmatpush.msra.mxu0 %v1506
        %1961 = vmatpush.msra.mxu0 %v1505
        %1962 = vmatpush.msra.mxu0 %v1504
        %1963 = vmatmul.f32.gmra.mxu0 %v1943
        %v1964 = vpop.f32.mrf.mxu0
        %v1965 = vadd.f32 0.0, %v1964
        %1966 = vmatmul.f32.gmra.mxu0 %v1944
        %v1967 = vpop.f32.mrf.mxu0
        %v1968 = vadd.f32 0.0, %v1967
        %1969 = vmatmul.f32.gmra.mxu0 %v1945
        %v1970 = vpop.f32.mrf.mxu0
        %v1971 = vadd.f32 0.0, %v1970
        %1972 = vmatmul.f32.gmra.mxu0 %v1946
        %v1973 = vpop.f32.mrf.mxu0
        %v1974 = vadd.f32 0.0, %v1973
        %1975 = vdwg.mxu0
        %v1976 = vadd.f32 %v1385, %v1965
        %v1977 = vadd.f32 %v1388, %v1968
        %v1978 = vadd.f32 %v1391, %v1971
        %v1979 = vadd.f32 %v1394, %v1974
        %v1980 = vxor.u32 %v1976, 2147483648
        %v1981 = vxor.u32 %v1977, 2147483648
        %v1982 = vxor.u32 %v1978, 2147483648
        %v1983 = vxor.u32 %v1979, 2147483648
        %v1984 = vmul.f32 %v1980, 1.442695
        %v1985 = vpow.pop %v1984
        %v1986 = vmul.f32 %v1981, 1.442695
        %v1987 = vpow.pop %v1986
        %v1988 = vmul.f32 %v1982, 1.442695
        %v1989 = vpow.pop %v1988
        %v1990 = vmul.f32 %v1983, 1.442695
        %v1991 = vpow.pop %v1990
        %v1992 = vadd.f32 %v1985, 1.0
        %v1993 = vadd.f32 %v1987, 1.0
        %v1994 = vadd.f32 %v1989, 1.0
        %v1995 = vadd.f32 %v1991, 1.0
        %v1996 = vrcp.pop %v1992
        %v1997 = vmul.f32 %v1992, %v1996
        %v1998 = vsub.f32 1.0, %v1997
        %v1999 = vmul.f32 %v1996, %v1998
        %v2000 = vadd.f32 %v1996, %v1999
        %vm2001 = vweird.f32 %v1992
        %vm2002 = vweird.f32 %v1996
        %vm2003 = vmor %vm2001, %vm2002
        %v2004 = vsel %vm2003, %v1996, %v2000
        %v2005 = vand.u32 2147483647, %v1992
        %vm2006 = vcmp.eq.f32.partialorder %v2005, 8.507059e+37
        %v2007 = vand.u32 %v1992, 2147483648
        %v2008 = vor.u32 1.1754944e-38, %v2007
        %v2009 = vsel %vm2006, %v2008, %v2004
        %v2010 = vmul.f32 1.0, %v2009
        %v2011 = vrcp.pop %v1993
        %v2012 = vmul.f32 %v1993, %v2011
        %v2013 = vsub.f32 1.0, %v2012
        %v2014 = vmul.f32 %v2011, %v2013
        %v2015 = vadd.f32 %v2011, %v2014
        %vm2016 = vweird.f32 %v1993
        %vm2017 = vweird.f32 %v2011
        %vm2018 = vmor %vm2016, %vm2017
        %v2019 = vsel %vm2018, %v2011, %v2015
        %v2020 = vand.u32 2147483647, %v1993
        %vm2021 = vcmp.eq.f32.partialorder %v2020, 8.507059e+37
        %v2022 = vand.u32 %v1993, 2147483648
        %v2023 = vor.u32 1.1754944e-38, %v2022
        %v2024 = vsel %vm2021, %v2023, %v2019
        %v2025 = vmul.f32 1.0, %v2024
        %v2026 = vrcp.pop %v1994
        %v2027 = vmul.f32 %v1994, %v2026
        %v2028 = vsub.f32 1.0, %v2027
        %v2029 = vmul.f32 %v2026, %v2028
        %v2030 = vadd.f32 %v2026, %v2029
        %vm2031 = vweird.f32 %v1994
        %vm2032 = vweird.f32 %v2026
        %vm2033 = vmor %vm2031, %vm2032
        %v2034 = vsel %vm2033, %v2026, %v2030
        %v2035 = vand.u32 2147483647, %v1994
        %vm2036 = vcmp.eq.f32.partialorder %v2035, 8.507059e+37
        %v2037 = vand.u32 %v1994, 2147483648
        %v2038 = vor.u32 1.1754944e-38, %v2037
        %v2039 = vsel %vm2036, %v2038, %v2034
        %v2040 = vmul.f32 1.0, %v2039
        %v2041 = vrcp.pop %v1995
        %v2042 = vmul.f32 %v1995, %v2041
        %v2043 = vsub.f32 1.0, %v2042
        %v2044 = vmul.f32 %v2041, %v2043
        %v2045 = vadd.f32 %v2041, %v2044
        %vm2046 = vweird.f32 %v1995
        %vm2047 = vweird.f32 %v2041
        %vm2048 = vmor %vm2046, %vm2047
        %v2049 = vsel %vm2048, %v2041, %v2045
        %v2050 = vand.u32 2147483647, %v1995
        %vm2051 = vcmp.eq.f32.partialorder %v2050, 8.507059e+37
        %v2052 = vand.u32 %v1995, 2147483648
        %v2053 = vor.u32 1.1754944e-38, %v2052
        %v2054 = vsel %vm2051, %v2053, %v2049
        %v2055 = vmul.f32 1.0, %v2054
        %v2056 = vtanh.pop %v1976
        %v2057 = vtanh.pop %v1977
        %v2058 = vtanh.pop %v1978
        %v2059 = vtanh.pop %v1979
        %2060 = vrot.lane.b32.xlu0 %v2010, 64
        %v2061 = vpop.permute.xlu0 %2060
        %2062 = vrot.lane.b32.xlu0 %v2025, 64
        %v2063 = vpop.permute.xlu0 %2062
        %2064 = vrot.lane.b32.xlu0 %v2040, 64
        %v2065 = vpop.permute.xlu0 %2064
        %2066 = vrot.lane.b32.xlu0 %v2055, 64
        %v2067 = vpop.permute.xlu0 %2066
        %2068 = vrot.lane.b32.xlu0 %v2056, 64
        %v2069 = vpop.permute.xlu0 %2068
        %2070 = vrot.lane.b32.xlu0 %v2057, 64
        %v2071 = vpop.permute.xlu0 %2070
        %2072 = vrot.lane.b32.xlu0 %v2058, 64
        %v2073 = vpop.permute.xlu0 %2072
        %2074 = vrot.lane.b32.xlu0 %v2059, 64
        %v2075 = vpop.permute.xlu0 %2074
        %v2076 = vmul.f32 %v2010, %v2069
        %v2077 = vmul.f32 %v2025, %v2071
        %v2078 = vmul.f32 %v2040, %v2073
        %v2079 = vmul.f32 %v2055, %v2075
        %v2080 = vmul.f32 %v2061, %v2056
        %v2081 = vmul.f32 %v2063, %v2057
        %v2082 = vmul.f32 %v2065, %v2058
        %v2083 = vmul.f32 %v2067, %v2059
        %v2084 = vsel %vm1584, %v2076, %v2080
        %v2085 = vsel %vm1584, %v2077, %v2081
        %v2086 = vsel %vm1584, %v2078, %v2082
        %v2087 = vsel %vm1584, %v2079, %v2083
        %2088 = vrot.lane.b32.xlu0 %v2084, 32
        %v2089 = vpop.permute.xlu0 %2088
        %2090 = vrot.lane.b32.xlu0 %v2085, 32
        %v2091 = vpop.permute.xlu0 %2090
        %2092 = vrot.lane.b32.xlu0 %v2086, 32
        %v2093 = vpop.permute.xlu0 %2092
        %2094 = vrot.lane.b32.xlu0 %v2087, 32
        %v2095 = vpop.permute.xlu0 %2094
        %v2096 = vmul.f32 %v2010, %v1939
        %v2097 = vmul.f32 %v2025, %v1940
        %v2098 = vmul.f32 %v2040, %v1941
        %v2099 = vmul.f32 %v2055, %v1942
        %v2100 = vadd.f32 %v2096, %v2089
        %v2101 = vadd.f32 %v2097, %v2091
        %v2102 = vadd.f32 %v2098, %v2093
        %v2103 = vadd.f32 %v2099, %v2095
        %v2104 = vtanh.pop %v2100
        %v2105 = vtanh.pop %v2101
        %v2106 = vtanh.pop %v2102
        %v2107 = vtanh.pop %v2103
        %2108 = vrot.lane.b32.xlu0 %v2104, 64
        %v2109 = vpop.permute.xlu0 %2108
        %2110 = vrot.lane.b32.xlu0 %v2105, 64
        %v2111 = vpop.permute.xlu0 %2110
        %2112 = vrot.lane.b32.xlu0 %v2106, 64
        %v2113 = vpop.permute.xlu0 %2112
        %2114 = vrot.lane.b32.xlu0 %v2107, 64
        %v2115 = vpop.permute.xlu0 %2114
        %v2116 = vmul.f32 %v2010, %v2109
        %v2117 = vmul.f32 %v2025, %v2111
        %v2118 = vmul.f32 %v2040, %v2113
        %v2119 = vmul.f32 %v2055, %v2115
        %v2120 = vsel %vm1544, %v2100, %v1939
        %v2121 = vsel %vm1545, %v2101, %v1940
        %v2122 = vsel %vm1546, %v2102, %v1941
        %v2123 = vsel %vm1547, %v2103, %v1942
        %v2124 = vsel %vm1544, %v2116, %v1943
        %v2125 = vsel %vm1545, %v2117, %v1944
        %v2126 = vsel %vm1546, %v2118, %v1945
        %v2127 = vsel %vm1547, %v2119, %v1946
        %2128 = vmatpush.msra.mxu0 %v1519
        %2129 = vmatpush.msra.mxu0 %v1518
        %2130 = vmatpush.msra.mxu0 %v1517
        %2131 = vmatpush.msra.mxu0 %v1516
        %2132 = vmatpush.msra.mxu0 %v1515
        %2133 = vmatpush.msra.mxu0 %v1514
        %2134 = vmatpush.msra.mxu0 %v1513
        %2135 = vmatpush.msra.mxu0 %v1512
        %2136 = vmatpush.msra.mxu0 %v1511
        %2137 = vmatpush.msra.mxu0 %v1510
        %2138 = vmatpush.msra.mxu0 %v1509
        %2139 = vmatpush.msra.mxu0 %v1508
        %2140 = vmatpush.msra.mxu0 %v1507
        %2141 = vmatpush.msra.mxu0 %v1506
        %2142 = vmatpush.msra.mxu0 %v1505
        %2143 = vmatpush.msra.mxu0 %v1504
        %2144 = vmatmul.f32.gmra.mxu0 %v2124
        %v2145 = vpop.f32.mrf.mxu0
        %v2146 = vadd.f32 0.0, %v2145
        %2147 = vmatmul.f32.gmra.mxu0 %v2125
        %v2148 = vpop.f32.mrf.mxu0
        %v2149 = vadd.f32 0.0, %v2148
        %2150 = vmatmul.f32.gmra.mxu0 %v2126
        %v2151 = vpop.f32.mrf.mxu0
        %v2152 = vadd.f32 0.0, %v2151
        %2153 = vmatmul.f32.gmra.mxu0 %v2127
        %v2154 = vpop.f32.mrf.mxu0
        %v2155 = vadd.f32 0.0, %v2154
        %2156 = vdwg.mxu0
        %v2157 = vadd.f32 %v1397, %v2146
        %v2158 = vadd.f32 %v1400, %v2149
        %v2159 = vadd.f32 %v1403, %v2152
        %v2160 = vadd.f32 %v1406, %v2155
        %v2161 = vxor.u32 %v2157, 2147483648
        %v2162 = vxor.u32 %v2158, 2147483648
        %v2163 = vxor.u32 %v2159, 2147483648
        %v2164 = vxor.u32 %v2160, 2147483648
        %v2165 = vmul.f32 %v2161, 1.442695
        %v2166 = vpow.pop %v2165
        %v2167 = vmul.f32 %v2162, 1.442695
        %v2168 = vpow.pop %v2167
        %v2169 = vmul.f32 %v2163, 1.442695
        %v2170 = vpow.pop %v2169
        %v2171 = vmul.f32 %v2164, 1.442695
        %v2172 = vpow.pop %v2171
        %v2173 = vadd.f32 %v2166, 1.0
        %v2174 = vadd.f32 %v2168, 1.0
        %v2175 = vadd.f32 %v2170, 1.0
        %v2176 = vadd.f32 %v2172, 1.0
        %v2177 = vrcp.pop %v2173
        %v2178 = vmul.f32 %v2173, %v2177
        %v2179 = vsub.f32 1.0, %v2178
        %v2180 = vmul.f32 %v2177, %v2179
        %v2181 = vadd.f32 %v2177, %v2180
        %vm2182 = vweird.f32 %v2173
        %vm2183 = vweird.f32 %v2177
        %vm2184 = vmor %vm2182, %vm2183
        %v2185 = vsel %vm2184, %v2177, %v2181
        %v2186 = vand.u32 2147483647, %v2173
        %vm2187 = vcmp.eq.f32.partialorder %v2186, 8.507059e+37
        %v2188 = vand.u32 %v2173, 2147483648
        %v2189 = vor.u32 1.1754944e-38, %v2188
        %v2190 = vsel %vm2187, %v2189, %v2185
        %v2191 = vmul.f32 1.0, %v2190
        %v2192 = vrcp.pop %v2174
        %v2193 = vmul.f32 %v2174, %v2192
        %v2194 = vsub.f32 1.0, %v2193
        %v2195 = vmul.f32 %v2192, %v2194
        %v2196 = vadd.f32 %v2192, %v2195
        %vm2197 = vweird.f32 %v2174
        %vm2198 = vweird.f32 %v2192
        %vm2199 = vmor %vm2197, %vm2198
        %v2200 = vsel %vm2199, %v2192, %v2196
        %v2201 = vand.u32 2147483647, %v2174
        %vm2202 = vcmp.eq.f32.partialorder %v2201, 8.507059e+37
        %v2203 = vand.u32 %v2174, 2147483648
        %v2204 = vor.u32 1.1754944e-38, %v2203
        %v2205 = vsel %vm2202, %v2204, %v2200
        %v2206 = vmul.f32 1.0, %v2205
        %v2207 = vrcp.pop %v2175
        %v2208 = vmul.f32 %v2175, %v2207
        %v2209 = vsub.f32 1.0, %v2208
        %v2210 = vmul.f32 %v2207, %v2209
        %v2211 = vadd.f32 %v2207, %v2210
        %vm2212 = vweird.f32 %v2175
        %vm2213 = vweird.f32 %v2207
        %vm2214 = vmor %vm2212, %vm2213
        %v2215 = vsel %vm2214, %v2207, %v2211
        %v2216 = vand.u32 2147483647, %v2175
        %vm2217 = vcmp.eq.f32.partialorder %v2216, 8.507059e+37
        %v2218 = vand.u32 %v2175, 2147483648
        %v2219 = vor.u32 1.1754944e-38, %v2218
        %v2220 = vsel %vm2217, %v2219, %v2215
        %v2221 = vmul.f32 1.0, %v2220
        %v2222 = vrcp.pop %v2176
        %v2223 = vmul.f32 %v2176, %v2222
        %v2224 = vsub.f32 1.0, %v2223
        %v2225 = vmul.f32 %v2222, %v2224
        %v2226 = vadd.f32 %v2222, %v2225
        %vm2227 = vweird.f32 %v2176
        %vm2228 = vweird.f32 %v2222
        %vm2229 = vmor %vm2227, %vm2228
        %v2230 = vsel %vm2229, %v2222, %v2226
        %v2231 = vand.u32 2147483647, %v2176
        %vm2232 = vcmp.eq.f32.partialorder %v2231, 8.507059e+37
        %v2233 = vand.u32 %v2176, 2147483648
        %v2234 = vor.u32 1.1754944e-38, %v2233
        %v2235 = vsel %vm2232, %v2234, %v2230
        %v2236 = vmul.f32 1.0, %v2235
        %v2237 = vtanh.pop %v2157
        %v2238 = vtanh.pop %v2158
        %v2239 = vtanh.pop %v2159
        %v2240 = vtanh.pop %v2160
        %2241 = vrot.lane.b32.xlu0 %v2191, 64
        %v2242 = vpop.permute.xlu0 %2241
        %2243 = vrot.lane.b32.xlu0 %v2206, 64
        %v2244 = vpop.permute.xlu0 %2243
        %2245 = vrot.lane.b32.xlu0 %v2221, 64
        %v2246 = vpop.permute.xlu0 %2245
        %2247 = vrot.lane.b32.xlu0 %v2236, 64
        %v2248 = vpop.permute.xlu0 %2247
        %2249 = vrot.lane.b32.xlu0 %v2237, 64
        %v2250 = vpop.permute.xlu0 %2249
        %2251 = vrot.lane.b32.xlu0 %v2238, 64
        %v2252 = vpop.permute.xlu0 %2251
        %2253 = vrot.lane.b32.xlu0 %v2239, 64
        %v2254 = vpop.permute.xlu0 %2253
        %2255 = vrot.lane.b32.xlu0 %v2240, 64
        %v2256 = vpop.permute.xlu0 %2255
        %v2257 = vmul.f32 %v2191, %v2250
        %v2258 = vmul.f32 %v2206, %v2252
        %v2259 = vmul.f32 %v2221, %v2254
        %v2260 = vmul.f32 %v2236, %v2256
        %v2261 = vmul.f32 %v2242, %v2237
        %v2262 = vmul.f32 %v2244, %v2238
        %v2263 = vmul.f32 %v2246, %v2239
        %v2264 = vmul.f32 %v2248, %v2240
        %v2265 = vsel %vm1584, %v2257, %v2261
        %v2266 = vsel %vm1584, %v2258, %v2262
        %v2267 = vsel %vm1584, %v2259, %v2263
        %v2268 = vsel %vm1584, %v2260, %v2264
        %2269 = vrot.lane.b32.xlu0 %v2265, 32
        %v2270 = vpop.permute.xlu0 %2269
        %2271 = vrot.lane.b32.xlu0 %v2266, 32
        %v2272 = vpop.permute.xlu0 %2271
        %2273 = vrot.lane.b32.xlu0 %v2267, 32
        %v2274 = vpop.permute.xlu0 %2273
        %2275 = vrot.lane.b32.xlu0 %v2268, 32
        %v2276 = vpop.permute.xlu0 %2275
        %v2277 = vmul.f32 %v2191, %v2120
        %v2278 = vmul.f32 %v2206, %v2121
        %v2279 = vmul.f32 %v2221, %v2122
        %v2280 = vmul.f32 %v2236, %v2123
        %v2281 = vadd.f32 %v2277, %v2270
        %v2282 = vadd.f32 %v2278, %v2272
        %v2283 = vadd.f32 %v2279, %v2274
        %v2284 = vadd.f32 %v2280, %v2276
        %v2285 = vtanh.pop %v2281
        %v2286 = vtanh.pop %v2282
        %v2287 = vtanh.pop %v2283
        %v2288 = vtanh.pop %v2284
        %2289 = vrot.lane.b32.xlu0 %v2285, 64
        %v2290 = vpop.permute.xlu0 %2289
        %2291 = vrot.lane.b32.xlu0 %v2286, 64
        %v2292 = vpop.permute.xlu0 %2291
        %2293 = vrot.lane.b32.xlu0 %v2287, 64
        %v2294 = vpop.permute.xlu0 %2293
        %2295 = vrot.lane.b32.xlu0 %v2288, 64
        %v2296 = vpop.permute.xlu0 %2295
        %v2297 = vmul.f32 %v2191, %v2290
        %v2298 = vmul.f32 %v2206, %v2292
        %v2299 = vmul.f32 %v2221, %v2294
        %v2300 = vmul.f32 %v2236, %v2296
        %v2301 = vsel %vm1548, %v2281, %v2120
        %v2302 = vsel %vm1549, %v2282, %v2121
        %v2303 = vsel %vm1550, %v2283, %v2122
        %v2304 = vsel %vm1551, %v2284, %v2123
        %v2305 = vsel %vm1548, %v2297, %v2124
        %v2306 = vsel %vm1549, %v2298, %v2125
        %v2307 = vsel %vm1550, %v2299, %v2126
        %v2308 = vsel %vm1551, %v2300, %v2127
        %2309 = vmatpush.msra.mxu0 %v1519
        %2310 = vmatpush.msra.mxu0 %v1518
        %2311 = vmatpush.msra.mxu0 %v1517
        %2312 = vmatpush.msra.mxu0 %v1516
        %2313 = vmatpush.msra.mxu0 %v1515
        %2314 = vmatpush.msra.mxu0 %v1514
        %2315 = vmatpush.msra.mxu0 %v1513
        %2316 = vmatpush.msra.mxu0 %v1512
        %2317 = vmatpush.msra.mxu0 %v1511
        %2318 = vmatpush.msra.mxu0 %v1510
        %2319 = vmatpush.msra.mxu0 %v1509
        %2320 = vmatpush.msra.mxu0 %v1508
        %2321 = vmatpush.msra.mxu0 %v1507
        %2322 = vmatpush.msra.mxu0 %v1506
        %2323 = vmatpush.msra.mxu0 %v1505
        %2324 = vmatpush.msra.mxu0 %v1504
        %2325 = vmatmul.f32.gmra.mxu0 %v2305
        %v2326 = vpop.f32.mrf.mxu0
        %v2327 = vadd.f32 0.0, %v2326
        %2328 = vmatmul.f32.gmra.mxu0 %v2306
        %v2329 = vpop.f32.mrf.mxu0
        %v2330 = vadd.f32 0.0, %v2329
        %2331 = vmatmul.f32.gmra.mxu0 %v2307
        %v2332 = vpop.f32.mrf.mxu0
        %v2333 = vadd.f32 0.0, %v2332
        %2334 = vmatmul.f32.gmra.mxu0 %v2308
        %v2335 = vpop.f32.mrf.mxu0
        %v2336 = vadd.f32 0.0, %v2335
        %2337 = vdwg.mxu0
        %v2338 = vadd.f32 %v1409, %v2327
        %v2339 = vadd.f32 %v1412, %v2330
        %v2340 = vadd.f32 %v1415, %v2333
        %v2341 = vadd.f32 %v1418, %v2336
        %v2342 = vxor.u32 %v2338, 2147483648
        %v2343 = vxor.u32 %v2339, 2147483648
        %v2344 = vxor.u32 %v2340, 2147483648
        %v2345 = vxor.u32 %v2341, 2147483648
        %v2346 = vmul.f32 %v2342, 1.442695
        %v2347 = vpow.pop %v2346
        %v2348 = vmul.f32 %v2343, 1.442695
        %v2349 = vpow.pop %v2348
        %v2350 = vmul.f32 %v2344, 1.442695
        %v2351 = vpow.pop %v2350
        %v2352 = vmul.f32 %v2345, 1.442695
        %v2353 = vpow.pop %v2352
        %v2354 = vadd.f32 %v2347, 1.0
        %v2355 = vadd.f32 %v2349, 1.0
        %v2356 = vadd.f32 %v2351, 1.0
        %v2357 = vadd.f32 %v2353, 1.0
        %v2358 = vrcp.pop %v2354
        %v2359 = vmul.f32 %v2354, %v2358
        %v2360 = vsub.f32 1.0, %v2359
        %v2361 = vmul.f32 %v2358, %v2360
        %v2362 = vadd.f32 %v2358, %v2361
        %vm2363 = vweird.f32 %v2354
        %vm2364 = vweird.f32 %v2358
        %vm2365 = vmor %vm2363, %vm2364
        %v2366 = vsel %vm2365, %v2358, %v2362
        %v2367 = vand.u32 2147483647, %v2354
        %vm2368 = vcmp.eq.f32.partialorder %v2367, 8.507059e+37
        %v2369 = vand.u32 %v2354, 2147483648
        %v2370 = vor.u32 1.1754944e-38, %v2369
        %v2371 = vsel %vm2368, %v2370, %v2366
        %v2372 = vmul.f32 1.0, %v2371
        %v2373 = vrcp.pop %v2355
        %v2374 = vmul.f32 %v2355, %v2373
        %v2375 = vsub.f32 1.0, %v2374
        %v2376 = vmul.f32 %v2373, %v2375
        %v2377 = vadd.f32 %v2373, %v2376
        %vm2378 = vweird.f32 %v2355
        %vm2379 = vweird.f32 %v2373
        %vm2380 = vmor %vm2378, %vm2379
        %v2381 = vsel %vm2380, %v2373, %v2377
        %v2382 = vand.u32 2147483647, %v2355
        %vm2383 = vcmp.eq.f32.partialorder %v2382, 8.507059e+37
        %v2384 = vand.u32 %v2355, 2147483648
        %v2385 = vor.u32 1.1754944e-38, %v2384
        %v2386 = vsel %vm2383, %v2385, %v2381
        %v2387 = vmul.f32 1.0, %v2386
        %v2388 = vrcp.pop %v2356
        %v2389 = vmul.f32 %v2356, %v2388
        %v2390 = vsub.f32 1.0, %v2389
        %v2391 = vmul.f32 %v2388, %v2390
        %v2392 = vadd.f32 %v2388, %v2391
        %vm2393 = vweird.f32 %v2356
        %vm2394 = vweird.f32 %v2388
        %vm2395 = vmor %vm2393, %vm2394
        %v2396 = vsel %vm2395, %v2388, %v2392
        %v2397 = vand.u32 2147483647, %v2356
        %vm2398 = vcmp.eq.f32.partialorder %v2397, 8.507059e+37
        %v2399 = vand.u32 %v2356, 2147483648
        %v2400 = vor.u32 1.1754944e-38, %v2399
        %v2401 = vsel %vm2398, %v2400, %v2396
        %v2402 = vmul.f32 1.0, %v2401
        %v2403 = vrcp.pop %v2357
        %v2404 = vmul.f32 %v2357, %v2403
        %v2405 = vsub.f32 1.0, %v2404
        %v2406 = vmul.f32 %v2403, %v2405
        %v2407 = vadd.f32 %v2403, %v2406
        %vm2408 = vweird.f32 %v2357
        %vm2409 = vweird.f32 %v2403
        %vm2410 = vmor %vm2408, %vm2409
        %v2411 = vsel %vm2410, %v2403, %v2407
        %v2412 = vand.u32 2147483647, %v2357
        %vm2413 = vcmp.eq.f32.partialorder %v2412, 8.507059e+37
        %v2414 = vand.u32 %v2357, 2147483648
        %v2415 = vor.u32 1.1754944e-38, %v2414
        %v2416 = vsel %vm2413, %v2415, %v2411
        %v2417 = vmul.f32 1.0, %v2416
        %v2418 = vtanh.pop %v2338
        %v2419 = vtanh.pop %v2339
        %v2420 = vtanh.pop %v2340
        %v2421 = vtanh.pop %v2341
        %2422 = vrot.lane.b32.xlu0 %v2372, 64
        %v2423 = vpop.permute.xlu0 %2422
        %2424 = vrot.lane.b32.xlu0 %v2387, 64
        %v2425 = vpop.permute.xlu0 %2424
        %2426 = vrot.lane.b32.xlu0 %v2402, 64
        %v2427 = vpop.permute.xlu0 %2426
        %2428 = vrot.lane.b32.xlu0 %v2417, 64
        %v2429 = vpop.permute.xlu0 %2428
        %2430 = vrot.lane.b32.xlu0 %v2418, 64
        %v2431 = vpop.permute.xlu0 %2430
        %2432 = vrot.lane.b32.xlu0 %v2419, 64
        %v2433 = vpop.permute.xlu0 %2432
        %2434 = vrot.lane.b32.xlu0 %v2420, 64
        %v2435 = vpop.permute.xlu0 %2434
        %2436 = vrot.lane.b32.xlu0 %v2421, 64
        %v2437 = vpop.permute.xlu0 %2436
        %v2438 = vmul.f32 %v2372, %v2431
        %v2439 = vmul.f32 %v2387, %v2433
        %v2440 = vmul.f32 %v2402, %v2435
        %v2441 = vmul.f32 %v2417, %v2437
        %v2442 = vmul.f32 %v2423, %v2418
        %v2443 = vmul.f32 %v2425, %v2419
        %v2444 = vmul.f32 %v2427, %v2420
        %v2445 = vmul.f32 %v2429, %v2421
        %v2446 = vsel %vm1584, %v2438, %v2442
        %v2447 = vsel %vm1584, %v2439, %v2443
        %v2448 = vsel %vm1584, %v2440, %v2444
        %v2449 = vsel %vm1584, %v2441, %v2445
        %2450 = vrot.lane.b32.xlu0 %v2446, 32
        %v2451 = vpop.permute.xlu0 %2450
        %2452 = vrot.lane.b32.xlu0 %v2447, 32
        %v2453 = vpop.permute.xlu0 %2452
        %2454 = vrot.lane.b32.xlu0 %v2448, 32
        %v2455 = vpop.permute.xlu0 %2454
        %2456 = vrot.lane.b32.xlu0 %v2449, 32
        %v2457 = vpop.permute.xlu0 %2456
        %v2458 = vmul.f32 %v2372, %v2301
        %v2459 = vmul.f32 %v2387, %v2302
        %v2460 = vmul.f32 %v2402, %v2303
        %v2461 = vmul.f32 %v2417, %v2304
        %v2462 = vadd.f32 %v2458, %v2451
        %v2463 = vadd.f32 %v2459, %v2453
        %v2464 = vadd.f32 %v2460, %v2455
        %v2465 = vadd.f32 %v2461, %v2457
        %v2466 = vtanh.pop %v2462
        %v2467 = vtanh.pop %v2463
        %v2468 = vtanh.pop %v2464
        %v2469 = vtanh.pop %v2465
        %2470 = vrot.lane.b32.xlu0 %v2466, 64
        %v2471 = vpop.permute.xlu0 %2470
        %2472 = vrot.lane.b32.xlu0 %v2467, 64
        %v2473 = vpop.permute.xlu0 %2472
        %2474 = vrot.lane.b32.xlu0 %v2468, 64
        %v2475 = vpop.permute.xlu0 %2474
        %2476 = vrot.lane.b32.xlu0 %v2469, 64
        %v2477 = vpop.permute.xlu0 %2476
        %v2478 = vmul.f32 %v2372, %v2471
        %v2479 = vmul.f32 %v2387, %v2473
        %v2480 = vmul.f32 %v2402, %v2475
        %v2481 = vmul.f32 %v2417, %v2477
        %v2482 = vsel %vm1552, %v2462, %v2301
        %v2483 = vsel %vm1553, %v2463, %v2302
        %v2484 = vsel %vm1554, %v2464, %v2303
        %v2485 = vsel %vm1555, %v2465, %v2304
        %v2486 = vsel %vm1552, %v2478, %v2305
        %v2487 = vsel %vm1553, %v2479, %v2306
        %v2488 = vsel %vm1554, %v2480, %v2307
        %v2489 = vsel %vm1555, %v2481, %v2308
        %2490 = vmatpush.msra.mxu0 %v1519
        %2491 = vmatpush.msra.mxu0 %v1518
        %2492 = vmatpush.msra.mxu0 %v1517
        %2493 = vmatpush.msra.mxu0 %v1516
        %2494 = vmatpush.msra.mxu0 %v1515
        %2495 = vmatpush.msra.mxu0 %v1514
        %2496 = vmatpush.msra.mxu0 %v1513
        %2497 = vmatpush.msra.mxu0 %v1512
        %2498 = vmatpush.msra.mxu0 %v1511
        %2499 = vmatpush.msra.mxu0 %v1510
        %2500 = vmatpush.msra.mxu0 %v1509
        %2501 = vmatpush.msra.mxu0 %v1508
        %2502 = vmatpush.msra.mxu0 %v1507
        %2503 = vmatpush.msra.mxu0 %v1506
        %2504 = vmatpush.msra.mxu0 %v1505
        %2505 = vmatpush.msra.mxu0 %v1504
        %2506 = vmatmul.f32.gmra.mxu0 %v2486
        %v2507 = vpop.f32.mrf.mxu0
        %v2508 = vadd.f32 0.0, %v2507
        %2509 = vmatmul.f32.gmra.mxu0 %v2487
        %v2510 = vpop.f32.mrf.mxu0
        %v2511 = vadd.f32 0.0, %v2510
        %2512 = vmatmul.f32.gmra.mxu0 %v2488
        %v2513 = vpop.f32.mrf.mxu0
        %v2514 = vadd.f32 0.0, %v2513
        %2515 = vmatmul.f32.gmra.mxu0 %v2489
        %v2516 = vpop.f32.mrf.mxu0
        %v2517 = vadd.f32 0.0, %v2516
        %2518 = vdwg.mxu0
        %v2519 = vadd.f32 %v1421, %v2508
        %v2520 = vadd.f32 %v1424, %v2511
        %v2521 = vadd.f32 %v1427, %v2514
        %v2522 = vadd.f32 %v1430, %v2517
        %v2523 = vxor.u32 %v2519, 2147483648
        %v2524 = vxor.u32 %v2520, 2147483648
        %v2525 = vxor.u32 %v2521, 2147483648
        %v2526 = vxor.u32 %v2522, 2147483648
        %v2527 = vmul.f32 %v2523, 1.442695
        %v2528 = vpow.pop %v2527
        %v2529 = vmul.f32 %v2524, 1.442695
        %v2530 = vpow.pop %v2529
        %v2531 = vmul.f32 %v2525, 1.442695
        %v2532 = vpow.pop %v2531
        %v2533 = vmul.f32 %v2526, 1.442695
        %v2534 = vpow.pop %v2533
        %v2535 = vadd.f32 %v2528, 1.0
        %v2536 = vadd.f32 %v2530, 1.0
        %v2537 = vadd.f32 %v2532, 1.0
        %v2538 = vadd.f32 %v2534, 1.0
        %v2539 = vrcp.pop %v2535
        %v2540 = vmul.f32 %v2535, %v2539
        %v2541 = vsub.f32 1.0, %v2540
        %v2542 = vmul.f32 %v2539, %v2541
        %v2543 = vadd.f32 %v2539, %v2542
        %vm2544 = vweird.f32 %v2535
        %vm2545 = vweird.f32 %v2539
        %vm2546 = vmor %vm2544, %vm2545
        %v2547 = vsel %vm2546, %v2539, %v2543
        %v2548 = vand.u32 2147483647, %v2535
        %vm2549 = vcmp.eq.f32.partialorder %v2548, 8.507059e+37
        %v2550 = vand.u32 %v2535, 2147483648
        %v2551 = vor.u32 1.1754944e-38, %v2550
        %v2552 = vsel %vm2549, %v2551, %v2547
        %v2553 = vmul.f32 1.0, %v2552
        %v2554 = vrcp.pop %v2536
        %v2555 = vmul.f32 %v2536, %v2554
        %v2556 = vsub.f32 1.0, %v2555
        %v2557 = vmul.f32 %v2554, %v2556
        %v2558 = vadd.f32 %v2554, %v2557
        %vm2559 = vweird.f32 %v2536
        %vm2560 = vweird.f32 %v2554
        %vm2561 = vmor %vm2559, %vm2560
        %v2562 = vsel %vm2561, %v2554, %v2558
        %v2563 = vand.u32 2147483647, %v2536
        %vm2564 = vcmp.eq.f32.partialorder %v2563, 8.507059e+37
        %v2565 = vand.u32 %v2536, 2147483648
        %v2566 = vor.u32 1.1754944e-38, %v2565
        %v2567 = vsel %vm2564, %v2566, %v2562
        %v2568 = vmul.f32 1.0, %v2567
        %v2569 = vrcp.pop %v2537
        %v2570 = vmul.f32 %v2537, %v2569
        %v2571 = vsub.f32 1.0, %v2570
        %v2572 = vmul.f32 %v2569, %v2571
        %v2573 = vadd.f32 %v2569, %v2572
        %vm2574 = vweird.f32 %v2537
        %vm2575 = vweird.f32 %v2569
        %vm2576 = vmor %vm2574, %vm2575
        %v2577 = vsel %vm2576, %v2569, %v2573
        %v2578 = vand.u32 2147483647, %v2537
        %vm2579 = vcmp.eq.f32.partialorder %v2578, 8.507059e+37
        %v2580 = vand.u32 %v2537, 2147483648
        %v2581 = vor.u32 1.1754944e-38, %v2580
        %v2582 = vsel %vm2579, %v2581, %v2577
        %v2583 = vmul.f32 1.0, %v2582
        %v2584 = vrcp.pop %v2538
        %v2585 = vmul.f32 %v2538, %v2584
        %v2586 = vsub.f32 1.0, %v2585
        %v2587 = vmul.f32 %v2584, %v2586
        %v2588 = vadd.f32 %v2584, %v2587
        %vm2589 = vweird.f32 %v2538
        %vm2590 = vweird.f32 %v2584
        %vm2591 = vmor %vm2589, %vm2590
        %v2592 = vsel %vm2591, %v2584, %v2588
        %v2593 = vand.u32 2147483647, %v2538
        %vm2594 = vcmp.eq.f32.partialorder %v2593, 8.507059e+37
        %v2595 = vand.u32 %v2538, 2147483648
        %v2596 = vor.u32 1.1754944e-38, %v2595
        %v2597 = vsel %vm2594, %v2596, %v2592
        %v2598 = vmul.f32 1.0, %v2597
        %v2599 = vtanh.pop %v2519
        %v2600 = vtanh.pop %v2520
        %v2601 = vtanh.pop %v2521
        %v2602 = vtanh.pop %v2522
        %2603 = vrot.lane.b32.xlu0 %v2553, 64
        %v2604 = vpop.permute.xlu0 %2603
        %2605 = vrot.lane.b32.xlu0 %v2568, 64
        %v2606 = vpop.permute.xlu0 %2605
        %2607 = vrot.lane.b32.xlu0 %v2583, 64
        %v2608 = vpop.permute.xlu0 %2607
        %2609 = vrot.lane.b32.xlu0 %v2598, 64
        %v2610 = vpop.permute.xlu0 %2609
        %2611 = vrot.lane.b32.xlu0 %v2599, 64
        %v2612 = vpop.permute.xlu0 %2611
        %2613 = vrot.lane.b32.xlu0 %v2600, 64
        %v2614 = vpop.permute.xlu0 %2613
        %2615 = vrot.lane.b32.xlu0 %v2601, 64
        %v2616 = vpop.permute.xlu0 %2615
        %2617 = vrot.lane.b32.xlu0 %v2602, 64
        %v2618 = vpop.permute.xlu0 %2617
        %v2619 = vmul.f32 %v2553, %v2612
        %v2620 = vmul.f32 %v2568, %v2614
        %v2621 = vmul.f32 %v2583, %v2616
        %v2622 = vmul.f32 %v2598, %v2618
        %v2623 = vmul.f32 %v2604, %v2599
        %v2624 = vmul.f32 %v2606, %v2600
        %v2625 = vmul.f32 %v2608, %v2601
        %v2626 = vmul.f32 %v2610, %v2602
        %v2627 = vsel %vm1584, %v2619, %v2623
        %v2628 = vsel %vm1584, %v2620, %v2624
        %v2629 = vsel %vm1584, %v2621, %v2625
        %v2630 = vsel %vm1584, %v2622, %v2626
        %2631 = vrot.lane.b32.xlu0 %v2627, 32
        %v2632 = vpop.permute.xlu0 %2631
        %2633 = vrot.lane.b32.xlu0 %v2628, 32
        %v2634 = vpop.permute.xlu0 %2633
        %2635 = vrot.lane.b32.xlu0 %v2629, 32
        %v2636 = vpop.permute.xlu0 %2635
        %2637 = vrot.lane.b32.xlu0 %v2630, 32
        %v2638 = vpop.permute.xlu0 %2637
        %v2639 = vmul.f32 %v2553, %v2482
        %v2640 = vmul.f32 %v2568, %v2483
        %v2641 = vmul.f32 %v2583, %v2484
        %v2642 = vmul.f32 %v2598, %v2485
        %v2643 = vadd.f32 %v2639, %v2632
        %v2644 = vadd.f32 %v2640, %v2634
        %v2645 = vadd.f32 %v2641, %v2636
        %v2646 = vadd.f32 %v2642, %v2638
        %v2647 = vtanh.pop %v2643
        %v2648 = vtanh.pop %v2644
        %v2649 = vtanh.pop %v2645
        %v2650 = vtanh.pop %v2646
        %2651 = vrot.lane.b32.xlu0 %v2647, 64
        %v2652 = vpop.permute.xlu0 %2651
        %2653 = vrot.lane.b32.xlu0 %v2648, 64
        %v2654 = vpop.permute.xlu0 %2653
        %2655 = vrot.lane.b32.xlu0 %v2649, 64
        %v2656 = vpop.permute.xlu0 %2655
        %2657 = vrot.lane.b32.xlu0 %v2650, 64
        %v2658 = vpop.permute.xlu0 %2657
        %v2659 = vmul.f32 %v2553, %v2652
        %v2660 = vmul.f32 %v2568, %v2654
        %v2661 = vmul.f32 %v2583, %v2656
        %v2662 = vmul.f32 %v2598, %v2658
        %v2663 = vsel %vm1556, %v2643, %v2482
        %v2664 = vsel %vm1557, %v2644, %v2483
        %v2665 = vsel %vm1558, %v2645, %v2484
        %v2666 = vsel %vm1559, %v2646, %v2485
        %v2667 = vsel %vm1556, %v2659, %v2486
        %v2668 = vsel %vm1557, %v2660, %v2487
        %v2669 = vsel %vm1558, %v2661, %v2488
        %v2670 = vsel %vm1559, %v2662, %v2489
        %2671 = vmatpush.msra.mxu0 %v1519
        %2672 = vmatpush.msra.mxu0 %v1518
        %2673 = vmatpush.msra.mxu0 %v1517
        %2674 = vmatpush.msra.mxu0 %v1516
        %2675 = vmatpush.msra.mxu0 %v1515
        %2676 = vmatpush.msra.mxu0 %v1514
        %2677 = vmatpush.msra.mxu0 %v1513
        %2678 = vmatpush.msra.mxu0 %v1512
        %2679 = vmatpush.msra.mxu0 %v1511
        %2680 = vmatpush.msra.mxu0 %v1510
        %2681 = vmatpush.msra.mxu0 %v1509
        %2682 = vmatpush.msra.mxu0 %v1508
        %2683 = vmatpush.msra.mxu0 %v1507
        %2684 = vmatpush.msra.mxu0 %v1506
        %2685 = vmatpush.msra.mxu0 %v1505
        %2686 = vmatpush.msra.mxu0 %v1504
        %2687 = vmatmul.f32.gmra.mxu0 %v2667
        %v2688 = vpop.f32.mrf.mxu0
        %v2689 = vadd.f32 0.0, %v2688
        %2690 = vmatmul.f32.gmra.mxu0 %v2668
        %v2691 = vpop.f32.mrf.mxu0
        %v2692 = vadd.f32 0.0, %v2691
        %2693 = vmatmul.f32.gmra.mxu0 %v2669
        %v2694 = vpop.f32.mrf.mxu0
        %v2695 = vadd.f32 0.0, %v2694
        %2696 = vmatmul.f32.gmra.mxu0 %v2670
        %v2697 = vpop.f32.mrf.mxu0
        %v2698 = vadd.f32 0.0, %v2697
        %2699 = vdwg.mxu0
        %v2700 = vadd.f32 %v1433, %v2689
        %v2701 = vadd.f32 %v1436, %v2692
        %v2702 = vadd.f32 %v1439, %v2695
        %v2703 = vadd.f32 %v1442, %v2698
        %v2704 = vxor.u32 %v2700, 2147483648
        %v2705 = vxor.u32 %v2701, 2147483648
        %v2706 = vxor.u32 %v2702, 2147483648
        %v2707 = vxor.u32 %v2703, 2147483648
        %v2708 = vmul.f32 %v2704, 1.442695
        %v2709 = vpow.pop %v2708
        %v2710 = vmul.f32 %v2705, 1.442695
        %v2711 = vpow.pop %v2710
        %v2712 = vmul.f32 %v2706, 1.442695
        %v2713 = vpow.pop %v2712
        %v2714 = vmul.f32 %v2707, 1.442695
        %v2715 = vpow.pop %v2714
        %v2716 = vadd.f32 %v2709, 1.0
        %v2717 = vadd.f32 %v2711, 1.0
        %v2718 = vadd.f32 %v2713, 1.0
        %v2719 = vadd.f32 %v2715, 1.0
        %v2720 = vrcp.pop %v2716
        %v2721 = vmul.f32 %v2716, %v2720
        %v2722 = vsub.f32 1.0, %v2721
        %v2723 = vmul.f32 %v2720, %v2722
        %v2724 = vadd.f32 %v2720, %v2723
        %vm2725 = vweird.f32 %v2716
        %vm2726 = vweird.f32 %v2720
        %vm2727 = vmor %vm2725, %vm2726
        %v2728 = vsel %vm2727, %v2720, %v2724
        %v2729 = vand.u32 2147483647, %v2716
        %vm2730 = vcmp.eq.f32.partialorder %v2729, 8.507059e+37
        %v2731 = vand.u32 %v2716, 2147483648
        %v2732 = vor.u32 1.1754944e-38, %v2731
        %v2733 = vsel %vm2730, %v2732, %v2728
        %v2734 = vmul.f32 1.0, %v2733
        %v2735 = vrcp.pop %v2717
        %v2736 = vmul.f32 %v2717, %v2735
        %v2737 = vsub.f32 1.0, %v2736
        %v2738 = vmul.f32 %v2735, %v2737
        %v2739 = vadd.f32 %v2735, %v2738
        %vm2740 = vweird.f32 %v2717
        %vm2741 = vweird.f32 %v2735
        %vm2742 = vmor %vm2740, %vm2741
        %v2743 = vsel %vm2742, %v2735, %v2739
        %v2744 = vand.u32 2147483647, %v2717
        %vm2745 = vcmp.eq.f32.partialorder %v2744, 8.507059e+37
        %v2746 = vand.u32 %v2717, 2147483648
        %v2747 = vor.u32 1.1754944e-38, %v2746
        %v2748 = vsel %vm2745, %v2747, %v2743
        %v2749 = vmul.f32 1.0, %v2748
        %v2750 = vrcp.pop %v2718
        %v2751 = vmul.f32 %v2718, %v2750
        %v2752 = vsub.f32 1.0, %v2751
        %v2753 = vmul.f32 %v2750, %v2752
        %v2754 = vadd.f32 %v2750, %v2753
        %vm2755 = vweird.f32 %v2718
        %vm2756 = vweird.f32 %v2750
        %vm2757 = vmor %vm2755, %vm2756
        %v2758 = vsel %vm2757, %v2750, %v2754
        %v2759 = vand.u32 2147483647, %v2718
        %vm2760 = vcmp.eq.f32.partialorder %v2759, 8.507059e+37
        %v2761 = vand.u32 %v2718, 2147483648
        %v2762 = vor.u32 1.1754944e-38, %v2761
        %v2763 = vsel %vm2760, %v2762, %v2758
        %v2764 = vmul.f32 1.0, %v2763
        %v2765 = vrcp.pop %v2719
        %v2766 = vmul.f32 %v2719, %v2765
        %v2767 = vsub.f32 1.0, %v2766
        %v2768 = vmul.f32 %v2765, %v2767
        %v2769 = vadd.f32 %v2765, %v2768
        %vm2770 = vweird.f32 %v2719
        %vm2771 = vweird.f32 %v2765
        %vm2772 = vmor %vm2770, %vm2771
        %v2773 = vsel %vm2772, %v2765, %v2769
        %v2774 = vand.u32 2147483647, %v2719
        %vm2775 = vcmp.eq.f32.partialorder %v2774, 8.507059e+37
        %v2776 = vand.u32 %v2719, 2147483648
        %v2777 = vor.u32 1.1754944e-38, %v2776
        %v2778 = vsel %vm2775, %v2777, %v2773
        %v2779 = vmul.f32 1.0, %v2778
        %v2780 = vtanh.pop %v2700
        %v2781 = vtanh.pop %v2701
        %v2782 = vtanh.pop %v2702
        %v2783 = vtanh.pop %v2703
        %2784 = vrot.lane.b32.xlu0 %v2734, 64
        %v2785 = vpop.permute.xlu0 %2784
        %2786 = vrot.lane.b32.xlu0 %v2749, 64
        %v2787 = vpop.permute.xlu0 %2786
        %2788 = vrot.lane.b32.xlu0 %v2764, 64
        %v2789 = vpop.permute.xlu0 %2788
        %2790 = vrot.lane.b32.xlu0 %v2779, 64
        %v2791 = vpop.permute.xlu0 %2790
        %2792 = vrot.lane.b32.xlu0 %v2780, 64
        %v2793 = vpop.permute.xlu0 %2792
        %2794 = vrot.lane.b32.xlu0 %v2781, 64
        %v2795 = vpop.permute.xlu0 %2794
        %2796 = vrot.lane.b32.xlu0 %v2782, 64
        %v2797 = vpop.permute.xlu0 %2796
        %2798 = vrot.lane.b32.xlu0 %v2783, 64
        %v2799 = vpop.permute.xlu0 %2798
        %v2800 = vmul.f32 %v2734, %v2793
        %v2801 = vmul.f32 %v2749, %v2795
        %v2802 = vmul.f32 %v2764, %v2797
        %v2803 = vmul.f32 %v2779, %v2799
        %v2804 = vmul.f32 %v2785, %v2780
        %v2805 = vmul.f32 %v2787, %v2781
        %v2806 = vmul.f32 %v2789, %v2782
        %v2807 = vmul.f32 %v2791, %v2783
        %v2808 = vsel %vm1584, %v2800, %v2804
        %v2809 = vsel %vm1584, %v2801, %v2805
        %v2810 = vsel %vm1584, %v2802, %v2806
        %v2811 = vsel %vm1584, %v2803, %v2807
        %2812 = vrot.lane.b32.xlu0 %v2808, 32
        %v2813 = vpop.permute.xlu0 %2812
        %2814 = vrot.lane.b32.xlu0 %v2809, 32
        %v2815 = vpop.permute.xlu0 %2814
        %2816 = vrot.lane.b32.xlu0 %v2810, 32
        %v2817 = vpop.permute.xlu0 %2816
        %2818 = vrot.lane.b32.xlu0 %v2811, 32
        %v2819 = vpop.permute.xlu0 %2818
        %v2820 = vmul.f32 %v2734, %v2663
        %v2821 = vmul.f32 %v2749, %v2664
        %v2822 = vmul.f32 %v2764, %v2665
        %v2823 = vmul.f32 %v2779, %v2666
        %v2824 = vadd.f32 %v2820, %v2813
        %v2825 = vadd.f32 %v2821, %v2815
        %v2826 = vadd.f32 %v2822, %v2817
        %v2827 = vadd.f32 %v2823, %v2819
        %v2828 = vtanh.pop %v2824
        %v2829 = vtanh.pop %v2825
        %v2830 = vtanh.pop %v2826
        %v2831 = vtanh.pop %v2827
        %2832 = vrot.lane.b32.xlu0 %v2828, 64
        %v2833 = vpop.permute.xlu0 %2832
        %2834 = vrot.lane.b32.xlu0 %v2829, 64
        %v2835 = vpop.permute.xlu0 %2834
        %2836 = vrot.lane.b32.xlu0 %v2830, 64
        %v2837 = vpop.permute.xlu0 %2836
        %2838 = vrot.lane.b32.xlu0 %v2831, 64
        %v2839 = vpop.permute.xlu0 %2838
        %v2840 = vmul.f32 %v2734, %v2833
        %v2841 = vmul.f32 %v2749, %v2835
        %v2842 = vmul.f32 %v2764, %v2837
        %v2843 = vmul.f32 %v2779, %v2839
        %v2844 = vsel %vm1560, %v2824, %v2663
        %v2845 = vsel %vm1561, %v2825, %v2664
        %v2846 = vsel %vm1562, %v2826, %v2665
        %v2847 = vsel %vm1563, %v2827, %v2666
        %v2848 = vsel %vm1560, %v2840, %v2667
        %v2849 = vsel %vm1561, %v2841, %v2668
        %v2850 = vsel %vm1562, %v2842, %v2669
        %v2851 = vsel %vm1563, %v2843, %v2670
        %2852 = vmatpush.msra.mxu0 %v1519
        %2853 = vmatpush.msra.mxu0 %v1518
        %2854 = vmatpush.msra.mxu0 %v1517
        %2855 = vmatpush.msra.mxu0 %v1516
        %2856 = vmatpush.msra.mxu0 %v1515
        %2857 = vmatpush.msra.mxu0 %v1514
        %2858 = vmatpush.msra.mxu0 %v1513
        %2859 = vmatpush.msra.mxu0 %v1512
        %2860 = vmatpush.msra.mxu0 %v1511
        %2861 = vmatpush.msra.mxu0 %v1510
        %2862 = vmatpush.msra.mxu0 %v1509
        %2863 = vmatpush.msra.mxu0 %v1508
        %2864 = vmatpush.msra.mxu0 %v1507
        %2865 = vmatpush.msra.mxu0 %v1506
        %2866 = vmatpush.msra.mxu0 %v1505
        %2867 = vmatpush.msra.mxu0 %v1504
        %2868 = vmatmul.f32.gmra.mxu0 %v2848
        %v2869 = vpop.f32.mrf.mxu0
        %v2870 = vadd.f32 0.0, %v2869
        %2871 = vmatmul.f32.gmra.mxu0 %v2849
        %v2872 = vpop.f32.mrf.mxu0
        %v2873 = vadd.f32 0.0, %v2872
        %2874 = vmatmul.f32.gmra.mxu0 %v2850
        %v2875 = vpop.f32.mrf.mxu0
        %v2876 = vadd.f32 0.0, %v2875
        %2877 = vmatmul.f32.gmra.mxu0 %v2851
        %v2878 = vpop.f32.mrf.mxu0
        %v2879 = vadd.f32 0.0, %v2878
        %2880 = vdwg.mxu0
        %v2881 = vadd.f32 %v1445, %v2870
        %v2882 = vadd.f32 %v1448, %v2873
        %v2883 = vadd.f32 %v1451, %v2876
        %v2884 = vadd.f32 %v1454, %v2879
        %v2885 = vxor.u32 %v2881, 2147483648
        %v2886 = vxor.u32 %v2882, 2147483648
        %v2887 = vxor.u32 %v2883, 2147483648
        %v2888 = vxor.u32 %v2884, 2147483648
        %v2889 = vmul.f32 %v2885, 1.442695
        %v2890 = vpow.pop %v2889
        %v2891 = vmul.f32 %v2886, 1.442695
        %v2892 = vpow.pop %v2891
        %v2893 = vmul.f32 %v2887, 1.442695
        %v2894 = vpow.pop %v2893
        %v2895 = vmul.f32 %v2888, 1.442695
        %v2896 = vpow.pop %v2895
        %v2897 = vadd.f32 %v2890, 1.0
        %v2898 = vadd.f32 %v2892, 1.0
        %v2899 = vadd.f32 %v2894, 1.0
        %v2900 = vadd.f32 %v2896, 1.0
        %v2901 = vrcp.pop %v2897
        %v2902 = vmul.f32 %v2897, %v2901
        %v2903 = vsub.f32 1.0, %v2902
        %v2904 = vmul.f32 %v2901, %v2903
        %v2905 = vadd.f32 %v2901, %v2904
        %vm2906 = vweird.f32 %v2897
        %vm2907 = vweird.f32 %v2901
        %vm2908 = vmor %vm2906, %vm2907
        %v2909 = vsel %vm2908, %v2901, %v2905
        %v2910 = vand.u32 2147483647, %v2897
        %vm2911 = vcmp.eq.f32.partialorder %v2910, 8.507059e+37
        %v2912 = vand.u32 %v2897, 2147483648
        %v2913 = vor.u32 1.1754944e-38, %v2912
        %v2914 = vsel %vm2911, %v2913, %v2909
        %v2915 = vmul.f32 1.0, %v2914
        %v2916 = vrcp.pop %v2898
        %v2917 = vmul.f32 %v2898, %v2916
        %v2918 = vsub.f32 1.0, %v2917
        %v2919 = vmul.f32 %v2916, %v2918
        %v2920 = vadd.f32 %v2916, %v2919
        %vm2921 = vweird.f32 %v2898
        %vm2922 = vweird.f32 %v2916
        %vm2923 = vmor %vm2921, %vm2922
        %v2924 = vsel %vm2923, %v2916, %v2920
        %v2925 = vand.u32 2147483647, %v2898
        %vm2926 = vcmp.eq.f32.partialorder %v2925, 8.507059e+37
        %v2927 = vand.u32 %v2898, 2147483648
        %v2928 = vor.u32 1.1754944e-38, %v2927
        %v2929 = vsel %vm2926, %v2928, %v2924
        %v2930 = vmul.f32 1.0, %v2929
        %v2931 = vrcp.pop %v2899
        %v2932 = vmul.f32 %v2899, %v2931
        %v2933 = vsub.f32 1.0, %v2932
        %v2934 = vmul.f32 %v2931, %v2933
        %v2935 = vadd.f32 %v2931, %v2934
        %vm2936 = vweird.f32 %v2899
        %vm2937 = vweird.f32 %v2931
        %vm2938 = vmor %vm2936, %vm2937
        %v2939 = vsel %vm2938, %v2931, %v2935
        %v2940 = vand.u32 2147483647, %v2899
        %vm2941 = vcmp.eq.f32.partialorder %v2940, 8.507059e+37
        %v2942 = vand.u32 %v2899, 2147483648
        %v2943 = vor.u32 1.1754944e-38, %v2942
        %v2944 = vsel %vm2941, %v2943, %v2939
        %v2945 = vmul.f32 1.0, %v2944
        %v2946 = vrcp.pop %v2900
        %v2947 = vmul.f32 %v2900, %v2946
        %v2948 = vsub.f32 1.0, %v2947
        %v2949 = vmul.f32 %v2946, %v2948
        %v2950 = vadd.f32 %v2946, %v2949
        %vm2951 = vweird.f32 %v2900
        %vm2952 = vweird.f32 %v2946
        %vm2953 = vmor %vm2951, %vm2952
        %v2954 = vsel %vm2953, %v2946, %v2950
        %v2955 = vand.u32 2147483647, %v2900
        %vm2956 = vcmp.eq.f32.partialorder %v2955, 8.507059e+37
        %v2957 = vand.u32 %v2900, 2147483648
        %v2958 = vor.u32 1.1754944e-38, %v2957
        %v2959 = vsel %vm2956, %v2958, %v2954
        %v2960 = vmul.f32 1.0, %v2959
        %v2961 = vtanh.pop %v2881
        %v2962 = vtanh.pop %v2882
        %v2963 = vtanh.pop %v2883
        %v2964 = vtanh.pop %v2884
        %2965 = vrot.lane.b32.xlu0 %v2915, 64
        %v2966 = vpop.permute.xlu0 %2965
        %2967 = vrot.lane.b32.xlu0 %v2930, 64
        %v2968 = vpop.permute.xlu0 %2967
        %2969 = vrot.lane.b32.xlu0 %v2945, 64
        %v2970 = vpop.permute.xlu0 %2969
        %2971 = vrot.lane.b32.xlu0 %v2960, 64
        %v2972 = vpop.permute.xlu0 %2971
        %2973 = vrot.lane.b32.xlu0 %v2961, 64
        %v2974 = vpop.permute.xlu0 %2973
        %2975 = vrot.lane.b32.xlu0 %v2962, 64
        %v2976 = vpop.permute.xlu0 %2975
        %2977 = vrot.lane.b32.xlu0 %v2963, 64
        %v2978 = vpop.permute.xlu0 %2977
        %2979 = vrot.lane.b32.xlu0 %v2964, 64
        %v2980 = vpop.permute.xlu0 %2979
        %v2981 = vmul.f32 %v2915, %v2974
        %v2982 = vmul.f32 %v2930, %v2976
        %v2983 = vmul.f32 %v2945, %v2978
        %v2984 = vmul.f32 %v2960, %v2980
        %v2985 = vmul.f32 %v2966, %v2961
        %v2986 = vmul.f32 %v2968, %v2962
        %v2987 = vmul.f32 %v2970, %v2963
        %v2988 = vmul.f32 %v2972, %v2964
        %v2989 = vsel %vm1584, %v2981, %v2985
        %v2990 = vsel %vm1584, %v2982, %v2986
        %v2991 = vsel %vm1584, %v2983, %v2987
        %v2992 = vsel %vm1584, %v2984, %v2988
        %2993 = vrot.lane.b32.xlu0 %v2989, 32
        %v2994 = vpop.permute.xlu0 %2993
        %2995 = vrot.lane.b32.xlu0 %v2990, 32
        %v2996 = vpop.permute.xlu0 %2995
        %2997 = vrot.lane.b32.xlu0 %v2991, 32
        %v2998 = vpop.permute.xlu0 %2997
        %2999 = vrot.lane.b32.xlu0 %v2992, 32
        %v3000 = vpop.permute.xlu0 %2999
        %v3001 = vmul.f32 %v2915, %v2844
        %v3002 = vmul.f32 %v2930, %v2845
        %v3003 = vmul.f32 %v2945, %v2846
        %v3004 = vmul.f32 %v2960, %v2847
        %v3005 = vadd.f32 %v3001, %v2994
        %v3006 = vadd.f32 %v3002, %v2996
        %v3007 = vadd.f32 %v3003, %v2998
        %v3008 = vadd.f32 %v3004, %v3000
        %v3009 = vtanh.pop %v3005
        %v3010 = vtanh.pop %v3006
        %v3011 = vtanh.pop %v3007
        %v3012 = vtanh.pop %v3008
        %3013 = vrot.lane.b32.xlu0 %v3009, 64
        %v3014 = vpop.permute.xlu0 %3013
        %3015 = vrot.lane.b32.xlu0 %v3010, 64
        %v3016 = vpop.permute.xlu0 %3015
        %3017 = vrot.lane.b32.xlu0 %v3011, 64
        %v3018 = vpop.permute.xlu0 %3017
        %3019 = vrot.lane.b32.xlu0 %v3012, 64
        %v3020 = vpop.permute.xlu0 %3019
        %v3021 = vmul.f32 %v2915, %v3014
        %v3022 = vmul.f32 %v2930, %v3016
        %v3023 = vmul.f32 %v2945, %v3018
        %v3024 = vmul.f32 %v2960, %v3020
        %v3025 = vsel %vm1564, %v3005, %v2844
        %v3026 = vsel %vm1565, %v3006, %v2845
        %v3027 = vsel %vm1566, %v3007, %v2846
        %v3028 = vsel %vm1567, %v3008, %v2847
        %v3029 = vsel %vm1564, %v3021, %v2848
        %v3030 = vsel %vm1565, %v3022, %v2849
        %v3031 = vsel %vm1566, %v3023, %v2850
        %v3032 = vsel %vm1567, %v3024, %v2851
        %3033 = vmatpush.msra.mxu0 %v1519
        %3034 = vmatpush.msra.mxu0 %v1518
        %3035 = vmatpush.msra.mxu0 %v1517
        %3036 = vmatpush.msra.mxu0 %v1516
        %3037 = vmatpush.msra.mxu0 %v1515
        %3038 = vmatpush.msra.mxu0 %v1514
        %3039 = vmatpush.msra.mxu0 %v1513
        %3040 = vmatpush.msra.mxu0 %v1512
        %3041 = vmatpush.msra.mxu0 %v1511
        %3042 = vmatpush.msra.mxu0 %v1510
        %3043 = vmatpush.msra.mxu0 %v1509
        %3044 = vmatpush.msra.mxu0 %v1508
        %3045 = vmatpush.msra.mxu0 %v1507
        %3046 = vmatpush.msra.mxu0 %v1506
        %3047 = vmatpush.msra.mxu0 %v1505
        %3048 = vmatpush.msra.mxu0 %v1504
        %3049 = vmatmul.f32.gmra.mxu0 %v3029
        %v3050 = vpop.f32.mrf.mxu0
        %v3051 = vadd.f32 0.0, %v3050
        %3052 = vmatmul.f32.gmra.mxu0 %v3030
        %v3053 = vpop.f32.mrf.mxu0
        %v3054 = vadd.f32 0.0, %v3053
        %3055 = vmatmul.f32.gmra.mxu0 %v3031
        %v3056 = vpop.f32.mrf.mxu0
        %v3057 = vadd.f32 0.0, %v3056
        %3058 = vmatmul.f32.gmra.mxu0 %v3032
        %v3059 = vpop.f32.mrf.mxu0
        %v3060 = vadd.f32 0.0, %v3059
        %3061 = vdwg.mxu0
        %v3062 = vadd.f32 %v1457, %v3051
        %v3063 = vadd.f32 %v1460, %v3054
        %v3064 = vadd.f32 %v1463, %v3057
        %v3065 = vadd.f32 %v1466, %v3060
        %v3066 = vxor.u32 %v3062, 2147483648
        %v3067 = vxor.u32 %v3063, 2147483648
        %v3068 = vxor.u32 %v3064, 2147483648
        %v3069 = vxor.u32 %v3065, 2147483648
        %v3070 = vmul.f32 %v3066, 1.442695
        %v3071 = vpow.pop %v3070
        %v3072 = vmul.f32 %v3067, 1.442695
        %v3073 = vpow.pop %v3072
        %v3074 = vmul.f32 %v3068, 1.442695
        %v3075 = vpow.pop %v3074
        %v3076 = vmul.f32 %v3069, 1.442695
        %v3077 = vpow.pop %v3076
        %v3078 = vadd.f32 %v3071, 1.0
        %v3079 = vadd.f32 %v3073, 1.0
        %v3080 = vadd.f32 %v3075, 1.0
        %v3081 = vadd.f32 %v3077, 1.0
        %v3082 = vrcp.pop %v3078
        %v3083 = vmul.f32 %v3078, %v3082
        %v3084 = vsub.f32 1.0, %v3083
        %v3085 = vmul.f32 %v3082, %v3084
        %v3086 = vadd.f32 %v3082, %v3085
        %vm3087 = vweird.f32 %v3078
        %vm3088 = vweird.f32 %v3082
        %vm3089 = vmor %vm3087, %vm3088
        %v3090 = vsel %vm3089, %v3082, %v3086
        %v3091 = vand.u32 2147483647, %v3078
        %vm3092 = vcmp.eq.f32.partialorder %v3091, 8.507059e+37
        %v3093 = vand.u32 %v3078, 2147483648
        %v3094 = vor.u32 1.1754944e-38, %v3093
        %v3095 = vsel %vm3092, %v3094, %v3090
        %v3096 = vmul.f32 1.0, %v3095
        %v3097 = vrcp.pop %v3079
        %v3098 = vmul.f32 %v3079, %v3097
        %v3099 = vsub.f32 1.0, %v3098
        %v3100 = vmul.f32 %v3097, %v3099
        %v3101 = vadd.f32 %v3097, %v3100
        %vm3102 = vweird.f32 %v3079
        %vm3103 = vweird.f32 %v3097
        %vm3104 = vmor %vm3102, %vm3103
        %v3105 = vsel %vm3104, %v3097, %v3101
        %v3106 = vand.u32 2147483647, %v3079
        %vm3107 = vcmp.eq.f32.partialorder %v3106, 8.507059e+37
        %v3108 = vand.u32 %v3079, 2147483648
        %v3109 = vor.u32 1.1754944e-38, %v3108
        %v3110 = vsel %vm3107, %v3109, %v3105
        %v3111 = vmul.f32 1.0, %v3110
        %v3112 = vrcp.pop %v3080
        %v3113 = vmul.f32 %v3080, %v3112
        %v3114 = vsub.f32 1.0, %v3113
        %v3115 = vmul.f32 %v3112, %v3114
        %v3116 = vadd.f32 %v3112, %v3115
        %vm3117 = vweird.f32 %v3080
        %vm3118 = vweird.f32 %v3112
        %vm3119 = vmor %vm3117, %vm3118
        %v3120 = vsel %vm3119, %v3112, %v3116
        %v3121 = vand.u32 2147483647, %v3080
        %vm3122 = vcmp.eq.f32.partialorder %v3121, 8.507059e+37
        %v3123 = vand.u32 %v3080, 2147483648
        %v3124 = vor.u32 1.1754944e-38, %v3123
        %v3125 = vsel %vm3122, %v3124, %v3120
        %v3126 = vmul.f32 1.0, %v3125
        %v3127 = vrcp.pop %v3081
        %v3128 = vmul.f32 %v3081, %v3127
        %v3129 = vsub.f32 1.0, %v3128
        %v3130 = vmul.f32 %v3127, %v3129
        %v3131 = vadd.f32 %v3127, %v3130
        %vm3132 = vweird.f32 %v3081
        %vm3133 = vweird.f32 %v3127
        %vm3134 = vmor %vm3132, %vm3133
        %v3135 = vsel %vm3134, %v3127, %v3131
        %v3136 = vand.u32 2147483647, %v3081
        %vm3137 = vcmp.eq.f32.partialorder %v3136, 8.507059e+37
        %v3138 = vand.u32 %v3081, 2147483648
        %v3139 = vor.u32 1.1754944e-38, %v3138
        %v3140 = vsel %vm3137, %v3139, %v3135
        %v3141 = vmul.f32 1.0, %v3140
        %v3142 = vtanh.pop %v3062
        %v3143 = vtanh.pop %v3063
        %v3144 = vtanh.pop %v3064
        %v3145 = vtanh.pop %v3065
        %3146 = vrot.lane.b32.xlu0 %v3096, 64
        %v3147 = vpop.permute.xlu0 %3146
        %3148 = vrot.lane.b32.xlu0 %v3111, 64
        %v3149 = vpop.permute.xlu0 %3148
        %3150 = vrot.lane.b32.xlu0 %v3126, 64
        %v3151 = vpop.permute.xlu0 %3150
        %3152 = vrot.lane.b32.xlu0 %v3141, 64
        %v3153 = vpop.permute.xlu0 %3152
        %3154 = vrot.lane.b32.xlu0 %v3142, 64
        %v3155 = vpop.permute.xlu0 %3154
        %3156 = vrot.lane.b32.xlu0 %v3143, 64
        %v3157 = vpop.permute.xlu0 %3156
        %3158 = vrot.lane.b32.xlu0 %v3144, 64
        %v3159 = vpop.permute.xlu0 %3158
        %3160 = vrot.lane.b32.xlu0 %v3145, 64
        %v3161 = vpop.permute.xlu0 %3160
        %v3162 = vmul.f32 %v3096, %v3155
        %v3163 = vmul.f32 %v3111, %v3157
        %v3164 = vmul.f32 %v3126, %v3159
        %v3165 = vmul.f32 %v3141, %v3161
        %v3166 = vmul.f32 %v3147, %v3142
        %v3167 = vmul.f32 %v3149, %v3143
        %v3168 = vmul.f32 %v3151, %v3144
        %v3169 = vmul.f32 %v3153, %v3145
        %v3170 = vsel %vm1584, %v3162, %v3166
        %v3171 = vsel %vm1584, %v3163, %v3167
        %v3172 = vsel %vm1584, %v3164, %v3168
        %v3173 = vsel %vm1584, %v3165, %v3169
        %3174 = vrot.lane.b32.xlu0 %v3170, 32
        %v3175 = vpop.permute.xlu0 %3174
        %3176 = vrot.lane.b32.xlu0 %v3171, 32
        %v3177 = vpop.permute.xlu0 %3176
        %3178 = vrot.lane.b32.xlu0 %v3172, 32
        %v3179 = vpop.permute.xlu0 %3178
        %3180 = vrot.lane.b32.xlu0 %v3173, 32
        %v3181 = vpop.permute.xlu0 %3180
        %v3182 = vmul.f32 %v3096, %v3025
        %v3183 = vmul.f32 %v3111, %v3026
        %v3184 = vmul.f32 %v3126, %v3027
        %v3185 = vmul.f32 %v3141, %v3028
        %v3186 = vadd.f32 %v3182, %v3175
        %v3187 = vadd.f32 %v3183, %v3177
        %v3188 = vadd.f32 %v3184, %v3179
        %v3189 = vadd.f32 %v3185, %v3181
        %v3190 = vtanh.pop %v3186
        %v3191 = vtanh.pop %v3187
        %v3192 = vtanh.pop %v3188
        %v3193 = vtanh.pop %v3189
        %3194 = vrot.lane.b32.xlu0 %v3190, 64
        %v3195 = vpop.permute.xlu0 %3194
        %3196 = vrot.lane.b32.xlu0 %v3191, 64
        %v3197 = vpop.permute.xlu0 %3196
        %3198 = vrot.lane.b32.xlu0 %v3192, 64
        %v3199 = vpop.permute.xlu0 %3198
        %3200 = vrot.lane.b32.xlu0 %v3193, 64
        %v3201 = vpop.permute.xlu0 %3200
        %v3202 = vmul.f32 %v3096, %v3195
        %v3203 = vmul.f32 %v3111, %v3197
        %v3204 = vmul.f32 %v3126, %v3199
        %v3205 = vmul.f32 %v3141, %v3201
        %v3206 = vsel %vm1568, %v3186, %v3025
        %v3207 = vsel %vm1569, %v3187, %v3026
        %v3208 = vsel %vm1570, %v3188, %v3027
        %v3209 = vsel %vm1571, %v3189, %v3028
        %v3210 = vsel %vm1568, %v3202, %v3029
        %v3211 = vsel %vm1569, %v3203, %v3030
        %v3212 = vsel %vm1570, %v3204, %v3031
        %v3213 = vsel %vm1571, %v3205, %v3032
        %3214 = vmatpush.msra.mxu0 %v1519
        %3215 = vmatpush.msra.mxu0 %v1518
        %3216 = vmatpush.msra.mxu0 %v1517
        %3217 = vmatpush.msra.mxu0 %v1516
        %3218 = vmatpush.msra.mxu0 %v1515
        %3219 = vmatpush.msra.mxu0 %v1514
        %3220 = vmatpush.msra.mxu0 %v1513
        %3221 = vmatpush.msra.mxu0 %v1512
        %3222 = vmatpush.msra.mxu0 %v1511
        %3223 = vmatpush.msra.mxu0 %v1510
        %3224 = vmatpush.msra.mxu0 %v1509
        %3225 = vmatpush.msra.mxu0 %v1508
        %3226 = vmatpush.msra.mxu0 %v1507
        %3227 = vmatpush.msra.mxu0 %v1506
        %3228 = vmatpush.msra.mxu0 %v1505
        %3229 = vmatpush.msra.mxu0 %v1504
        %3230 = vmatmul.f32.gmra.mxu0 %v3210
        %v3231 = vpop.f32.mrf.mxu0
        %v3232 = vadd.f32 0.0, %v3231
        %3233 = vmatmul.f32.gmra.mxu0 %v3211
        %v3234 = vpop.f32.mrf.mxu0
        %v3235 = vadd.f32 0.0, %v3234
        %3236 = vmatmul.f32.gmra.mxu0 %v3212
        %v3237 = vpop.f32.mrf.mxu0
        %v3238 = vadd.f32 0.0, %v3237
        %3239 = vmatmul.f32.gmra.mxu0 %v3213
        %v3240 = vpop.f32.mrf.mxu0
        %v3241 = vadd.f32 0.0, %v3240
        %3242 = vdwg.mxu0
        %v3243 = vadd.f32 %v1469, %v3232
        %v3244 = vadd.f32 %v1472, %v3235
        %v3245 = vadd.f32 %v1475, %v3238
        %v3246 = vadd.f32 %v1478, %v3241
        %v3247 = vxor.u32 %v3243, 2147483648
        %v3248 = vxor.u32 %v3244, 2147483648
        %v3249 = vxor.u32 %v3245, 2147483648
        %v3250 = vxor.u32 %v3246, 2147483648
        %v3251 = vmul.f32 %v3247, 1.442695
        %v3252 = vpow.pop %v3251
        %v3253 = vmul.f32 %v3248, 1.442695
        %v3254 = vpow.pop %v3253
        %v3255 = vmul.f32 %v3249, 1.442695
        %v3256 = vpow.pop %v3255
        %v3257 = vmul.f32 %v3250, 1.442695
        %v3258 = vpow.pop %v3257
        %v3259 = vadd.f32 %v3252, 1.0
        %v3260 = vadd.f32 %v3254, 1.0
        %v3261 = vadd.f32 %v3256, 1.0
        %v3262 = vadd.f32 %v3258, 1.0
        %v3263 = vrcp.pop %v3259
        %v3264 = vmul.f32 %v3259, %v3263
        %v3265 = vsub.f32 1.0, %v3264
        %v3266 = vmul.f32 %v3263, %v3265
        %v3267 = vadd.f32 %v3263, %v3266
        %vm3268 = vweird.f32 %v3259
        %vm3269 = vweird.f32 %v3263
        %vm3270 = vmor %vm3268, %vm3269
        %v3271 = vsel %vm3270, %v3263, %v3267
        %v3272 = vand.u32 2147483647, %v3259
        %vm3273 = vcmp.eq.f32.partialorder %v3272, 8.507059e+37
        %v3274 = vand.u32 %v3259, 2147483648
        %v3275 = vor.u32 1.1754944e-38, %v3274
        %v3276 = vsel %vm3273, %v3275, %v3271
        %v3277 = vmul.f32 1.0, %v3276
        %v3278 = vrcp.pop %v3260
        %v3279 = vmul.f32 %v3260, %v3278
        %v3280 = vsub.f32 1.0, %v3279
        %v3281 = vmul.f32 %v3278, %v3280
        %v3282 = vadd.f32 %v3278, %v3281
        %vm3283 = vweird.f32 %v3260
        %vm3284 = vweird.f32 %v3278
        %vm3285 = vmor %vm3283, %vm3284
        %v3286 = vsel %vm3285, %v3278, %v3282
        %v3287 = vand.u32 2147483647, %v3260
        %vm3288 = vcmp.eq.f32.partialorder %v3287, 8.507059e+37
        %v3289 = vand.u32 %v3260, 2147483648
        %v3290 = vor.u32 1.1754944e-38, %v3289
        %v3291 = vsel %vm3288, %v3290, %v3286
        %v3292 = vmul.f32 1.0, %v3291
        %v3293 = vrcp.pop %v3261
        %v3294 = vmul.f32 %v3261, %v3293
        %v3295 = vsub.f32 1.0, %v3294
        %v3296 = vmul.f32 %v3293, %v3295
        %v3297 = vadd.f32 %v3293, %v3296
        %vm3298 = vweird.f32 %v3261
        %vm3299 = vweird.f32 %v3293
        %vm3300 = vmor %vm3298, %vm3299
        %v3301 = vsel %vm3300, %v3293, %v3297
        %v3302 = vand.u32 2147483647, %v3261
        %vm3303 = vcmp.eq.f32.partialorder %v3302, 8.507059e+37
        %v3304 = vand.u32 %v3261, 2147483648
        %v3305 = vor.u32 1.1754944e-38, %v3304
        %v3306 = vsel %vm3303, %v3305, %v3301
        %v3307 = vmul.f32 1.0, %v3306
        %v3308 = vrcp.pop %v3262
        %v3309 = vmul.f32 %v3262, %v3308
        %v3310 = vsub.f32 1.0, %v3309
        %v3311 = vmul.f32 %v3308, %v3310
        %v3312 = vadd.f32 %v3308, %v3311
        %vm3313 = vweird.f32 %v3262
        %vm3314 = vweird.f32 %v3308
        %vm3315 = vmor %vm3313, %vm3314
        %v3316 = vsel %vm3315, %v3308, %v3312
        %v3317 = vand.u32 2147483647, %v3262
        %vm3318 = vcmp.eq.f32.partialorder %v3317, 8.507059e+37
        %v3319 = vand.u32 %v3262, 2147483648
        %v3320 = vor.u32 1.1754944e-38, %v3319
        %v3321 = vsel %vm3318, %v3320, %v3316
        %v3322 = vmul.f32 1.0, %v3321
        %v3323 = vtanh.pop %v3243
        %v3324 = vtanh.pop %v3244
        %v3325 = vtanh.pop %v3245
        %v3326 = vtanh.pop %v3246
        %3327 = vrot.lane.b32.xlu0 %v3277, 64
        %v3328 = vpop.permute.xlu0 %3327
        %3329 = vrot.lane.b32.xlu0 %v3292, 64
        %v3330 = vpop.permute.xlu0 %3329
        %3331 = vrot.lane.b32.xlu0 %v3307, 64
        %v3332 = vpop.permute.xlu0 %3331
        %3333 = vrot.lane.b32.xlu0 %v3322, 64
        %v3334 = vpop.permute.xlu0 %3333
        %3335 = vrot.lane.b32.xlu0 %v3323, 64
        %v3336 = vpop.permute.xlu0 %3335
        %3337 = vrot.lane.b32.xlu0 %v3324, 64
        %v3338 = vpop.permute.xlu0 %3337
        %3339 = vrot.lane.b32.xlu0 %v3325, 64
        %v3340 = vpop.permute.xlu0 %3339
        %3341 = vrot.lane.b32.xlu0 %v3326, 64
        %v3342 = vpop.permute.xlu0 %3341
        %v3343 = vmul.f32 %v3277, %v3336
        %v3344 = vmul.f32 %v3292, %v3338
        %v3345 = vmul.f32 %v3307, %v3340
        %v3346 = vmul.f32 %v3322, %v3342
        %v3347 = vmul.f32 %v3328, %v3323
        %v3348 = vmul.f32 %v3330, %v3324
        %v3349 = vmul.f32 %v3332, %v3325
        %v3350 = vmul.f32 %v3334, %v3326
        %v3351 = vsel %vm1584, %v3343, %v3347
        %v3352 = vsel %vm1584, %v3344, %v3348
        %v3353 = vsel %vm1584, %v3345, %v3349
        %v3354 = vsel %vm1584, %v3346, %v3350
        %3355 = vrot.lane.b32.xlu0 %v3351, 32
        %v3356 = vpop.permute.xlu0 %3355
        %3357 = vrot.lane.b32.xlu0 %v3352, 32
        %v3358 = vpop.permute.xlu0 %3357
        %3359 = vrot.lane.b32.xlu0 %v3353, 32
        %v3360 = vpop.permute.xlu0 %3359
        %3361 = vrot.lane.b32.xlu0 %v3354, 32
        %v3362 = vpop.permute.xlu0 %3361
        %v3363 = vmul.f32 %v3277, %v3206
        %v3364 = vmul.f32 %v3292, %v3207
        %v3365 = vmul.f32 %v3307, %v3208
        %v3366 = vmul.f32 %v3322, %v3209
        %v3367 = vadd.f32 %v3363, %v3356
        %v3368 = vadd.f32 %v3364, %v3358
        %v3369 = vadd.f32 %v3365, %v3360
        %v3370 = vadd.f32 %v3366, %v3362
        %v3371 = vtanh.pop %v3367
        %v3372 = vtanh.pop %v3368
        %v3373 = vtanh.pop %v3369
        %v3374 = vtanh.pop %v3370
        %3375 = vrot.lane.b32.xlu0 %v3371, 64
        %v3376 = vpop.permute.xlu0 %3375
        %3377 = vrot.lane.b32.xlu0 %v3372, 64
        %v3378 = vpop.permute.xlu0 %3377
        %3379 = vrot.lane.b32.xlu0 %v3373, 64
        %v3380 = vpop.permute.xlu0 %3379
        %3381 = vrot.lane.b32.xlu0 %v3374, 64
        %v3382 = vpop.permute.xlu0 %3381
        %v3383 = vmul.f32 %v3277, %v3376
        %v3384 = vmul.f32 %v3292, %v3378
        %v3385 = vmul.f32 %v3307, %v3380
        %v3386 = vmul.f32 %v3322, %v3382
        %v3387 = vsel %vm1572, %v3367, %v3206
        %v3388 = vsel %vm1573, %v3368, %v3207
        %v3389 = vsel %vm1574, %v3369, %v3208
        %v3390 = vsel %vm1575, %v3370, %v3209
        %v3391 = vsel %vm1572, %v3383, %v3210
        %v3392 = vsel %vm1573, %v3384, %v3211
        %v3393 = vsel %vm1574, %v3385, %v3212
        %v3394 = vsel %vm1575, %v3386, %v3213
        %3395 = vmatpush.msra.mxu0 %v1519
        %3396 = vmatpush.msra.mxu0 %v1518
        %3397 = vmatpush.msra.mxu0 %v1517
        %3398 = vmatpush.msra.mxu0 %v1516
        %3399 = vmatpush.msra.mxu0 %v1515
        %3400 = vmatpush.msra.mxu0 %v1514
        %3401 = vmatpush.msra.mxu0 %v1513
        %3402 = vmatpush.msra.mxu0 %v1512
        %3403 = vmatpush.msra.mxu0 %v1511
        %3404 = vmatpush.msra.mxu0 %v1510
        %3405 = vmatpush.msra.mxu0 %v1509
        %3406 = vmatpush.msra.mxu0 %v1508
        %3407 = vmatpush.msra.mxu0 %v1507
        %3408 = vmatpush.msra.mxu0 %v1506
        %3409 = vmatpush.msra.mxu0 %v1505
        %3410 = vmatpush.msra.mxu0 %v1504
        %3411 = vmatmul.f32.gmra.mxu0 %v3391
        %v3412 = vpop.f32.mrf.mxu0
        %v3413 = vadd.f32 0.0, %v3412
        %3414 = vmatmul.f32.gmra.mxu0 %v3392
        %v3415 = vpop.f32.mrf.mxu0
        %v3416 = vadd.f32 0.0, %v3415
        %3417 = vmatmul.f32.gmra.mxu0 %v3393
        %v3418 = vpop.f32.mrf.mxu0
        %v3419 = vadd.f32 0.0, %v3418
        %3420 = vmatmul.f32.gmra.mxu0 %v3394
        %v3421 = vpop.f32.mrf.mxu0
        %v3422 = vadd.f32 0.0, %v3421
        %3423 = vdwg.mxu0
        %v3424 = vadd.f32 %v1481, %v3413
        %v3425 = vadd.f32 %v1484, %v3416
        %v3426 = vadd.f32 %v1487, %v3419
        %v3427 = vadd.f32 %v1490, %v3422
        %v3428 = vxor.u32 %v3424, 2147483648
        %v3429 = vxor.u32 %v3425, 2147483648
        %v3430 = vxor.u32 %v3426, 2147483648
        %v3431 = vxor.u32 %v3427, 2147483648
        %v3432 = vmul.f32 %v3428, 1.442695
        %v3433 = vpow.pop %v3432
        %v3434 = vmul.f32 %v3429, 1.442695
        %v3435 = vpow.pop %v3434
        %v3436 = vmul.f32 %v3430, 1.442695
        %v3437 = vpow.pop %v3436
        %v3438 = vmul.f32 %v3431, 1.442695
        %v3439 = vpow.pop %v3438
        %v3440 = vadd.f32 %v3433, 1.0
        %v3441 = vadd.f32 %v3435, 1.0
        %v3442 = vadd.f32 %v3437, 1.0
        %v3443 = vadd.f32 %v3439, 1.0
        %v3444 = vrcp.pop %v3440
        %v3445 = vmul.f32 %v3440, %v3444
        %v3446 = vsub.f32 1.0, %v3445
        %v3447 = vmul.f32 %v3444, %v3446
        %v3448 = vadd.f32 %v3444, %v3447
        %vm3449 = vweird.f32 %v3440
        %vm3450 = vweird.f32 %v3444
        %vm3451 = vmor %vm3449, %vm3450
        %v3452 = vsel %vm3451, %v3444, %v3448
        %v3453 = vand.u32 2147483647, %v3440
        %vm3454 = vcmp.eq.f32.partialorder %v3453, 8.507059e+37
        %v3455 = vand.u32 %v3440, 2147483648
        %v3456 = vor.u32 1.1754944e-38, %v3455
        %v3457 = vsel %vm3454, %v3456, %v3452
        %v3458 = vmul.f32 1.0, %v3457
        %v3459 = vrcp.pop %v3441
        %v3460 = vmul.f32 %v3441, %v3459
        %v3461 = vsub.f32 1.0, %v3460
        %v3462 = vmul.f32 %v3459, %v3461
        %v3463 = vadd.f32 %v3459, %v3462
        %vm3464 = vweird.f32 %v3441
        %vm3465 = vweird.f32 %v3459
        %vm3466 = vmor %vm3464, %vm3465
        %v3467 = vsel %vm3466, %v3459, %v3463
        %v3468 = vand.u32 2147483647, %v3441
        %vm3469 = vcmp.eq.f32.partialorder %v3468, 8.507059e+37
        %v3470 = vand.u32 %v3441, 2147483648
        %v3471 = vor.u32 1.1754944e-38, %v3470
        %v3472 = vsel %vm3469, %v3471, %v3467
        %v3473 = vmul.f32 1.0, %v3472
        %v3474 = vrcp.pop %v3442
        %v3475 = vmul.f32 %v3442, %v3474
        %v3476 = vsub.f32 1.0, %v3475
        %v3477 = vmul.f32 %v3474, %v3476
        %v3478 = vadd.f32 %v3474, %v3477
        %vm3479 = vweird.f32 %v3442
        %vm3480 = vweird.f32 %v3474
        %vm3481 = vmor %vm3479, %vm3480
        %v3482 = vsel %vm3481, %v3474, %v3478
        %v3483 = vand.u32 2147483647, %v3442
        %vm3484 = vcmp.eq.f32.partialorder %v3483, 8.507059e+37
        %v3485 = vand.u32 %v3442, 2147483648
        %v3486 = vor.u32 1.1754944e-38, %v3485
        %v3487 = vsel %vm3484, %v3486, %v3482
        %v3488 = vmul.f32 1.0, %v3487
        %v3489 = vrcp.pop %v3443
        %v3490 = vmul.f32 %v3443, %v3489
        %v3491 = vsub.f32 1.0, %v3490
        %v3492 = vmul.f32 %v3489, %v3491
        %v3493 = vadd.f32 %v3489, %v3492
        %vm3494 = vweird.f32 %v3443
        %vm3495 = vweird.f32 %v3489
        %vm3496 = vmor %vm3494, %vm3495
        %v3497 = vsel %vm3496, %v3489, %v3493
        %v3498 = vand.u32 2147483647, %v3443
        %vm3499 = vcmp.eq.f32.partialorder %v3498, 8.507059e+37
        %v3500 = vand.u32 %v3443, 2147483648
        %v3501 = vor.u32 1.1754944e-38, %v3500
        %v3502 = vsel %vm3499, %v3501, %v3497
        %v3503 = vmul.f32 1.0, %v3502
        %v3504 = vtanh.pop %v3424
        %v3505 = vtanh.pop %v3425
        %v3506 = vtanh.pop %v3426
        %v3507 = vtanh.pop %v3427
        %3508 = vrot.lane.b32.xlu0 %v3458, 64
        %v3509 = vpop.permute.xlu0 %3508
        %3510 = vrot.lane.b32.xlu0 %v3473, 64
        %v3511 = vpop.permute.xlu0 %3510
        %3512 = vrot.lane.b32.xlu0 %v3488, 64
        %v3513 = vpop.permute.xlu0 %3512
        %3514 = vrot.lane.b32.xlu0 %v3503, 64
        %v3515 = vpop.permute.xlu0 %3514
        %3516 = vrot.lane.b32.xlu0 %v3504, 64
        %v3517 = vpop.permute.xlu0 %3516
        %3518 = vrot.lane.b32.xlu0 %v3505, 64
        %v3519 = vpop.permute.xlu0 %3518
        %3520 = vrot.lane.b32.xlu0 %v3506, 64
        %v3521 = vpop.permute.xlu0 %3520
        %3522 = vrot.lane.b32.xlu0 %v3507, 64
        %v3523 = vpop.permute.xlu0 %3522
        %v3524 = vmul.f32 %v3458, %v3517
        %v3525 = vmul.f32 %v3473, %v3519
        %v3526 = vmul.f32 %v3488, %v3521
        %v3527 = vmul.f32 %v3503, %v3523
        %v3528 = vmul.f32 %v3509, %v3504
        %v3529 = vmul.f32 %v3511, %v3505
        %v3530 = vmul.f32 %v3513, %v3506
        %v3531 = vmul.f32 %v3515, %v3507
        %v3532 = vsel %vm1584, %v3524, %v3528
        %v3533 = vsel %vm1584, %v3525, %v3529
        %v3534 = vsel %vm1584, %v3526, %v3530
        %v3535 = vsel %vm1584, %v3527, %v3531
        %3536 = vrot.lane.b32.xlu0 %v3532, 32
        %v3537 = vpop.permute.xlu0 %3536
        %3538 = vrot.lane.b32.xlu0 %v3533, 32
        %v3539 = vpop.permute.xlu0 %3538
        %3540 = vrot.lane.b32.xlu0 %v3534, 32
        %v3541 = vpop.permute.xlu0 %3540
        %3542 = vrot.lane.b32.xlu0 %v3535, 32
        %v3543 = vpop.permute.xlu0 %3542
        %v3544 = vmul.f32 %v3458, %v3387
        %v3545 = vmul.f32 %v3473, %v3388
        %v3546 = vmul.f32 %v3488, %v3389
        %v3547 = vmul.f32 %v3503, %v3390
        %v3548 = vadd.f32 %v3544, %v3537
        %v3549 = vadd.f32 %v3545, %v3539
        %v3550 = vadd.f32 %v3546, %v3541
        %v3551 = vadd.f32 %v3547, %v3543
        %v3552 = vtanh.pop %v3548
        %v3553 = vtanh.pop %v3549
        %v3554 = vtanh.pop %v3550
        %v3555 = vtanh.pop %v3551
        %3556 = vrot.lane.b32.xlu0 %v3552, 64
        %v3557 = vpop.permute.xlu0 %3556
        %3558 = vrot.lane.b32.xlu0 %v3553, 64
        %v3559 = vpop.permute.xlu0 %3558
        %3560 = vrot.lane.b32.xlu0 %v3554, 64
        %v3561 = vpop.permute.xlu0 %3560
        %3562 = vrot.lane.b32.xlu0 %v3555, 64
        %v3563 = vpop.permute.xlu0 %3562
        %v3564 = vmul.f32 %v3458, %v3557
        %v3565 = vmul.f32 %v3473, %v3559
        %v3566 = vmul.f32 %v3488, %v3561
        %v3567 = vmul.f32 %v3503, %v3563
        %v3568 = vsel %vm1576, %v3548, %v3387
        %v3569 = vsel %vm1577, %v3549, %v3388
        %v3570 = vsel %vm1578, %v3550, %v3389
        %v3571 = vsel %vm1579, %v3551, %v3390
        %v3572 = vsel %vm1576, %v3564, %v3391
        %v3573 = vsel %vm1577, %v3565, %v3392
        %v3574 = vsel %vm1578, %v3566, %v3393
        %v3575 = vsel %vm1579, %v3567, %v3394
        %3576 = vmatpush.msra.mxu0 %v1519
        %3577 = vmatpush.msra.mxu0 %v1518
        %3578 = vmatpush.msra.mxu0 %v1517
        %3579 = vmatpush.msra.mxu0 %v1516
        %3580 = vmatpush.msra.mxu0 %v1515
        %3581 = vmatpush.msra.mxu0 %v1514
        %3582 = vmatpush.msra.mxu0 %v1513
        %3583 = vmatpush.msra.mxu0 %v1512
        %3584 = vmatpush.msra.mxu0 %v1511
        %3585 = vmatpush.msra.mxu0 %v1510
        %3586 = vmatpush.msra.mxu0 %v1509
        %3587 = vmatpush.msra.mxu0 %v1508
        %3588 = vmatpush.msra.mxu0 %v1507
        %3589 = vmatpush.msra.mxu0 %v1506
        %3590 = vmatpush.msra.mxu0 %v1505
        %3591 = vmatpush.msra.mxu0 %v1504
        %3592 = vmatmul.f32.gmra.mxu0 %v3572
        %v3593 = vpop.f32.mrf.mxu0
        %v3594 = vadd.f32 0.0, %v3593
        %3595 = vmatmul.f32.gmra.mxu0 %v3573
        %v3596 = vpop.f32.mrf.mxu0
        %v3597 = vadd.f32 0.0, %v3596
        %3598 = vmatmul.f32.gmra.mxu0 %v3574
        %v3599 = vpop.f32.mrf.mxu0
        %v3600 = vadd.f32 0.0, %v3599
        %3601 = vmatmul.f32.gmra.mxu0 %v3575
        %v3602 = vpop.f32.mrf.mxu0
        %v3603 = vadd.f32 0.0, %v3602
        %3604 = vdwg.mxu0
        %v3605 = vadd.f32 %v1493, %v3594
        %v3606 = vadd.f32 %v1496, %v3597
        %v3607 = vadd.f32 %v1499, %v3600
        %v3608 = vadd.f32 %v1502, %v3603
        %v3609 = vxor.u32 %v3605, 2147483648
        %v3610 = vxor.u32 %v3606, 2147483648
        %v3611 = vxor.u32 %v3607, 2147483648
        %v3612 = vxor.u32 %v3608, 2147483648
        %v3613 = vmul.f32 %v3609, 1.442695
        %v3614 = vpow.pop %v3613
        %v3615 = vmul.f32 %v3610, 1.442695
        %v3616 = vpow.pop %v3615
        %v3617 = vmul.f32 %v3611, 1.442695
        %v3618 = vpow.pop %v3617
        %v3619 = vmul.f32 %v3612, 1.442695
        %v3620 = vpow.pop %v3619
        %v3621 = vadd.f32 %v3614, 1.0
        %v3622 = vadd.f32 %v3616, 1.0
        %v3623 = vadd.f32 %v3618, 1.0
        %v3624 = vadd.f32 %v3620, 1.0
        %v3625 = vrcp.pop %v3621
        %v3626 = vmul.f32 %v3621, %v3625
        %v3627 = vsub.f32 1.0, %v3626
        %v3628 = vmul.f32 %v3625, %v3627
        %v3629 = vadd.f32 %v3625, %v3628
        %vm3630 = vweird.f32 %v3621
        %vm3631 = vweird.f32 %v3625
        %vm3632 = vmor %vm3630, %vm3631
        %v3633 = vsel %vm3632, %v3625, %v3629
        %v3634 = vand.u32 2147483647, %v3621
        %vm3635 = vcmp.eq.f32.partialorder %v3634, 8.507059e+37
        %v3636 = vand.u32 %v3621, 2147483648
        %v3637 = vor.u32 1.1754944e-38, %v3636
        %v3638 = vsel %vm3635, %v3637, %v3633
        %v3639 = vmul.f32 1.0, %v3638
        %v3640 = vrcp.pop %v3622
        %v3641 = vmul.f32 %v3622, %v3640
        %v3642 = vsub.f32 1.0, %v3641
        %v3643 = vmul.f32 %v3640, %v3642
        %v3644 = vadd.f32 %v3640, %v3643
        %vm3645 = vweird.f32 %v3622
        %vm3646 = vweird.f32 %v3640
        %vm3647 = vmor %vm3645, %vm3646
        %v3648 = vsel %vm3647, %v3640, %v3644
        %v3649 = vand.u32 2147483647, %v3622
        %vm3650 = vcmp.eq.f32.partialorder %v3649, 8.507059e+37
        %v3651 = vand.u32 %v3622, 2147483648
        %v3652 = vor.u32 1.1754944e-38, %v3651
        %v3653 = vsel %vm3650, %v3652, %v3648
        %v3654 = vmul.f32 1.0, %v3653
        %v3655 = vrcp.pop %v3623
        %v3656 = vmul.f32 %v3623, %v3655
        %v3657 = vsub.f32 1.0, %v3656
        %v3658 = vmul.f32 %v3655, %v3657
        %v3659 = vadd.f32 %v3655, %v3658
        %vm3660 = vweird.f32 %v3623
        %vm3661 = vweird.f32 %v3655
        %vm3662 = vmor %vm3660, %vm3661
        %v3663 = vsel %vm3662, %v3655, %v3659
        %v3664 = vand.u32 2147483647, %v3623
        %vm3665 = vcmp.eq.f32.partialorder %v3664, 8.507059e+37
        %v3666 = vand.u32 %v3623, 2147483648
        %v3667 = vor.u32 1.1754944e-38, %v3666
        %v3668 = vsel %vm3665, %v3667, %v3663
        %v3669 = vmul.f32 1.0, %v3668
        %v3670 = vrcp.pop %v3624
        %v3671 = vmul.f32 %v3624, %v3670
        %v3672 = vsub.f32 1.0, %v3671
        %v3673 = vmul.f32 %v3670, %v3672
        %v3674 = vadd.f32 %v3670, %v3673
        %vm3675 = vweird.f32 %v3624
        %vm3676 = vweird.f32 %v3670
        %vm3677 = vmor %vm3675, %vm3676
        %v3678 = vsel %vm3677, %v3670, %v3674
        %v3679 = vand.u32 2147483647, %v3624
        %vm3680 = vcmp.eq.f32.partialorder %v3679, 8.507059e+37
        %v3681 = vand.u32 %v3624, 2147483648
        %v3682 = vor.u32 1.1754944e-38, %v3681
        %v3683 = vsel %vm3680, %v3682, %v3678
        %v3684 = vmul.f32 1.0, %v3683
        %v3685 = vtanh.pop %v3605
        %v3686 = vtanh.pop %v3606
        %v3687 = vtanh.pop %v3607
        %v3688 = vtanh.pop %v3608
        %3689 = vrot.lane.b32.xlu0 %v3639, 64
        %v3690 = vpop.permute.xlu0 %3689
        %3691 = vrot.lane.b32.xlu0 %v3654, 64
        %v3692 = vpop.permute.xlu0 %3691
        %3693 = vrot.lane.b32.xlu0 %v3669, 64
        %v3694 = vpop.permute.xlu0 %3693
        %3695 = vrot.lane.b32.xlu0 %v3684, 64
        %v3696 = vpop.permute.xlu0 %3695
        %3697 = vrot.lane.b32.xlu0 %v3685, 64
        %v3698 = vpop.permute.xlu0 %3697
        %3699 = vrot.lane.b32.xlu0 %v3686, 64
        %v3700 = vpop.permute.xlu0 %3699
        %3701 = vrot.lane.b32.xlu0 %v3687, 64
        %v3702 = vpop.permute.xlu0 %3701
        %3703 = vrot.lane.b32.xlu0 %v3688, 64
        %v3704 = vpop.permute.xlu0 %3703
        %v3705 = vmul.f32 %v3639, %v3698
        %v3706 = vmul.f32 %v3654, %v3700
        %v3707 = vmul.f32 %v3669, %v3702
        %v3708 = vmul.f32 %v3684, %v3704
        %v3709 = vmul.f32 %v3690, %v3685
        %v3710 = vmul.f32 %v3692, %v3686
        %v3711 = vmul.f32 %v3694, %v3687
        %v3712 = vmul.f32 %v3696, %v3688
        %v3713 = vsel %vm1584, %v3705, %v3709
        %v3714 = vsel %vm1584, %v3706, %v3710
        %v3715 = vsel %vm1584, %v3707, %v3711
        %v3716 = vsel %vm1584, %v3708, %v3712
        %3717 = vrot.lane.b32.xlu0 %v3713, 32
        %v3718 = vpop.permute.xlu0 %3717
        %3719 = vrot.lane.b32.xlu0 %v3714, 32
        %v3720 = vpop.permute.xlu0 %3719
        %3721 = vrot.lane.b32.xlu0 %v3715, 32
        %v3722 = vpop.permute.xlu0 %3721
        %3723 = vrot.lane.b32.xlu0 %v3716, 32
        %v3724 = vpop.permute.xlu0 %3723
        %v3725 = vmul.f32 %v3639, %v3568
        %v3726 = vmul.f32 %v3654, %v3569
        %v3727 = vmul.f32 %v3669, %v3570
        %v3728 = vmul.f32 %v3684, %v3571
        %v3729 = vadd.f32 %v3725, %v3718
        %v3730 = vadd.f32 %v3726, %v3720
        %v3731 = vadd.f32 %v3727, %v3722
        %v3732 = vadd.f32 %v3728, %v3724
        %v3733 = vtanh.pop %v3729
        %v3734 = vtanh.pop %v3730
        %v3735 = vtanh.pop %v3731
        %v3736 = vtanh.pop %v3732
        %3737 = vrot.lane.b32.xlu0 %v3733, 64
        %v3738 = vpop.permute.xlu0 %3737
        %3739 = vrot.lane.b32.xlu0 %v3734, 64
        %v3740 = vpop.permute.xlu0 %3739
        %3741 = vrot.lane.b32.xlu0 %v3735, 64
        %v3742 = vpop.permute.xlu0 %3741
        %3743 = vrot.lane.b32.xlu0 %v3736, 64
        %v3744 = vpop.permute.xlu0 %3743
        %v3745 = vmul.f32 %v3639, %v3738
        %v3746 = vmul.f32 %v3654, %v3740
        %v3747 = vmul.f32 %v3669, %v3742
        %v3748 = vmul.f32 %v3684, %v3744
        %v3749 = vsel %vm1580, %v3745, %v3572
        %v3750 = vsel %vm1581, %v3746, %v3573
        %v3751 = vsel %vm1582, %v3747, %v3574
        %v3752 = vsel %vm1583, %v3748, %v3575
        %v3753 = vld [vmem:[%s6] sm:$0xff]
        %v3754 = vld [vmem:[%s6 + $0x8] sm:$0xff]
        %v3755 = vld [vmem:[%s6 + $0x10] sm:$0xff]
        %v3756 = vld [vmem:[%s6 + $0x18] sm:$0xff]
        %v3757 = vld [vmem:[%s6 + $0x20] sm:$0xff]
        %v3758 = vld [vmem:[%s6 + $0x28] sm:$0xff]
        %v3759 = vld [vmem:[%s6 + $0x30] sm:$0xff]
        %v3760 = vld [vmem:[%s6 + $0x38] sm:$0xff]
        %v3761 = vld [vmem:[%s6 + $0x40] sm:$0xff]
        %v3762 = vld [vmem:[%s6 + $0x48] sm:$0xff]
        %v3763 = vld [vmem:[%s6 + $0x50] sm:$0xff]
        %v3764 = vld [vmem:[%s6 + $0x58] sm:$0xff]
        %v3765 = vld [vmem:[%s6 + $0x60] sm:$0xff]
        %v3766 = vld [vmem:[%s6 + $0x68] sm:$0xff]
        %v3767 = vld [vmem:[%s6 + $0x70] sm:$0xff]
        %v3768 = vld [vmem:[%s6 + $0x78] sm:$0xff]
        %v3769 = vld [vmem:[%s7] sm:$0x1]
        %v3771 = vperm.slane %v3769, 0
        %3773 = vmatpush.msra.mxu0 %v3768
        %3774 = vmatpush.msra.mxu0 %v3767
        %3775 = vmatpush.msra.mxu0 %v3766
        %3776 = vmatpush.msra.mxu0 %v3765
        %3777 = vmatpush.msra.mxu0 %v3764
        %3778 = vmatpush.msra.mxu0 %v3763
        %3779 = vmatpush.msra.mxu0 %v3762
        %3780 = vmatpush.msra.mxu0 %v3761
        %3781 = vmatpush.msra.mxu0 %v3760
        %3782 = vmatpush.msra.mxu0 %v3759
        %3783 = vmatpush.msra.mxu0 %v3758
        %3784 = vmatpush.msra.mxu0 %v3757
        %3785 = vmatpush.msra.mxu0 %v3756
        %3786 = vmatpush.msra.mxu0 %v3755
        %3787 = vmatpush.msra.mxu0 %v3754
        %3788 = vmatpush.msra.mxu0 %v3753
        %3789 = vmatmul.f32.gmra.mxu0 %v3749
        %v3790 = vpop.f32.mrf.mxu0
        %v3791 = vadd.f32 %v3771, %v3790
        %3792 = vmatmul.f32.gmra.mxu0 %v3750
        %v3793 = vpop.f32.mrf.mxu0
        %v3794 = vadd.f32 %v3771, %v3793
        %3795 = vmatmul.f32.gmra.mxu0 %v3751
        %v3796 = vpop.f32.mrf.mxu0
        %v3797 = vadd.f32 %v3771, %v3796
        %3798 = vmatmul.f32.gmra.mxu0 %v3752
        %v3799 = vpop.f32.mrf.mxu0
        %v3800 = vadd.f32 %v3771, %v3799
        %3801 = vdwg.mxu0
        %v3802 = vtanh.pop %v3791
        %v3803 = vtanh.pop %v3794
        %v3804 = vtanh.pop %v3797
        %v3805 = vtanh.pop %v3800
        %v3806 = vld [vmem:[%s744] sm:$0xff]
        %v3807 = vld [vmem:[%s744 + $0x8] sm:$0xff]
        %v3808 = vld [vmem:[%s744 + $0x10] sm:$0xff]
        %v3809 = vld [vmem:[%s744 + $0x18] sm:$0xff]
        %v3810 = vld [vmem:[%s744 + $0x20] sm:$0xff]
        %v3811 = vld [vmem:[%s744 + $0x28] sm:$0xff]
        %v3812 = vld [vmem:[%s744 + $0x30] sm:$0xff]
        %v3813 = vld [vmem:[%s744 + $0x38] sm:$0xff]
        %v3814 = vld [vmem:[%s744 + $0x40] sm:$0xff]
        %v3815 = vld [vmem:[%s744 + $0x48] sm:$0xff]
        %v3816 = vld [vmem:[%s744 + $0x50] sm:$0xff]
        %v3817 = vld [vmem:[%s744 + $0x58] sm:$0xff]
        %v3818 = vld [vmem:[%s744 + $0x60] sm:$0xff]
        %v3819 = vld [vmem:[%s744 + $0x68] sm:$0xff]
        %v3820 = vld [vmem:[%s744 + $0x70] sm:$0xff]
        %v3821 = vld [vmem:[%s744 + $0x78] sm:$0xff]
        %v3822 = vld [vmem:[%s744 + $0x80] sm:$0xff]
        %v3823 = vld [vmem:[%s744 + $0x88] sm:$0xff]
        %v3824 = vld [vmem:[%s744 + $0x90] sm:$0xff]
        %v3825 = vld [vmem:[%s744 + $0x98] sm:$0xff]
        %v3826 = vld [vmem:[%s744 + $0xa0] sm:$0xff]
        %v3827 = vld [vmem:[%s744 + $0xa8] sm:$0xff]
        %v3828 = vld [vmem:[%s744 + $0xb0] sm:$0xff]
        %v3829 = vld [vmem:[%s744 + $0xb8] sm:$0xff]
        %v3830 = vld [vmem:[%s744 + $0xc0] sm:$0xff]
        %v3831 = vld [vmem:[%s744 + $0xc8] sm:$0xff]
        %v3832 = vld [vmem:[%s744 + $0xd0] sm:$0xff]
        %v3833 = vld [vmem:[%s744 + $0xd8] sm:$0xff]
        %v3834 = vld [vmem:[%s744 + $0xe0] sm:$0xff]
        %v3835 = vld [vmem:[%s744 + $0xe8] sm:$0xff]
        %v3836 = vld [vmem:[%s744 + $0xf0] sm:$0xff]
        %v3837 = vld [vmem:[%s744 + $0xf8] sm:$0xff]
        %v3838 = vld [vmem:[%s744 + $0x100] sm:$0xff]
        %v3839 = vld [vmem:[%s744 + $0x108] sm:$0xff]
        %v3840 = vld [vmem:[%s744 + $0x110] sm:$0xff]
        %v3841 = vld [vmem:[%s744 + $0x118] sm:$0xff]
        %v3842 = vld [vmem:[%s744 + $0x120] sm:$0xff]
        %v3843 = vld [vmem:[%s744 + $0x128] sm:$0xff]
        %v3844 = vld [vmem:[%s744 + $0x130] sm:$0xff]
        %v3845 = vld [vmem:[%s744 + $0x138] sm:$0xff]
        %vm3846 = vcmask 130048
        %v3847 = vsel %vm3846, %v3806, 0.0
        %v3848 = vsel %vm3846, %v3810, 0.0
        %v3849 = vadd.f32 %v3847, %v3848
        %v3850 = vsel %vm3846, %v3814, 0.0
        %v3851 = vadd.f32 %v3849, %v3850
        %v3852 = vsel %vm3846, %v3818, 0.0
        %v3853 = vadd.f32 %v3851, %v3852
        %v3854 = vsel %vm3846, %v3822, 0.0
        %v3855 = vadd.f32 %v3853, %v3854
        %v3856 = vsel %vm3846, %v3826, 0.0
        %v3857 = vadd.f32 %v3855, %v3856
        %v3858 = vsel %vm3846, %v3830, 0.0
        %v3859 = vadd.f32 %v3857, %v3858
        %v3860 = vsel %vm3846, %v3834, 0.0
        %v3861 = vadd.f32 %v3859, %v3860
        %v3862 = vsel %vm3846, %v3838, 0.0
        %v3863 = vadd.f32 %v3861, %v3862
        %v3864 = vsel %vm3846, %v3842, 0.0
        %v3865 = vadd.f32 %v3863, %v3864
        %v3866 = vsel %vm3846, %v3807, 0.0
        %v3867 = vsel %vm3846, %v3811, 0.0
        %v3868 = vadd.f32 %v3866, %v3867
        %v3869 = vsel %vm3846, %v3815, 0.0
        %v3870 = vadd.f32 %v3868, %v3869
        %v3871 = vsel %vm3846, %v3819, 0.0
        %v3872 = vadd.f32 %v3870, %v3871
        %v3873 = vsel %vm3846, %v3823, 0.0
        %v3874 = vadd.f32 %v3872, %v3873
        %v3875 = vsel %vm3846, %v3827, 0.0
        %v3876 = vadd.f32 %v3874, %v3875
        %v3877 = vsel %vm3846, %v3831, 0.0
        %v3878 = vadd.f32 %v3876, %v3877
        %v3879 = vsel %vm3846, %v3835, 0.0
        %v3880 = vadd.f32 %v3878, %v3879
        %v3881 = vsel %vm3846, %v3839, 0.0
        %v3882 = vadd.f32 %v3880, %v3881
        %v3883 = vsel %vm3846, %v3843, 0.0
        %v3884 = vadd.f32 %v3882, %v3883
        %v3885 = vsel %vm3846, %v3808, 0.0
        %v3886 = vsel %vm3846, %v3812, 0.0
        %v3887 = vadd.f32 %v3885, %v3886
        %v3888 = vsel %vm3846, %v3816, 0.0
        %v3889 = vadd.f32 %v3887, %v3888
        %v3890 = vsel %vm3846, %v3820, 0.0
        %v3891 = vadd.f32 %v3889, %v3890
        %v3892 = vsel %vm3846, %v3824, 0.0
        %v3893 = vadd.f32 %v3891, %v3892
        %v3894 = vsel %vm3846, %v3828, 0.0
        %v3895 = vadd.f32 %v3893, %v3894
        %v3896 = vsel %vm3846, %v3832, 0.0
        %v3897 = vadd.f32 %v3895, %v3896
        %v3898 = vsel %vm3846, %v3836, 0.0
        %v3899 = vadd.f32 %v3897, %v3898
        %v3900 = vsel %vm3846, %v3840, 0.0
        %v3901 = vadd.f32 %v3899, %v3900
        %v3902 = vsel %vm3846, %v3844, 0.0
        %v3903 = vadd.f32 %v3901, %v3902
        %v3904 = vsel %vm3846, %v3809, 0.0
        %v3905 = vsel %vm3846, %v3813, 0.0
        %v3906 = vadd.f32 %v3904, %v3905
        %v3907 = vsel %vm3846, %v3817, 0.0
        %v3908 = vadd.f32 %v3906, %v3907
        %v3909 = vsel %vm3846, %v3821, 0.0
        %v3910 = vadd.f32 %v3908, %v3909
        %v3911 = vsel %vm3846, %v3825, 0.0
        %v3912 = vadd.f32 %v3910, %v3911
        %v3913 = vsel %vm3846, %v3829, 0.0
        %v3914 = vadd.f32 %v3912, %v3913
        %v3915 = vsel %vm3846, %v3833, 0.0
        %v3916 = vadd.f32 %v3914, %v3915
        %v3917 = vsel %vm3846, %v3837, 0.0
        %v3918 = vadd.f32 %v3916, %v3917
        %v3919 = vsel %vm3846, %v3841, 0.0
        %v3920 = vadd.f32 %v3918, %v3919
        %v3921 = vsel %vm3846, %v3845, 0.0
        %v3922 = vadd.f32 %v3920, %v3921
        %v3923 = vrcp.pop 10.0
        %v3924 = vmul.f32 10.0, %v3923
        %v3925 = vsub.f32 1.0, %v3924
        %v3926 = vmul.f32 %v3923, %v3925
        %v3927 = vadd.f32 %v3923, %v3926
        %vm3928 = vweird.f32 %v3923
        %v3929 = vsel %vm3928, %v3923, %v3927
        %v3930 = vmul.f32 %v3865, %v3929
        %v3931 = vmul.f32 %v3884, %v3929
        %v3932 = vmul.f32 %v3903, %v3929
        %v3933 = vmul.f32 %v3922, %v3929
        %v3934 = vld [vmem:[%s8] sm:$0xff]
        %v3935 = vld [vmem:[%s8 + $0x8] sm:$0xff]
        %v3936 = vld [vmem:[%s8 + $0x10] sm:$0xff]
        %v3937 = vld [vmem:[%s8 + $0x18] sm:$0xff]
        %v3938 = vld [vmem:[%s9] sm:$0x3]
        %v3940 = vperm.slane %v3938, 0
        %v3941 = vperm.slane %v3938, 1
        %v3945 = vsel %vm3846, %v3930, 0
        %v3948 = vsel %vm3846, %v3931, 0
        %v3951 = vsel %vm3846, %v3932, 0
        %v3954 = vsel %vm3846, %v3933, 0
        %3956 = vmatpush.msra.mxu0 0.0
        %3957 = vmatpush.msra.mxu0 0.0
        %3958 = vmatpush.msra.mxu0 0.0
        %3959 = vmatpush.msra.mxu0 0.0
        %3960 = vmatpush.msra.mxu0 0.0
        %3961 = vmatpush.msra.mxu0 0.0
        %3962 = vmatpush.msra.mxu0 0.0
        %3963 = vmatpush.msra.mxu0 0.0
        %3964 = vmatpush.msra.mxu0 0.0
        %3965 = vmatpush.msra.mxu0 0.0
        %3966 = vmatpush.msra.mxu0 0.0
        %3967 = vmatpush.msra.mxu0 0.0
        %3968 = vmatpush.msra.mxu0 0.0
        %3969 = vmatpush.msra.mxu0 0.0
        %3970 = vmatpush.msra.mxu0 %v3936
        %3971 = vmatpush.msra.mxu0 %v3934
        %3972 = vmatmul.f32.gmra.mxu0 %v3945
        %v3973 = vpop.f32.mrf.mxu0
        %v3974 = vadd.f32 %v3940, %v3973
        %3975 = vmatmul.f32.gmra.mxu0 %v3948
        %v3976 = vpop.f32.mrf.mxu0
        %v3977 = vadd.f32 %v3940, %v3976
        %3978 = vmatmul.f32.gmra.mxu0 %v3951
        %v3979 = vpop.f32.mrf.mxu0
        %v3980 = vadd.f32 %v3940, %v3979
        %3981 = vmatmul.f32.gmra.mxu0 %v3954
        %v3982 = vpop.f32.mrf.mxu0
        %v3983 = vadd.f32 %v3940, %v3982
        %3984 = vdwg.mxu0
        %3985 = vmatpush.msra.mxu0 0.0
        %3986 = vmatpush.msra.mxu0 0.0
        %3987 = vmatpush.msra.mxu0 0.0
        %3988 = vmatpush.msra.mxu0 0.0
        %3989 = vmatpush.msra.mxu0 0.0
        %3990 = vmatpush.msra.mxu0 0.0
        %3991 = vmatpush.msra.mxu0 0.0
        %3992 = vmatpush.msra.mxu0 0.0
        %3993 = vmatpush.msra.mxu0 0.0
        %3994 = vmatpush.msra.mxu0 0.0
        %3995 = vmatpush.msra.mxu0 0.0
        %3996 = vmatpush.msra.mxu0 0.0
        %3997 = vmatpush.msra.mxu0 0.0
        %3998 = vmatpush.msra.mxu0 0.0
        %3999 = vmatpush.msra.mxu0 %v3937
        %4000 = vmatpush.msra.mxu0 %v3935
        %4001 = vmatmul.f32.gmra.mxu0 %v3945
        %v4002 = vpop.f32.mrf.mxu0
        %v4003 = vadd.f32 %v3941, %v4002
        %4004 = vmatmul.f32.gmra.mxu0 %v3948
        %v4005 = vpop.f32.mrf.mxu0
        %v4006 = vadd.f32 %v3941, %v4005
        %4007 = vmatmul.f32.gmra.mxu0 %v3951
        %v4008 = vpop.f32.mrf.mxu0
        %v4009 = vadd.f32 %v3941, %v4008
        %4010 = vmatmul.f32.gmra.mxu0 %v3954
        %v4011 = vpop.f32.mrf.mxu0
        %v4012 = vadd.f32 %v3941, %v4011
        %4013 = vdwg.mxu0
        %v4014 = vtanh.pop %v3974
        %v4015 = vtanh.pop %v4003
        %v4016 = vtanh.pop %v3977
        %v4017 = vtanh.pop %v4006
        %v4018 = vtanh.pop %v3980
        %v4019 = vtanh.pop %v4009
        %v4020 = vtanh.pop %v3983
        %v4021 = vtanh.pop %v4012
        %v4022 = vld [vmem:[#allocation5] sm:$0xff]
        %v4023 = vld [vmem:[#allocation5 + $0x8] sm:$0xff]
        %v4024 = vld [vmem:[#allocation5 + $0x10] sm:$0xff]
        %v4025 = vld [vmem:[#allocation5 + $0x18] sm:$0xff]
        %v4026 = vld [vmem:[#allocation5 + $0x20] sm:$0xff]
        %v4027 = vld [vmem:[#allocation5 + $0x28] sm:$0xff]
        %v4028 = vld [vmem:[#allocation5 + $0x30] sm:$0xff]
        %v4029 = vld [vmem:[#allocation5 + $0x38] sm:$0xff]
        %v4030 = vld [vmem:[#allocation5 + $0x40] sm:$0xff]
        %v4031 = vld [vmem:[#allocation5 + $0x48] sm:$0xff]
        %v4032 = vld [vmem:[#allocation5 + $0x50] sm:$0xff]
        %v4033 = vld [vmem:[#allocation5 + $0x58] sm:$0xff]
        %v4034 = vld [vmem:[#allocation5 + $0x60] sm:$0xff]
        %v4035 = vld [vmem:[#allocation5 + $0x68] sm:$0xff]
        %v4036 = vld [vmem:[#allocation5 + $0x70] sm:$0xff]
        %v4037 = vld [vmem:[#allocation5 + $0x78] sm:$0xff]
        %v4038 = vld [vmem:[#allocation5 + $0x80] sm:$0xff]
        %v4039 = vld [vmem:[#allocation5 + $0x88] sm:$0xff]
        %v4040 = vld [vmem:[#allocation5 + $0x90] sm:$0xff]
        %v4041 = vld [vmem:[#allocation5 + $0x98] sm:$0xff]
        %v4042 = vld [vmem:[#allocation5 + $0xa0] sm:$0xff]
        %v4043 = vld [vmem:[#allocation5 + $0xa8] sm:$0xff]
        %v4044 = vld [vmem:[#allocation5 + $0xb0] sm:$0xff]
        %v4045 = vld [vmem:[#allocation5 + $0xb8] sm:$0xff]
        %v4046 = vld [vmem:[#allocation5 + $0xc0] sm:$0xff]
        %v4047 = vld [vmem:[#allocation5 + $0xc8] sm:$0xff]
        %v4048 = vld [vmem:[#allocation5 + $0xd0] sm:$0xff]
        %v4049 = vld [vmem:[#allocation5 + $0xd8] sm:$0xff]
        %v4050 = vld [vmem:[#allocation5 + $0xe0] sm:$0xff]
        %v4051 = vld [vmem:[#allocation5 + $0xe8] sm:$0xff]
        %v4052 = vld [vmem:[#allocation5 + $0xf0] sm:$0xff]
        %v4053 = vld [vmem:[#allocation5 + $0xf8] sm:$0xff]
        %v4054 = vld [vmem:[#allocation5 + $0x100] sm:$0xff]
        %v4055 = vld [vmem:[#allocation5 + $0x108] sm:$0xff]
        %v4056 = vld [vmem:[#allocation5 + $0x110] sm:$0xff]
        %v4057 = vld [vmem:[#allocation5 + $0x118] sm:$0xff]
        %v4058 = vld [vmem:[#allocation5 + $0x120] sm:$0xff]
        %v4059 = vld [vmem:[#allocation5 + $0x128] sm:$0xff]
        %v4060 = vld [vmem:[#allocation5 + $0x130] sm:$0xff]
        %v4061 = vld [vmem:[#allocation5 + $0x138] sm:$0xff]
        %v4062 = vld [vmem:[#allocation5 + $0x140] sm:$0xff]
        %v4063 = vld [vmem:[#allocation5 + $0x148] sm:$0xff]
        %v4064 = vld [vmem:[#allocation5 + $0x150] sm:$0xff]
        %v4065 = vld [vmem:[#allocation5 + $0x158] sm:$0xff]
        %v4066 = vld [vmem:[#allocation5 + $0x160] sm:$0xff]
        %v4067 = vld [vmem:[#allocation5 + $0x168] sm:$0xff]
        %v4068 = vld [vmem:[#allocation5 + $0x170] sm:$0xff]
        %v4069 = vld [vmem:[#allocation5 + $0x178] sm:$0xff]
        %v4070 = vld [vmem:[#allocation5 + $0x180] sm:$0xff]
        %v4071 = vld [vmem:[#allocation5 + $0x188] sm:$0xff]
        %v4072 = vld [vmem:[#allocation5 + $0x190] sm:$0xff]
        %v4073 = vld [vmem:[#allocation5 + $0x198] sm:$0xff]
        %v4074 = vld [vmem:[#allocation5 + $0x1a0] sm:$0xff]
        %v4075 = vld [vmem:[#allocation5 + $0x1a8] sm:$0xff]
        %v4076 = vld [vmem:[#allocation5 + $0x1b0] sm:$0xff]
        %v4077 = vld [vmem:[#allocation5 + $0x1b8] sm:$0xff]
        %v4078 = vld [vmem:[#allocation5 + $0x1c0] sm:$0xff]
        %v4079 = vld [vmem:[#allocation5 + $0x1c8] sm:$0xff]
        %v4080 = vld [vmem:[#allocation5 + $0x1d0] sm:$0xff]
        %v4081 = vld [vmem:[#allocation5 + $0x1d8] sm:$0xff]
        %v4082 = vld [vmem:[#allocation5 + $0x1e0] sm:$0xff]
        %v4083 = vld [vmem:[#allocation5 + $0x1e8] sm:$0xff]
        %v4084 = vld [vmem:[#allocation5 + $0x1f0] sm:$0xff]
        %v4085 = vld [vmem:[#allocation5 + $0x1f8] sm:$0xff]
        %v4086 = vld [vmem:[%s11] sm:$0x3]
        %v4088 = vperm.slane %v4086, 0
        %v4089 = vperm.slane %v4086, 1
        %4092 = vmatpush.msra.mxu0 %v4052
        %4093 = vmatpush.msra.mxu0 %v4050
        %4094 = vmatpush.msra.mxu0 %v4048
        %4095 = vmatpush.msra.mxu0 %v4046
        %4096 = vmatpush.msra.mxu0 %v4044
        %4097 = vmatpush.msra.mxu0 %v4042
        %4098 = vmatpush.msra.mxu0 %v4040
        %4099 = vmatpush.msra.mxu0 %v4038
        %4100 = vmatpush.msra.mxu0 %v4036
        %4101 = vmatpush.msra.mxu0 %v4034
        %4102 = vmatpush.msra.mxu0 %v4032
        %4103 = vmatpush.msra.mxu0 %v4030
        %4104 = vmatpush.msra.mxu0 %v4028
        %4105 = vmatpush.msra.mxu0 %v4026
        %4106 = vmatpush.msra.mxu0 %v4024
        %4107 = vmatpush.msra.mxu0 %v4022
        %4108 = vmatmul.f32.gmra.mxu0 %v4014
        %v4109 = vpop.f32.mrf.mxu0
        %v4110 = vadd.f32 %v4088, %v4109
        %4111 = vmatmul.f32.gmra.mxu0 %v4016
        %v4112 = vpop.f32.mrf.mxu0
        %v4113 = vadd.f32 %v4088, %v4112
        %4114 = vmatmul.f32.gmra.mxu0 %v4018
        %v4115 = vpop.f32.mrf.mxu0
        %v4116 = vadd.f32 %v4088, %v4115
        %4117 = vmatmul.f32.gmra.mxu0 %v4020
        %v4118 = vpop.f32.mrf.mxu0
        %v4119 = vadd.f32 %v4088, %v4118
        %4120 = vdwg.mxu0
        %4121 = vmatpush.msra.mxu0 %v4084
        %4122 = vmatpush.msra.mxu0 %v4082
        %4123 = vmatpush.msra.mxu0 %v4080
        %4124 = vmatpush.msra.mxu0 %v4078
        %4125 = vmatpush.msra.mxu0 %v4076
        %4126 = vmatpush.msra.mxu0 %v4074
        %4127 = vmatpush.msra.mxu0 %v4072
        %4128 = vmatpush.msra.mxu0 %v4070
        %4129 = vmatpush.msra.mxu0 %v4068
        %4130 = vmatpush.msra.mxu0 %v4066
        %4131 = vmatpush.msra.mxu0 %v4064
        %4132 = vmatpush.msra.mxu0 %v4062
        %4133 = vmatpush.msra.mxu0 %v4060
        %4134 = vmatpush.msra.mxu0 %v4058
        %4135 = vmatpush.msra.mxu0 %v4056
        %4136 = vmatpush.msra.mxu0 %v4054
        %4137 = vmatmul.f32.gmra.mxu0 %v4015
        %v4138 = vpop.f32.mrf.mxu0
        %v4139 = vadd.f32 %v4110, %v4138
        %4140 = vmatmul.f32.gmra.mxu0 %v4017
        %v4141 = vpop.f32.mrf.mxu0
        %v4142 = vadd.f32 %v4113, %v4141
        %4143 = vmatmul.f32.gmra.mxu0 %v4019
        %v4144 = vpop.f32.mrf.mxu0
        %v4145 = vadd.f32 %v4116, %v4144
        %4146 = vmatmul.f32.gmra.mxu0 %v4021
        %v4147 = vpop.f32.mrf.mxu0
        %v4148 = vadd.f32 %v4119, %v4147
        %4149 = vdwg.mxu0
        %4150 = vmatpush.msra.mxu0 %v4053
        %4151 = vmatpush.msra.mxu0 %v4051
        %4152 = vmatpush.msra.mxu0 %v4049
        %4153 = vmatpush.msra.mxu0 %v4047
        %4154 = vmatpush.msra.mxu0 %v4045
        %4155 = vmatpush.msra.mxu0 %v4043
        %4156 = vmatpush.msra.mxu0 %v4041
        %4157 = vmatpush.msra.mxu0 %v4039
        %4158 = vmatpush.msra.mxu0 %v4037
        %4159 = vmatpush.msra.mxu0 %v4035
        %4160 = vmatpush.msra.mxu0 %v4033
        %4161 = vmatpush.msra.mxu0 %v4031
        %4162 = vmatpush.msra.mxu0 %v4029
        %4163 = vmatpush.msra.mxu0 %v4027
        %4164 = vmatpush.msra.mxu0 %v4025
        %4165 = vmatpush.msra.mxu0 %v4023
        %4166 = vmatmul.f32.gmra.mxu0 %v4014
        %v4167 = vpop.f32.mrf.mxu0
        %v4168 = vadd.f32 %v4089, %v4167
        %4169 = vmatmul.f32.gmra.mxu0 %v4016
        %v4170 = vpop.f32.mrf.mxu0
        %v4171 = vadd.f32 %v4089, %v4170
        %4172 = vmatmul.f32.gmra.mxu0 %v4018
        %v4173 = vpop.f32.mrf.mxu0
        %v4174 = vadd.f32 %v4089, %v4173
        %4175 = vmatmul.f32.gmra.mxu0 %v4020
        %v4176 = vpop.f32.mrf.mxu0
        %v4177 = vadd.f32 %v4089, %v4176
        %4178 = vdwg.mxu0
        %4179 = vmatpush.msra.mxu0 %v4085
        %4180 = vmatpush.msra.mxu0 %v4083
        %4181 = vmatpush.msra.mxu0 %v4081
        %4182 = vmatpush.msra.mxu0 %v4079
        %4183 = vmatpush.msra.mxu0 %v4077
        %4184 = vmatpush.msra.mxu0 %v4075
        %4185 = vmatpush.msra.mxu0 %v4073
        %4186 = vmatpush.msra.mxu0 %v4071
        %4187 = vmatpush.msra.mxu0 %v4069
        %4188 = vmatpush.msra.mxu0 %v4067
        %4189 = vmatpush.msra.mxu0 %v4065
        %4190 = vmatpush.msra.mxu0 %v4063
        %4191 = vmatpush.msra.mxu0 %v4061
        %4192 = vmatpush.msra.mxu0 %v4059
        %4193 = vmatpush.msra.mxu0 %v4057
        %4194 = vmatpush.msra.mxu0 %v4055
        %4195 = vmatmul.f32.gmra.mxu0 %v4015
        %v4196 = vpop.f32.mrf.mxu0
        %v4197 = vadd.f32 %v4168, %v4196
        %4198 = vmatmul.f32.gmra.mxu0 %v4017
        %v4199 = vpop.f32.mrf.mxu0
        %v4200 = vadd.f32 %v4171, %v4199
        %4201 = vmatmul.f32.gmra.mxu0 %v4019
        %v4202 = vpop.f32.mrf.mxu0
        %v4203 = vadd.f32 %v4174, %v4202
        %4204 = vmatmul.f32.gmra.mxu0 %v4021
        %v4205 = vpop.f32.mrf.mxu0
        %v4206 = vadd.f32 %v4177, %v4205
        %4207 = vdwg.mxu0
        %v4208 = vtanh.pop %v4139
        %v4209 = vtanh.pop %v4197
        %v4210 = vtanh.pop %v4142
        %v4211 = vtanh.pop %v4200
        %v4212 = vtanh.pop %v4145
        %v4213 = vtanh.pop %v4203
        %v4214 = vtanh.pop %v4148
        %v4215 = vtanh.pop %v4206
        %v4216 = vld [vmem:[%s12] sm:$0xff]
        %v4217 = vld [vmem:[%s12 + $0x8] sm:$0xff]
        %v4218 = vld [vmem:[%s12 + $0x10] sm:$0xff]
        %v4219 = vld [vmem:[%s12 + $0x18] sm:$0xff]
        %v4220 = vld [vmem:[%s12 + $0x20] sm:$0xff]
        %v4221 = vld [vmem:[%s12 + $0x28] sm:$0xff]
        %v4222 = vld [vmem:[%s12 + $0x30] sm:$0xff]
        %v4223 = vld [vmem:[%s12 + $0x38] sm:$0xff]
        %v4224 = vld [vmem:[%s12 + $0x40] sm:$0xff]
        %v4225 = vld [vmem:[%s12 + $0x48] sm:$0xff]
        %v4226 = vld [vmem:[%s12 + $0x50] sm:$0xff]
        %v4227 = vld [vmem:[%s12 + $0x58] sm:$0xff]
        %v4228 = vld [vmem:[%s12 + $0x60] sm:$0xff]
        %v4229 = vld [vmem:[%s12 + $0x68] sm:$0xff]
        %v4230 = vld [vmem:[%s12 + $0x70] sm:$0xff]
        %v4231 = vld [vmem:[%s12 + $0x78] sm:$0xff]
        %v4232 = vld [vmem:[%s12 + $0x80] sm:$0xff]
        %v4233 = vld [vmem:[%s12 + $0x88] sm:$0xff]
        %v4234 = vld [vmem:[%s12 + $0x90] sm:$0xff]
        %v4235 = vld [vmem:[%s12 + $0x98] sm:$0xff]
        %v4236 = vld [vmem:[%s12 + $0xa0] sm:$0xff]
        %v4237 = vld [vmem:[%s12 + $0xa8] sm:$0xff]
        %v4238 = vld [vmem:[%s12 + $0xb0] sm:$0xff]
        %v4239 = vld [vmem:[%s12 + $0xb8] sm:$0xff]
        %v4240 = vld [vmem:[%s12 + $0xc0] sm:$0xff]
        %v4241 = vld [vmem:[%s12 + $0xc8] sm:$0xff]
        %v4242 = vld [vmem:[%s12 + $0xd0] sm:$0xff]
        %v4243 = vld [vmem:[%s12 + $0xd8] sm:$0xff]
        %v4244 = vld [vmem:[%s12 + $0xe0] sm:$0xff]
        %v4245 = vld [vmem:[%s12 + $0xe8] sm:$0xff]
        %v4246 = vld [vmem:[%s12 + $0xf0] sm:$0xff]
        %v4247 = vld [vmem:[%s12 + $0xf8] sm:$0xff]
        %v4248 = vld [vmem:[%s12 + $0x100] sm:$0xff]
        %v4249 = vld [vmem:[%s12 + $0x108] sm:$0xff]
        %v4250 = vld [vmem:[%s12 + $0x110] sm:$0xff]
        %v4251 = vld [vmem:[%s12 + $0x118] sm:$0xff]
        %v4252 = vld [vmem:[%s12 + $0x120] sm:$0xff]
        %v4253 = vld [vmem:[%s12 + $0x128] sm:$0xff]
        %v4254 = vld [vmem:[%s12 + $0x130] sm:$0xff]
        %v4255 = vld [vmem:[%s12 + $0x138] sm:$0xff]
        %v4256 = vld [vmem:[%s12 + $0x140] sm:$0xff]
        %v4257 = vld [vmem:[%s12 + $0x148] sm:$0xff]
        %v4258 = vld [vmem:[%s12 + $0x150] sm:$0xff]
        %v4259 = vld [vmem:[%s12 + $0x158] sm:$0xff]
        %v4260 = vld [vmem:[%s12 + $0x160] sm:$0xff]
        %v4261 = vld [vmem:[%s12 + $0x168] sm:$0xff]
        %v4262 = vld [vmem:[%s12 + $0x170] sm:$0xff]
        %v4263 = vld [vmem:[%s12 + $0x178] sm:$0xff]
        %v4264 = vld [vmem:[%s12 + $0x180] sm:$0xff]
        %v4265 = vld [vmem:[%s12 + $0x188] sm:$0xff]
        %v4266 = vld [vmem:[%s12 + $0x190] sm:$0xff]
        %v4267 = vld [vmem:[%s12 + $0x198] sm:$0xff]
        %v4268 = vld [vmem:[%s12 + $0x1a0] sm:$0xff]
        %v4269 = vld [vmem:[%s12 + $0x1a8] sm:$0xff]
        %v4270 = vld [vmem:[%s12 + $0x1b0] sm:$0xff]
        %v4271 = vld [vmem:[%s12 + $0x1b8] sm:$0xff]
        %v4272 = vld [vmem:[%s12 + $0x1c0] sm:$0xff]
        %v4273 = vld [vmem:[%s12 + $0x1c8] sm:$0xff]
        %v4274 = vld [vmem:[%s12 + $0x1d0] sm:$0xff]
        %v4275 = vld [vmem:[%s12 + $0x1d8] sm:$0xff]
        %v4276 = vld [vmem:[%s12 + $0x1e0] sm:$0xff]
        %v4277 = vld [vmem:[%s12 + $0x1e8] sm:$0xff]
        %v4278 = vld [vmem:[%s12 + $0x1f0] sm:$0xff]
        %v4279 = vld [vmem:[%s12 + $0x1f8] sm:$0xff]
        %v4280 = vld [vmem:[%s12 + $0x200] sm:$0xff]
        %v4281 = vld [vmem:[%s12 + $0x208] sm:$0xff]
        %v4282 = vld [vmem:[%s12 + $0x210] sm:$0xff]
        %v4283 = vld [vmem:[%s12 + $0x218] sm:$0xff]
        %v4284 = vld [vmem:[%s12 + $0x220] sm:$0xff]
        %v4285 = vld [vmem:[%s12 + $0x228] sm:$0xff]
        %v4286 = vld [vmem:[%s12 + $0x230] sm:$0xff]
        %v4287 = vld [vmem:[%s12 + $0x238] sm:$0xff]
        %v4288 = vld [vmem:[%s12 + $0x240] sm:$0xff]
        %v4289 = vld [vmem:[%s12 + $0x248] sm:$0xff]
        %v4290 = vld [vmem:[%s12 + $0x250] sm:$0xff]
        %v4291 = vld [vmem:[%s12 + $0x258] sm:$0xff]
        %v4292 = vld [vmem:[%s12 + $0x260] sm:$0xff]
        %v4293 = vld [vmem:[%s12 + $0x268] sm:$0xff]
        %v4294 = vld [vmem:[%s12 + $0x270] sm:$0xff]
        %v4295 = vld [vmem:[%s12 + $0x278] sm:$0xff]
        %v4296 = vld [vmem:[%s12 + $0x280] sm:$0xff]
        %v4297 = vld [vmem:[%s12 + $0x288] sm:$0xff]
        %v4298 = vld [vmem:[%s12 + $0x290] sm:$0xff]
        %v4299 = vld [vmem:[%s12 + $0x298] sm:$0xff]
        %v4300 = vld [vmem:[%s12 + $0x2a0] sm:$0xff]
        %v4301 = vld [vmem:[%s12 + $0x2a8] sm:$0xff]
        %v4302 = vld [vmem:[%s12 + $0x2b0] sm:$0xff]
        %v4303 = vld [vmem:[%s12 + $0x2b8] sm:$0xff]
        %v4304 = vld [vmem:[%s12 + $0x2c0] sm:$0xff]
        %v4305 = vld [vmem:[%s12 + $0x2c8] sm:$0xff]
        %v4306 = vld [vmem:[%s12 + $0x2d0] sm:$0xff]
        %v4307 = vld [vmem:[%s12 + $0x2d8] sm:$0xff]
        %v4308 = vld [vmem:[%s12 + $0x2e0] sm:$0xff]
        %v4309 = vld [vmem:[%s12 + $0x2e8] sm:$0xff]
        %v4310 = vld [vmem:[%s12 + $0x2f0] sm:$0xff]
        %v4311 = vld [vmem:[%s12 + $0x2f8] sm:$0xff]
        %v4312 = vld [vmem:[#allocation7] sm:$0xff]
        %v4313 = vld [vmem:[#allocation7 + $0x8] sm:$0xff]
        %v4314 = vld [vmem:[#allocation7 + $0x10] sm:$0xff]
        %v4315 = vld [vmem:[#allocation7 + $0x18] sm:$0xff]
        %v4316 = vld [vmem:[#allocation7 + $0x20] sm:$0xff]
        %v4317 = vld [vmem:[#allocation7 + $0x28] sm:$0xff]
        %v4318 = vld [vmem:[#allocation7 + $0x30] sm:$0xff]
        %v4319 = vld [vmem:[#allocation7 + $0x38] sm:$0xff]
        %v4320 = vld [vmem:[#allocation7 + $0x40] sm:$0xff]
        %v4321 = vld [vmem:[#allocation7 + $0x48] sm:$0xff]
        %v4322 = vld [vmem:[#allocation7 + $0x50] sm:$0xff]
        %v4323 = vld [vmem:[#allocation7 + $0x58] sm:$0xff]
        %vm4324 = vcmask 261120
        %v4326 = vsel %vm4324, %v3802, 0
        %v4329 = vsel %vm4324, %v3803, 0
        %v4332 = vsel %vm4324, %v3804, 0
        %v4335 = vsel %vm4324, %v3805, 0
        %4337 = vmatpush.msra.mxu0 0.0
        %4338 = vmatpush.msra.mxu0 0.0
        %4339 = vmatpush.msra.mxu0 0.0
        %4340 = vmatpush.msra.mxu0 0.0
        %4341 = vmatpush.msra.mxu0 0.0
        %4342 = vmatpush.msra.mxu0 0.0
        %4343 = vmatpush.msra.mxu0 0.0
        %4344 = vmatpush.msra.mxu0 0.0
        %4345 = vmatpush.msra.mxu0 0.0
        %4346 = vmatpush.msra.mxu0 0.0
        %4347 = vmatpush.msra.mxu0 0.0
        %4348 = vmatpush.msra.mxu0 0.0
        %4349 = vmatpush.msra.mxu0 %v4321
        %4350 = vmatpush.msra.mxu0 %v4318
        %4351 = vmatpush.msra.mxu0 %v4315
        %4352 = vmatpush.msra.mxu0 %v4312
        %4353 = vmatmul.f32.gmra.mxu0 %v4326
        %v4354 = vpop.f32.mrf.mxu0
        %v4355 = vadd.f32 0.0, %v4354
        %4356 = vmatmul.f32.gmra.mxu0 %v4329
        %v4357 = vpop.f32.mrf.mxu0
        %v4358 = vadd.f32 0.0, %v4357
        %4359 = vmatmul.f32.gmra.mxu0 %v4332
        %v4360 = vpop.f32.mrf.mxu0
        %v4361 = vadd.f32 0.0, %v4360
        %4362 = vmatmul.f32.gmra.mxu0 %v4335
        %v4363 = vpop.f32.mrf.mxu0
        %v4364 = vadd.f32 0.0, %v4363
        %4365 = vdwg.mxu0
        %4366 = vmatpush.msra.mxu0 0.0
        %4367 = vmatpush.msra.mxu0 0.0
        %4368 = vmatpush.msra.mxu0 0.0
        %4369 = vmatpush.msra.mxu0 0.0
        %4370 = vmatpush.msra.mxu0 0.0
        %4371 = vmatpush.msra.mxu0 0.0
        %4372 = vmatpush.msra.mxu0 0.0
        %4373 = vmatpush.msra.mxu0 0.0
        %4374 = vmatpush.msra.mxu0 0.0
        %4375 = vmatpush.msra.mxu0 0.0
        %4376 = vmatpush.msra.mxu0 0.0
        %4377 = vmatpush.msra.mxu0 0.0
        %4378 = vmatpush.msra.mxu0 %v4322
        %4379 = vmatpush.msra.mxu0 %v4319
        %4380 = vmatpush.msra.mxu0 %v4316
        %4381 = vmatpush.msra.mxu0 %v4313
        %4382 = vmatmul.f32.gmra.mxu0 %v4326
        %v4383 = vpop.f32.mrf.mxu0
        %v4384 = vadd.f32 0.0, %v4383
        %4385 = vmatmul.f32.gmra.mxu0 %v4329
        %v4386 = vpop.f32.mrf.mxu0
        %v4387 = vadd.f32 0.0, %v4386
        %4388 = vmatmul.f32.gmra.mxu0 %v4332
        %v4389 = vpop.f32.mrf.mxu0
        %v4390 = vadd.f32 0.0, %v4389
        %4391 = vmatmul.f32.gmra.mxu0 %v4335
        %v4392 = vpop.f32.mrf.mxu0
        %v4393 = vadd.f32 0.0, %v4392
        %4394 = vdwg.mxu0
        %4395 = vmatpush.msra.mxu0 0.0
        %4396 = vmatpush.msra.mxu0 0.0
        %4397 = vmatpush.msra.mxu0 0.0
        %4398 = vmatpush.msra.mxu0 0.0
        %4399 = vmatpush.msra.mxu0 0.0
        %4400 = vmatpush.msra.mxu0 0.0
        %4401 = vmatpush.msra.mxu0 0.0
        %4402 = vmatpush.msra.mxu0 0.0
        %4403 = vmatpush.msra.mxu0 0.0
        %4404 = vmatpush.msra.mxu0 0.0
        %4405 = vmatpush.msra.mxu0 0.0
        %4406 = vmatpush.msra.mxu0 0.0
        %4407 = vmatpush.msra.mxu0 %v4323
        %4408 = vmatpush.msra.mxu0 %v4320
        %4409 = vmatpush.msra.mxu0 %v4317
        %4410 = vmatpush.msra.mxu0 %v4314
        %4411 = vmatmul.f32.gmra.mxu0 %v4326
        %v4412 = vpop.f32.mrf.mxu0
        %v4413 = vadd.f32 0.0, %v4412
        %4414 = vmatmul.f32.gmra.mxu0 %v4329
        %v4415 = vpop.f32.mrf.mxu0
        %v4416 = vadd.f32 0.0, %v4415
        %4417 = vmatmul.f32.gmra.mxu0 %v4332
        %v4418 = vpop.f32.mrf.mxu0
        %v4419 = vadd.f32 0.0, %v4418
        %4420 = vmatmul.f32.gmra.mxu0 %v4335
        %v4421 = vpop.f32.mrf.mxu0
        %v4422 = vadd.f32 0.0, %v4421
        %4423 = vdwg.mxu0
        %4424 = vmatpush.msra.mxu0 %v4261
        %4425 = vmatpush.msra.mxu0 %v4258
        %4426 = vmatpush.msra.mxu0 %v4255
        %4427 = vmatpush.msra.mxu0 %v4252
        %4428 = vmatpush.msra.mxu0 %v4249
        %4429 = vmatpush.msra.mxu0 %v4246
        %4430 = vmatpush.msra.mxu0 %v4243
        %4431 = vmatpush.msra.mxu0 %v4240
        %4432 = vmatpush.msra.mxu0 %v4237
        %4433 = vmatpush.msra.mxu0 %v4234
        %4434 = vmatpush.msra.mxu0 %v4231
        %4435 = vmatpush.msra.mxu0 %v4228
        %4436 = vmatpush.msra.mxu0 %v4225
        %4437 = vmatpush.msra.mxu0 %v4222
        %4438 = vmatpush.msra.mxu0 %v4219
        %4439 = vmatpush.msra.mxu0 %v4216
        %4440 = vmatmul.f32.gmra.mxu0 %v4208
        %v4441 = vpop.f32.mrf.mxu0
        %v4442 = vadd.f32 %v4355, %v4441
        %4443 = vmatmul.f32.gmra.mxu0 %v4210
        %v4444 = vpop.f32.mrf.mxu0
        %v4445 = vadd.f32 %v4358, %v4444
        %4446 = vmatmul.f32.gmra.mxu0 %v4212
        %v4447 = vpop.f32.mrf.mxu0
        %v4448 = vadd.f32 %v4361, %v4447
        %4449 = vmatmul.f32.gmra.mxu0 %v4214
        %v4450 = vpop.f32.mrf.mxu0
        %v4451 = vadd.f32 %v4364, %v4450
        %4452 = vdwg.mxu0
        %4453 = vmatpush.msra.mxu0 %v4309
        %4454 = vmatpush.msra.mxu0 %v4306
        %4455 = vmatpush.msra.mxu0 %v4303
        %4456 = vmatpush.msra.mxu0 %v4300
        %4457 = vmatpush.msra.mxu0 %v4297
        %4458 = vmatpush.msra.mxu0 %v4294
        %4459 = vmatpush.msra.mxu0 %v4291
        %4460 = vmatpush.msra.mxu0 %v4288
        %4461 = vmatpush.msra.mxu0 %v4285
        %4462 = vmatpush.msra.mxu0 %v4282
        %4463 = vmatpush.msra.mxu0 %v4279
        %4464 = vmatpush.msra.mxu0 %v4276
        %4465 = vmatpush.msra.mxu0 %v4273
        %4466 = vmatpush.msra.mxu0 %v4270
        %4467 = vmatpush.msra.mxu0 %v4267
        %4468 = vmatpush.msra.mxu0 %v4264
        %4469 = vmatmul.f32.gmra.mxu0 %v4209
        %v4470 = vpop.f32.mrf.mxu0
        %v4471 = vadd.f32 %v4442, %v4470
        %4472 = vmatmul.f32.gmra.mxu0 %v4211
        %v4473 = vpop.f32.mrf.mxu0
        %v4474 = vadd.f32 %v4445, %v4473
        %4475 = vmatmul.f32.gmra.mxu0 %v4213
        %v4476 = vpop.f32.mrf.mxu0
        %v4477 = vadd.f32 %v4448, %v4476
        %4478 = vmatmul.f32.gmra.mxu0 %v4215
        %v4479 = vpop.f32.mrf.mxu0
        %v4480 = vadd.f32 %v4451, %v4479
        %4481 = vdwg.mxu0
        %4482 = vmatpush.msra.mxu0 %v4262
        %4483 = vmatpush.msra.mxu0 %v4259
        %4484 = vmatpush.msra.mxu0 %v4256
        %4485 = vmatpush.msra.mxu0 %v4253
        %4486 = vmatpush.msra.mxu0 %v4250
        %4487 = vmatpush.msra.mxu0 %v4247
        %4488 = vmatpush.msra.mxu0 %v4244
        %4489 = vmatpush.msra.mxu0 %v4241
        %4490 = vmatpush.msra.mxu0 %v4238
        %4491 = vmatpush.msra.mxu0 %v4235
        %4492 = vmatpush.msra.mxu0 %v4232
        %4493 = vmatpush.msra.mxu0 %v4229
        %4494 = vmatpush.msra.mxu0 %v4226
        %4495 = vmatpush.msra.mxu0 %v4223
        %4496 = vmatpush.msra.mxu0 %v4220
        %4497 = vmatpush.msra.mxu0 %v4217
        %4498 = vmatmul.f32.gmra.mxu0 %v4208
        %v4499 = vpop.f32.mrf.mxu0
        %v4500 = vadd.f32 %v4384, %v4499
        %4501 = vmatmul.f32.gmra.mxu0 %v4210
        %v4502 = vpop.f32.mrf.mxu0
        %v4503 = vadd.f32 %v4387, %v4502
        %4504 = vmatmul.f32.gmra.mxu0 %v4212
        %v4505 = vpop.f32.mrf.mxu0
        %v4506 = vadd.f32 %v4390, %v4505
        %4507 = vmatmul.f32.gmra.mxu0 %v4214
        %v4508 = vpop.f32.mrf.mxu0
        %v4509 = vadd.f32 %v4393, %v4508
        %4510 = vdwg.mxu0
        %4511 = vmatpush.msra.mxu0 %v4310
        %4512 = vmatpush.msra.mxu0 %v4307
        %4513 = vmatpush.msra.mxu0 %v4304
        %4514 = vmatpush.msra.mxu0 %v4301
        %4515 = vmatpush.msra.mxu0 %v4298
        %4516 = vmatpush.msra.mxu0 %v4295
        %4517 = vmatpush.msra.mxu0 %v4292
        %4518 = vmatpush.msra.mxu0 %v4289
        %4519 = vmatpush.msra.mxu0 %v4286
        %4520 = vmatpush.msra.mxu0 %v4283
        %4521 = vmatpush.msra.mxu0 %v4280
        %4522 = vmatpush.msra.mxu0 %v4277
        %4523 = vmatpush.msra.mxu0 %v4274
        %4524 = vmatpush.msra.mxu0 %v4271
        %4525 = vmatpush.msra.mxu0 %v4268
        %4526 = vmatpush.msra.mxu0 %v4265
        %4527 = vmatmul.f32.gmra.mxu0 %v4209
        %v4528 = vpop.f32.mrf.mxu0
        %v4529 = vadd.f32 %v4500, %v4528
        %4530 = vmatmul.f32.gmra.mxu0 %v4211
        %v4531 = vpop.f32.mrf.mxu0
        %v4532 = vadd.f32 %v4503, %v4531
        %4533 = vmatmul.f32.gmra.mxu0 %v4213
        %v4534 = vpop.f32.mrf.mxu0
        %v4535 = vadd.f32 %v4506, %v4534
        %4536 = vmatmul.f32.gmra.mxu0 %v4215
        %v4537 = vpop.f32.mrf.mxu0
        %v4538 = vadd.f32 %v4509, %v4537
        %4539 = vdwg.mxu0
        %4540 = vmatpush.msra.mxu0 %v4263
        %4541 = vmatpush.msra.mxu0 %v4260
        %4542 = vmatpush.msra.mxu0 %v4257
        %4543 = vmatpush.msra.mxu0 %v4254
        %4544 = vmatpush.msra.mxu0 %v4251
        %4545 = vmatpush.msra.mxu0 %v4248
        %4546 = vmatpush.msra.mxu0 %v4245
        %4547 = vmatpush.msra.mxu0 %v4242
        %4548 = vmatpush.msra.mxu0 %v4239
        %4549 = vmatpush.msra.mxu0 %v4236
        %4550 = vmatpush.msra.mxu0 %v4233
        %4551 = vmatpush.msra.mxu0 %v4230
        %4552 = vmatpush.msra.mxu0 %v4227
        %4553 = vmatpush.msra.mxu0 %v4224
        %4554 = vmatpush.msra.mxu0 %v4221
        %4555 = vmatpush.msra.mxu0 %v4218
        %4556 = vmatmul.f32.gmra.mxu0 %v4208
        %v4557 = vpop.f32.mrf.mxu0
        %v4558 = vadd.f32 %v4413, %v4557
        %4559 = vmatmul.f32.gmra.mxu0 %v4210
        %v4560 = vpop.f32.mrf.mxu0
        %v4561 = vadd.f32 %v4416, %v4560
        %4562 = vmatmul.f32.gmra.mxu0 %v4212
        %v4563 = vpop.f32.mrf.mxu0
        %v4564 = vadd.f32 %v4419, %v4563
        %4565 = vmatmul.f32.gmra.mxu0 %v4214
        %v4566 = vpop.f32.mrf.mxu0
        %v4567 = vadd.f32 %v4422, %v4566
        %4568 = vdwg.mxu0
        %4569 = vmatpush.msra.mxu0 %v4311
        %4570 = vmatpush.msra.mxu0 %v4308
        %4571 = vmatpush.msra.mxu0 %v4305
        %4572 = vmatpush.msra.mxu0 %v4302
        %4573 = vmatpush.msra.mxu0 %v4299
        %4574 = vmatpush.msra.mxu0 %v4296
        %4575 = vmatpush.msra.mxu0 %v4293
        %4576 = vmatpush.msra.mxu0 %v4290
        %4577 = vmatpush.msra.mxu0 %v4287
        %4578 = vmatpush.msra.mxu0 %v4284
        %4579 = vmatpush.msra.mxu0 %v4281
        %4580 = vmatpush.msra.mxu0 %v4278
        %4581 = vmatpush.msra.mxu0 %v4275
        %4582 = vmatpush.msra.mxu0 %v4272
        %4583 = vmatpush.msra.mxu0 %v4269
        %4584 = vmatpush.msra.mxu0 %v4266
        %4585 = vmatmul.f32.gmra.mxu0 %v4209
        %v4586 = vpop.f32.mrf.mxu0
        %v4587 = vadd.f32 %v4558, %v4586
        %4588 = vmatmul.f32.gmra.mxu0 %v4211
        %v4589 = vpop.f32.mrf.mxu0
        %v4590 = vadd.f32 %v4561, %v4589
        %4591 = vmatmul.f32.gmra.mxu0 %v4213
        %v4592 = vpop.f32.mrf.mxu0
        %v4593 = vadd.f32 %v4564, %v4592
        %4594 = vmatmul.f32.gmra.mxu0 %v4215
        %v4595 = vpop.f32.mrf.mxu0
        %v4596 = vadd.f32 %v4567, %v4595
        %4597 = vdwg.mxu0
        %v4598 = vld [vmem:[%s14] sm:$0x7]
        %v4600 = vperm.slane %v4598, 0
        %v4601 = vperm.slane %v4598, 1
        %v4602 = vperm.slane %v4598, 2
        %v4606 = vadd.f32 %v4471, %v4600
        %v4607 = vadd.f32 %v4529, %v4601
        %v4608 = vadd.f32 %v4587, %v4602
        %v4609 = vadd.f32 %v4474, %v4600
        %v4610 = vadd.f32 %v4532, %v4601
        %v4611 = vadd.f32 %v4590, %v4602
        %v4612 = vadd.f32 %v4477, %v4600
        %v4613 = vadd.f32 %v4535, %v4601
        %v4614 = vadd.f32 %v4593, %v4602
        %v4615 = vadd.f32 %v4480, %v4600
        %v4616 = vadd.f32 %v4538, %v4601
        %v4617 = vadd.f32 %v4596, %v4602
        %v4618 = vtanh.pop %v4606
        %v4619 = vtanh.pop %v4607
        %v4620 = vtanh.pop %v4608
        %v4621 = vtanh.pop %v4609
        %v4622 = vtanh.pop %v4610
        %v4623 = vtanh.pop %v4611
        %v4624 = vtanh.pop %v4612
        %v4625 = vtanh.pop %v4613
        %v4626 = vtanh.pop %v4614
        %v4627 = vtanh.pop %v4615
        %v4628 = vtanh.pop %v4616
        %v4629 = vtanh.pop %v4617
        %v4630 = vld [vmem:[%s15] sm:$0xff]
        %v4631 = vld [vmem:[%s15 + $0x8] sm:$0xff]
        %v4632 = vld [vmem:[%s15 + $0x10] sm:$0xff]
        %v4633 = vld [vmem:[%s15 + $0x18] sm:$0xff]
        %v4634 = vld [vmem:[%s15 + $0x20] sm:$0xff]
        %v4635 = vld [vmem:[%s15 + $0x28] sm:$0xff]
        %v4636 = vld [vmem:[%s15 + $0x30] sm:$0xff]
        %v4637 = vld [vmem:[%s15 + $0x38] sm:$0xff]
        %v4638 = vld [vmem:[%s15 + $0x40] sm:$0xff]
        %v4639 = vld [vmem:[%s15 + $0x48] sm:$0xff]
        %v4640 = vld [vmem:[%s15 + $0x50] sm:$0xff]
        %v4641 = vld [vmem:[%s15 + $0x58] sm:$0xff]
        %v4642 = vld [vmem:[%s15 + $0x60] sm:$0xff]
        %v4643 = vld [vmem:[%s15 + $0x68] sm:$0xff]
        %v4644 = vld [vmem:[%s15 + $0x70] sm:$0xff]
        %v4645 = vld [vmem:[%s15 + $0x78] sm:$0xff]
        %v4646 = vld [vmem:[%s15 + $0x80] sm:$0xff]
        %v4647 = vld [vmem:[%s15 + $0x88] sm:$0xff]
        %v4648 = vld [vmem:[%s15 + $0x90] sm:$0xff]
        %v4649 = vld [vmem:[%s15 + $0x98] sm:$0xff]
        %v4650 = vld [vmem:[%s15 + $0xa0] sm:$0xff]
        %v4651 = vld [vmem:[%s15 + $0xa8] sm:$0xff]
        %v4652 = vld [vmem:[%s15 + $0xb0] sm:$0xff]
        %v4653 = vld [vmem:[%s15 + $0xb8] sm:$0xff]
        %v4654 = vld [vmem:[%s15 + $0xc0] sm:$0xff]
        %v4655 = vld [vmem:[%s15 + $0xc8] sm:$0xff]
        %v4656 = vld [vmem:[%s15 + $0xd0] sm:$0xff]
        %v4657 = vld [vmem:[%s15 + $0xd8] sm:$0xff]
        %v4658 = vld [vmem:[%s15 + $0xe0] sm:$0xff]
        %v4659 = vld [vmem:[%s15 + $0xe8] sm:$0xff]
        %v4660 = vld [vmem:[%s15 + $0xf0] sm:$0xff]
        %v4661 = vld [vmem:[%s15 + $0xf8] sm:$0xff]
        %v4662 = vld [vmem:[%s15 + $0x100] sm:$0xff]
        %v4663 = vld [vmem:[%s15 + $0x108] sm:$0xff]
        %v4664 = vld [vmem:[%s15 + $0x110] sm:$0xff]
        %v4665 = vld [vmem:[%s15 + $0x118] sm:$0xff]
        %v4666 = vld [vmem:[%s15 + $0x120] sm:$0xff]
        %v4667 = vld [vmem:[%s15 + $0x128] sm:$0xff]
        %v4668 = vld [vmem:[%s15 + $0x130] sm:$0xff]
        %v4669 = vld [vmem:[%s15 + $0x138] sm:$0xff]
        %v4670 = vld [vmem:[%s15 + $0x140] sm:$0xff]
        %v4671 = vld [vmem:[%s15 + $0x148] sm:$0xff]
        %v4672 = vld [vmem:[%s15 + $0x150] sm:$0xff]
        %v4673 = vld [vmem:[%s15 + $0x158] sm:$0xff]
        %v4674 = vld [vmem:[%s15 + $0x160] sm:$0xff]
        %v4675 = vld [vmem:[%s15 + $0x168] sm:$0xff]
        %v4676 = vld [vmem:[%s15 + $0x170] sm:$0xff]
        %v4677 = vld [vmem:[%s15 + $0x178] sm:$0xff]
        %v4678 = vld [vmem:[%s15 + $0x180] sm:$0xff]
        %v4679 = vld [vmem:[%s15 + $0x188] sm:$0xff]
        %v4680 = vld [vmem:[%s15 + $0x190] sm:$0xff]
        %v4681 = vld [vmem:[%s15 + $0x198] sm:$0xff]
        %v4682 = vld [vmem:[%s15 + $0x1a0] sm:$0xff]
        %v4683 = vld [vmem:[%s15 + $0x1a8] sm:$0xff]
        %v4684 = vld [vmem:[%s15 + $0x1b0] sm:$0xff]
        %v4685 = vld [vmem:[%s15 + $0x1b8] sm:$0xff]
        %v4686 = vld [vmem:[%s15 + $0x1c0] sm:$0xff]
        %v4687 = vld [vmem:[%s15 + $0x1c8] sm:$0xff]
        %v4688 = vld [vmem:[%s15 + $0x1d0] sm:$0xff]
        %v4689 = vld [vmem:[%s15 + $0x1d8] sm:$0xff]
        %v4690 = vld [vmem:[%s15 + $0x1e0] sm:$0xff]
        %v4691 = vld [vmem:[%s15 + $0x1e8] sm:$0xff]
        %v4692 = vld [vmem:[%s15 + $0x1f0] sm:$0xff]
        %v4693 = vld [vmem:[%s15 + $0x1f8] sm:$0xff]
        %v4694 = vld [vmem:[%s15 + $0x200] sm:$0xff]
        %v4695 = vld [vmem:[%s15 + $0x208] sm:$0xff]
        %v4696 = vld [vmem:[%s15 + $0x210] sm:$0xff]
        %v4697 = vld [vmem:[%s15 + $0x218] sm:$0xff]
        %v4698 = vld [vmem:[%s15 + $0x220] sm:$0xff]
        %v4699 = vld [vmem:[%s15 + $0x228] sm:$0xff]
        %v4700 = vld [vmem:[%s15 + $0x230] sm:$0xff]
        %v4701 = vld [vmem:[%s15 + $0x238] sm:$0xff]
        %v4702 = vld [vmem:[%s15 + $0x240] sm:$0xff]
        %v4703 = vld [vmem:[%s15 + $0x248] sm:$0xff]
        %v4704 = vld [vmem:[%s15 + $0x250] sm:$0xff]
        %v4705 = vld [vmem:[%s15 + $0x258] sm:$0xff]
        %v4706 = vld [vmem:[%s15 + $0x260] sm:$0xff]
        %v4707 = vld [vmem:[%s15 + $0x268] sm:$0xff]
        %v4708 = vld [vmem:[%s15 + $0x270] sm:$0xff]
        %v4709 = vld [vmem:[%s15 + $0x278] sm:$0xff]
        %v4710 = vld [vmem:[%s15 + $0x280] sm:$0xff]
        %v4711 = vld [vmem:[%s15 + $0x288] sm:$0xff]
        %v4712 = vld [vmem:[%s15 + $0x290] sm:$0xff]
        %v4713 = vld [vmem:[%s15 + $0x298] sm:$0xff]
        %v4714 = vld [vmem:[%s15 + $0x2a0] sm:$0xff]
        %v4715 = vld [vmem:[%s15 + $0x2a8] sm:$0xff]
        %v4716 = vld [vmem:[%s15 + $0x2b0] sm:$0xff]
        %v4717 = vld [vmem:[%s15 + $0x2b8] sm:$0xff]
        %v4718 = vld [vmem:[%s15 + $0x2c0] sm:$0xff]
        %v4719 = vld [vmem:[%s15 + $0x2c8] sm:$0xff]
        %v4720 = vld [vmem:[%s15 + $0x2d0] sm:$0xff]
        %v4721 = vld [vmem:[%s15 + $0x2d8] sm:$0xff]
        %v4722 = vld [vmem:[%s15 + $0x2e0] sm:$0xff]
        %v4723 = vld [vmem:[%s15 + $0x2e8] sm:$0xff]
        %v4724 = vld [vmem:[%s15 + $0x2f0] sm:$0xff]
        %v4725 = vld [vmem:[%s15 + $0x2f8] sm:$0xff]
        %v4726 = vld [vmem:[%s16] sm:$0x3]
        %v4728 = vperm.slane %v4726, 0
        %v4729 = vperm.slane %v4726, 1
        %4732 = vmatpush.msra.mxu0 %v4660
        %4733 = vmatpush.msra.mxu0 %v4658
        %4734 = vmatpush.msra.mxu0 %v4656
        %4735 = vmatpush.msra.mxu0 %v4654
        %4736 = vmatpush.msra.mxu0 %v4652
        %4737 = vmatpush.msra.mxu0 %v4650
        %4738 = vmatpush.msra.mxu0 %v4648
        %4739 = vmatpush.msra.mxu0 %v4646
        %4740 = vmatpush.msra.mxu0 %v4644
        %4741 = vmatpush.msra.mxu0 %v4642
        %4742 = vmatpush.msra.mxu0 %v4640
        %4743 = vmatpush.msra.mxu0 %v4638
        %4744 = vmatpush.msra.mxu0 %v4636
        %4745 = vmatpush.msra.mxu0 %v4634
        %4746 = vmatpush.msra.mxu0 %v4632
        %4747 = vmatpush.msra.mxu0 %v4630
        %4748 = vmatmul.f32.gmra.mxu0 %v4618
        %v4749 = vpop.f32.mrf.mxu0
        %v4750 = vadd.f32 %v4728, %v4749
        %4751 = vmatmul.f32.gmra.mxu0 %v4621
        %v4752 = vpop.f32.mrf.mxu0
        %v4753 = vadd.f32 %v4728, %v4752
        %4754 = vmatmul.f32.gmra.mxu0 %v4624
        %v4755 = vpop.f32.mrf.mxu0
        %v4756 = vadd.f32 %v4728, %v4755
        %4757 = vmatmul.f32.gmra.mxu0 %v4627
        %v4758 = vpop.f32.mrf.mxu0
        %v4759 = vadd.f32 %v4728, %v4758
        %4760 = vdwg.mxu0
        %4761 = vmatpush.msra.mxu0 %v4692
        %4762 = vmatpush.msra.mxu0 %v4690
        %4763 = vmatpush.msra.mxu0 %v4688
        %4764 = vmatpush.msra.mxu0 %v4686
        %4765 = vmatpush.msra.mxu0 %v4684
        %4766 = vmatpush.msra.mxu0 %v4682
        %4767 = vmatpush.msra.mxu0 %v4680
        %4768 = vmatpush.msra.mxu0 %v4678
        %4769 = vmatpush.msra.mxu0 %v4676
        %4770 = vmatpush.msra.mxu0 %v4674
        %4771 = vmatpush.msra.mxu0 %v4672
        %4772 = vmatpush.msra.mxu0 %v4670
        %4773 = vmatpush.msra.mxu0 %v4668
        %4774 = vmatpush.msra.mxu0 %v4666
        %4775 = vmatpush.msra.mxu0 %v4664
        %4776 = vmatpush.msra.mxu0 %v4662
        %4777 = vmatmul.f32.gmra.mxu0 %v4619
        %v4778 = vpop.f32.mrf.mxu0
        %v4779 = vadd.f32 %v4750, %v4778
        %4780 = vmatmul.f32.gmra.mxu0 %v4622
        %v4781 = vpop.f32.mrf.mxu0
        %v4782 = vadd.f32 %v4753, %v4781
        %4783 = vmatmul.f32.gmra.mxu0 %v4625
        %v4784 = vpop.f32.mrf.mxu0
        %v4785 = vadd.f32 %v4756, %v4784
        %4786 = vmatmul.f32.gmra.mxu0 %v4628
        %v4787 = vpop.f32.mrf.mxu0
        %v4788 = vadd.f32 %v4759, %v4787
        %4789 = vdwg.mxu0
        %4790 = vmatpush.msra.mxu0 %v4724
        %4791 = vmatpush.msra.mxu0 %v4722
        %4792 = vmatpush.msra.mxu0 %v4720
        %4793 = vmatpush.msra.mxu0 %v4718
        %4794 = vmatpush.msra.mxu0 %v4716
        %4795 = vmatpush.msra.mxu0 %v4714
        %4796 = vmatpush.msra.mxu0 %v4712
        %4797 = vmatpush.msra.mxu0 %v4710
        %4798 = vmatpush.msra.mxu0 %v4708
        %4799 = vmatpush.msra.mxu0 %v4706
        %4800 = vmatpush.msra.mxu0 %v4704
        %4801 = vmatpush.msra.mxu0 %v4702
        %4802 = vmatpush.msra.mxu0 %v4700
        %4803 = vmatpush.msra.mxu0 %v4698
        %4804 = vmatpush.msra.mxu0 %v4696
        %4805 = vmatpush.msra.mxu0 %v4694
        %4806 = vmatmul.f32.gmra.mxu0 %v4620
        %v4807 = vpop.f32.mrf.mxu0
        %v4808 = vadd.f32 %v4779, %v4807
        %4809 = vmatmul.f32.gmra.mxu0 %v4623
        %v4810 = vpop.f32.mrf.mxu0
        %v4811 = vadd.f32 %v4782, %v4810
        %4812 = vmatmul.f32.gmra.mxu0 %v4626
        %v4813 = vpop.f32.mrf.mxu0
        %v4814 = vadd.f32 %v4785, %v4813
        %4815 = vmatmul.f32.gmra.mxu0 %v4629
        %v4816 = vpop.f32.mrf.mxu0
        %v4817 = vadd.f32 %v4788, %v4816
        %4818 = vdwg.mxu0
        %4819 = vmatpush.msra.mxu0 %v4661
        %4820 = vmatpush.msra.mxu0 %v4659
        %4821 = vmatpush.msra.mxu0 %v4657
        %4822 = vmatpush.msra.mxu0 %v4655
        %4823 = vmatpush.msra.mxu0 %v4653
        %4824 = vmatpush.msra.mxu0 %v4651
        %4825 = vmatpush.msra.mxu0 %v4649
        %4826 = vmatpush.msra.mxu0 %v4647
        %4827 = vmatpush.msra.mxu0 %v4645
        %4828 = vmatpush.msra.mxu0 %v4643
        %4829 = vmatpush.msra.mxu0 %v4641
        %4830 = vmatpush.msra.mxu0 %v4639
        %4831 = vmatpush.msra.mxu0 %v4637
        %4832 = vmatpush.msra.mxu0 %v4635
        %4833 = vmatpush.msra.mxu0 %v4633
        %4834 = vmatpush.msra.mxu0 %v4631
        %4835 = vmatmul.f32.gmra.mxu0 %v4618
        %v4836 = vpop.f32.mrf.mxu0
        %v4837 = vadd.f32 %v4729, %v4836
        %4838 = vmatmul.f32.gmra.mxu0 %v4621
        %v4839 = vpop.f32.mrf.mxu0
        %v4840 = vadd.f32 %v4729, %v4839
        %4841 = vmatmul.f32.gmra.mxu0 %v4624
        %v4842 = vpop.f32.mrf.mxu0
        %v4843 = vadd.f32 %v4729, %v4842
        %4844 = vmatmul.f32.gmra.mxu0 %v4627
        %v4845 = vpop.f32.mrf.mxu0
        %v4846 = vadd.f32 %v4729, %v4845
        %4847 = vdwg.mxu0
        %4848 = vmatpush.msra.mxu0 %v4693
        %4849 = vmatpush.msra.mxu0 %v4691
        %4850 = vmatpush.msra.mxu0 %v4689
        %4851 = vmatpush.msra.mxu0 %v4687
        %4852 = vmatpush.msra.mxu0 %v4685
        %4853 = vmatpush.msra.mxu0 %v4683
        %4854 = vmatpush.msra.mxu0 %v4681
        %4855 = vmatpush.msra.mxu0 %v4679
        %4856 = vmatpush.msra.mxu0 %v4677
        %4857 = vmatpush.msra.mxu0 %v4675
        %4858 = vmatpush.msra.mxu0 %v4673
        %4859 = vmatpush.msra.mxu0 %v4671
        %4860 = vmatpush.msra.mxu0 %v4669
        %4861 = vmatpush.msra.mxu0 %v4667
        %4862 = vmatpush.msra.mxu0 %v4665
        %4863 = vmatpush.msra.mxu0 %v4663
        %4864 = vmatmul.f32.gmra.mxu0 %v4619
        %v4865 = vpop.f32.mrf.mxu0
        %v4866 = vadd.f32 %v4837, %v4865
        %4867 = vmatmul.f32.gmra.mxu0 %v4622
        %v4868 = vpop.f32.mrf.mxu0
        %v4869 = vadd.f32 %v4840, %v4868
        %4870 = vmatmul.f32.gmra.mxu0 %v4625
        %v4871 = vpop.f32.mrf.mxu0
        %v4872 = vadd.f32 %v4843, %v4871
        %4873 = vmatmul.f32.gmra.mxu0 %v4628
        %v4874 = vpop.f32.mrf.mxu0
        %v4875 = vadd.f32 %v4846, %v4874
        %4876 = vdwg.mxu0
        %4877 = vmatpush.msra.mxu0 %v4725
        %4878 = vmatpush.msra.mxu0 %v4723
        %4879 = vmatpush.msra.mxu0 %v4721
        %4880 = vmatpush.msra.mxu0 %v4719
        %4881 = vmatpush.msra.mxu0 %v4717
        %4882 = vmatpush.msra.mxu0 %v4715
        %4883 = vmatpush.msra.mxu0 %v4713
        %4884 = vmatpush.msra.mxu0 %v4711
        %4885 = vmatpush.msra.mxu0 %v4709
        %4886 = vmatpush.msra.mxu0 %v4707
        %4887 = vmatpush.msra.mxu0 %v4705
        %4888 = vmatpush.msra.mxu0 %v4703
        %4889 = vmatpush.msra.mxu0 %v4701
        %4890 = vmatpush.msra.mxu0 %v4699
        %4891 = vmatpush.msra.mxu0 %v4697
        %4892 = vmatpush.msra.mxu0 %v4695
        %4893 = vmatmul.f32.gmra.mxu0 %v4620
        %v4894 = vpop.f32.mrf.mxu0
        %v4895 = vadd.f32 %v4866, %v4894
        %4896 = vmatmul.f32.gmra.mxu0 %v4623
        %v4897 = vpop.f32.mrf.mxu0
        %v4898 = vadd.f32 %v4869, %v4897
        %4899 = vmatmul.f32.gmra.mxu0 %v4626
        %v4900 = vpop.f32.mrf.mxu0
        %v4901 = vadd.f32 %v4872, %v4900
        %4902 = vmatmul.f32.gmra.mxu0 %v4629
        %v4903 = vpop.f32.mrf.mxu0
        %v4904 = vadd.f32 %v4875, %v4903
        %4905 = vdwg.mxu0
        %4906 = vst [vmem:[%s837] sm:$0xff] %v4808
        %4907 = vst [vmem:[%s837 + $0x8] sm:$0xff] %v4895
        %4908 = vst [vmem:[%s837 + $0x10] sm:$0xff] %v4811
        %4909 = vst [vmem:[%s837 + $0x18] sm:$0xff] %v4898
        %4910 = vst [vmem:[%s837 + $0x20] sm:$0xff] %v4814
        %4911 = vst [vmem:[%s837 + $0x28] sm:$0xff] %v4901
        %4912 = vst [vmem:[%s837 + $0x30] sm:$0xff] %v4817
        %4913 = vst [vmem:[%s837 + $0x38] sm:$0xff] %v4904
        %s4914 = smul.u32 4, %s30
        %p4915 = scmp.lt.s32.totalorder %s4914, 7
        %s4916 = scalar_select %p4915, %s4914, 7
        %s4917 = smul.addr %s4916, 2
        %s4918 = smul.addr %s4917, 8
        %s4919 = scalar_lea.vmem %s17, %s4918
        // Predicated region
        $region139: #{multitask_text_shared_forward.1} parent=121 // pred_check
          %p4920 = pneg %p420
        $region140: #{multitask_text_shared_forward.1} parent=121 // pred_check_branch
          %4922 = sbr.rel (%p4920) target = $region142
        $region141: #{multitask_text_shared_forward.1} parent=121 // pred_region
          %s4923 = smul.u32 4, %s30
        $region142: #{multitask_text_shared_forward.1} parent=121 // pred_fallthru
          _
      $region122: #{multitask_text_shared_forward.1} parent=5 // pred_fallthru
        _
      %p4924 = scmp.le.s32.totalorder 2, %s25
      // Predicated region
      $region143: #{multitask_text_shared_forward.1} parent=5 // pred_check
        %p4925 = pneg %p4924
      $region144: #{multitask_text_shared_forward.1} parent=5 // pred_check_branch
        %4927 = sbr.rel (%p4925) target = $region146
      $region145: #{multitask_text_shared_forward.1} parent=5 // pred_region
        %s4928 = ssub.s32 %s25, 2
        // Predicated region
        $region147: #{multitask_text_shared_forward.1} parent=145 // pred_check
          %p4929 = pneg %p426
        $region148: #{multitask_text_shared_forward.1} parent=145 // pred_check_branch
          %4931 = sbr.rel (%p4929) target = $region150
        $region149: #{multitask_text_shared_forward.1} parent=145 // pred_region
          %s4932 = smul.u32 4, %s31
          %p4933 = scmp.lt.s32.totalorder %s4932, 7
          %s4934 = scalar_select %p4933, %s4932, 7
          %s4935 = smul.addr %s4934, 2
          %s4936 = smul.addr %s4935, 8
          %s4937 = scalar_lea.vmem %s17, %s4936
        $region150: #{multitask_text_shared_forward.1} parent=145 // pred_fallthru
          _
      $region146: #{multitask_text_shared_forward.1} parent=5 // pred_fallthru
        _
    $region6: #{multitask_text_shared_forward.1} parent=1 // loop_footer
      %s29 = sadd.s32 1, %s25
    $region7: #{multitask_text_shared_forward.1} parent=1 // loop_footer_branch
      %24 = sbr.rel target = $region3
    $region8: #{multitask_text_shared_forward.1} parent=1 // loop_exit
      _
    %4938 = vsyncpa [#allocation4], 1
    %s4939 = scalar_lea.sflag [#allocation4], 1
    %4940 = vsyncpa %s4939, 1
    %4941 = vsyncpa [#allocation6], 1

</llo_original>
